<compile_context>
chip_gen: v6e
topology: v6e:2x2x1
jax: 0.10.0
libtpu: 0.0.40
codegen_flags: <defaults>
</compile_context>

<pallas_src>
import functools

import jax
import jax.numpy as jnp
from jax import lax
from jax.experimental import pallas as pl
from jax.experimental.pallas import tpu as pltpu

EPS = 1e-8
IND_PAD = 128  # lane-padded width of the neighbour-index output (unmasked stores)


# ----------------------------------------------------------------------------
# Kernel 1: fused similarity matmul + iterative top-(K+1) row selection
# ----------------------------------------------------------------------------
def feats_topk_kernel(a_tile_ref, a_all_ref, ind_ref, *, k1):
    a_tile = a_tile_ref[...]          # (TM, C)
    a_all = a_all_ref[...]            # (N,  C)  resident across the grid
    # scores[i, j] = <a_tile[i], a_all[j]>  (contract feature dim, no transpose)
    scores = lax.dot_general(
        a_tile, a_all,
        dimension_numbers=(((1,), (1,)), ((), ())),
        preferred_element_type=jnp.float32)          # (TM, N)

    tm, n_rows = scores.shape
    ind_pad = ind_ref.shape[1]

    # Exact order-preserving int32 keys: for negative floats flip the low 31 bits.
    bits = pltpu.bitcast(scores, jnp.int32)
    keys = jnp.where(bits < 0, bits ^ jnp.int32(0x7FFFFFFF), bits)

    col_iota = lax.broadcasted_iota(jnp.int32, (tm, n_rows), 1)
    out_iota = lax.broadcasted_iota(jnp.int32, (tm, ind_pad), 1)
    ind = jnp.zeros((tm, ind_pad), jnp.int32)
    removed = jnp.int32(-2 ** 31)     # never produced by a real score key

    # Unrolled iterative arg-max (k1 is small & static).  One max-reduce, one
    # compare, one min-reduce, one select per step; the equality mask is reused
    # for masking so exact ties are removed together (ties -> lowest index).
    # TODO(synk): exact-duplicate scores are all consumed in one step, which can
    #             differ from torch.topk ordering on exact ties.
    for j in range(k1):
        m = jnp.max(keys, axis=-1, keepdims=True)                          # (TM,1)
        eq = keys == m                                                     # reused
        idx = jnp.min(jnp.where(eq, col_iota, n_rows), axis=-1,
                      keepdims=True)                                       # (TM,1)
        ind = jnp.where(out_iota == j, idx, ind)
        keys = jnp.where(eq, removed, keys)

    ind_ref[...] = ind                # lanes >= k1 stay 0, sliced off in wrapper


# ----------------------------------------------------------------------------
# Kernel 2: row-wise softmax over the class axis (feeds the XLA gather)
# ----------------------------------------------------------------------------
def softmax_kernel(p_ref, o_ref):
    p = p_ref[...]                                   # (TM, n)
    m = jnp.max(p, axis=-1, keepdims=True)
    e = jnp.exp(p - m)
    o_ref[...] = e / jnp.sum(e, axis=-1, keepdims=True)


# ----------------------------------------------------------------------------
# Kernel 3: fused softmax + torch-.view similarity + BCE/entropy partial sums
# ----------------------------------------------------------------------------
def loss_kernel(p_ref, pos_ref, nll_ref, colsum_ref, *, topk, n_cls):
    @pl.when(pl.program_id(0) == 0)
    def _():
        nll_ref[...] = jnp.zeros_like(nll_ref)
        colsum_ref[...] = jnp.zeros_like(colsum_ref)

    # Softmax of the logits tile (avoids a second HBM read of anchors_prob).
    p = p_ref[...]                                   # (TM, n) logits
    m = jnp.max(p, axis=-1, keepdims=True)
    e = jnp.exp(p - m)
    ap = e / jnp.sum(e, axis=-1, keepdims=True)      # (TM, n)

    # flat is the torch-contiguous flattening of positives (TM, topk*n).
    # torch's .view(N, n, topk) means  pos_view[i,k,j] = flat[i, k*topk + j],
    # so  sim[:, :] = sum_k ap[:, k:k+1] * flat[:, k*topk : (k+1)*topk]
    # -> only static contiguous lane slices, no in-kernel transpose/reshape.
    flat = pos_ref[...]                              # (TM, topk*n)
    tm = flat.shape[0]
    sim = jnp.zeros((tm, topk), jnp.float32)
    for k in range(n_cls):                           # n_cls is small & static
        sim = sim + ap[:, k:k + 1] * flat[:, k * topk:(k + 1) * topk]

    # BCELoss with target = 1:  -log(sim), log clamped at -100 (torch semantics)
    neg_log = -jnp.maximum(jnp.log(sim), -100.0)

    nll_ref[...] = nll_ref[...] + jnp.sum(neg_log, axis=0, keepdims=True)   # (1, topk)
    colsum_ref[...] = colsum_ref[...] + jnp.sum(ap, axis=0, keepdims=True)  # (1, n)


# ----------------------------------------------------------------------------
# Wrapper
# ----------------------------------------------------------------------------
def _pick_tile(n_rows, requested):
    """Largest row tile <= requested that is a multiple of 8 and divides N."""
    t = min(requested, n_rows)
    t -= t % 8
    while t > 8 and n_rows % t:
        t -= 8
    assert t >= 8 and t % 8 == 0 and n_rows % t == 0
    return t


def knn_lookup(anchors_nchw, prob_nchw, *, topk=10, entropy_weight=2.0, tile_m=256):
    b, c, h, w = anchors_nchw.shape
    n = prob_nchw.shape[1]
    N = b * h * w
    assert N % 8 == 0
    k1 = topk + 1
    assert k1 <= N and k1 <= IND_PAD
    tile = _pick_tile(N, tile_m)

    # layout: NCHW -> (b, w, h, c) -> (N, c), matching torch permute(0,3,2,1).reshape
    A = jnp.transpose(anchors_nchw, (0, 3, 2, 1)).reshape(N, c).astype(jnp.float32)
    P = jnp.transpose(prob_nchw, (0, 3, 2, 1)).reshape(N, n).astype(jnp.float32)

    # --- kernel 1: top-(K+1) neighbour indices per row ------------------------
    # Resident A (double-buffered) + (tile, N) scores/keys drive the VMEM budget;
    # raise the scoped limit only when the default would be exceeded.
    vmem_est = 4 * (2 * tile * c + 2 * N * c + 2 * tile * IND_PAD + 3 * tile * N)
    vmem_limit = None if vmem_est < 24 * 2**20 else min(vmem_est * 3 // 2, 112 * 2**20)

    top_padded = pl.pallas_call(
        functools.partial(feats_topk_kernel, k1=k1),
        out_shape=jax.ShapeDtypeStruct((N, IND_PAD), jnp.int32),
        grid=(N // tile,),
        in_specs=[pl.BlockSpec((tile, c), lambda i: (i, 0)),
                  pl.BlockSpec((N, c), lambda i: (0, 0))],
        out_specs=pl.BlockSpec((tile, IND_PAD), lambda i: (i, 0)),
        compiler_params=pltpu.CompilerParams(
            dimension_semantics=("parallel",),
            vmem_limit_bytes=vmem_limit),
    )(A, A)

    # --- kernel 2: softmax over classes (materialized table for the gather) ---
    anchors_prob = pl.pallas_call(
        softmax_kernel,
        out_shape=jax.ShapeDtypeStruct((N, n), jnp.float32),
        grid=(N // tile,),
        in_specs=[pl.BlockSpec((tile, n), lambda i: (i, 0))],
        out_specs=pl.BlockSpec((tile, n), lambda i: (i, 0)),
        compiler_params=pltpu.CompilerParams(dimension_semantics=("parallel",)),
    )(P)

    # Glue: data-dependent row gather (XLA), flattened to the torch-contiguous
    # (N, topk*n) buffer.  No (N, n, topk) transpose copy is materialized.
    top_ind = top_padded[:, 1:k1]                              # (N, topk), drop self
    positives_flat = anchors_prob[top_ind].reshape(N, topk * n)  # (N, topk*n)

    # --- kernel 3: fused softmax + similarity + loss partial sums --------------
    nll, colsum = pl.pallas_call(
        functools.partial(loss_kernel, topk=topk, n_cls=n),
        out_shape=(jax.ShapeDtypeStruct((1, topk), jnp.float32),
                   jax.ShapeDtypeStruct((1, n), jnp.float32)),
        grid=(N // tile,),
        in_specs=[pl.BlockSpec((tile, n), lambda i: (i, 0)),
                  pl.BlockSpec((tile, topk * n), lambda i: (i, 0))],
        out_specs=(pl.BlockSpec((1, topk), lambda i: (0, 0)),
                   pl.BlockSpec((1, n), lambda i: (0, 0))),
        compiler_params=pltpu.CompilerParams(dimension_semantics=("arbitrary",)),
    )(P, positives_flat)

    consistency_loss = jnp.sum(nll) / (N * topk)               # BCE mean reduction
    mean_prob = colsum[0] / N                                  # torch.mean(anchors_prob, 0)
    x_ = jnp.maximum(mean_prob, EPS)
    entropy_loss = -jnp.sum(x_ * jnp.log(x_))                  # 1-D branch of entropy()
    total_loss = consistency_loss - entropy_weight * entropy_loss
    return total_loss, consistency_loss, entropy_loss


# ----------------------------------------------------------------------------
# Pure-JAX reference (for correctness check)
# ----------------------------------------------------------------------------
def knn_lookup_ref(anchors_nchw, prob_nchw, *, topk=10, entropy_weight=2.0):
    b, c, h, w = anchors_nchw.shape
    n = prob_nchw.shape[1]
    N = b * h * w
    A = jnp.transpose(anchors_nchw, (0, 3, 2, 1)).reshape(N, c)
    P = jnp.transpose(prob_nchw, (0, 3, 2, 1)).reshape(N, n)
    feats = A @ A.T
    _, top_ind = lax.top_k(feats, topk + 1)
    anchors_prob = jax.nn.softmax(P, axis=1)
    positives = anchors_prob[top_ind[:, 1:]].reshape(N, n, topk)
    sim = jnp.einsum('ik,ikj->ij', anchors_prob, positives)
    consistency = jnp.mean(-jnp.maximum(jnp.log(sim), -100.0))
    mp = jnp.maximum(jnp.mean(anchors_prob, axis=0), EPS)
    ent = -jnp.sum(mp * jnp.log(mp))
    return consistency - entropy_weight * ent, consistency, ent


if __name__ == "__main__":
    key = jax.random.PRNGKey(0)
    ka, kp = jax.random.split(key)
    b, c, h, w, n_cls = 2, 8, 8, 8, 16          # N = b*h*w = 128 rows
    anchors = jax.random.normal(ka, (b, c, h, w), jnp.float32)
    prob = jax.random.normal(kp, (b, n_cls, h, w), jnp.float32)

    total_r, cons_r, ent_r = knn_lookup_ref(anchors, prob, topk=10, entropy_weight=2.0)

    # Default (large) row tile.
    total, cons, ent = knn_lookup(anchors, prob, topk=10, entropy_weight=2.0)
    jax.block_until_ready((total, cons, ent))
    assert jnp.allclose(total, total_r, rtol=1e-5, atol=1e-5), (total, total_r)
    assert jnp.allclose(cons, cons_r, rtol=1e-5, atol=1e-5), (cons, cons_r)
    assert jnp.allclose(ent, ent_r, rtol=1e-5, atol=1e-5), (ent, ent_r)

    # Smaller tile -> multi-step grid, exercises the accumulation path.
    total2, cons2, ent2 = knn_lookup(anchors, prob, topk=10, entropy_weight=2.0, tile_m=64)
    jax.block_until_ready((total2, cons2, ent2))
    assert jnp.allclose(total2, total_r, rtol=1e-5, atol=1e-5), (total2, total_r)
    assert jnp.allclose(cons2, cons_r, rtol=1e-5, atol=1e-5), (cons2, cons_r)
    assert jnp.allclose(ent2, ent_r, rtol=1e-5, atol=1e-5), (ent2, ent_r)

    print("KERNEL_OK")
</pallas_src>

<mosaic_0001>
module attributes {stable_mosaic.version = 11 : i64} {
  func.func @feats_topk_kernel(%arg0: i32, %arg1: memref<128x8xf32, #tpu.memory_space<vmem>>, %arg2: memref<128x8xf32, #tpu.memory_space<vmem>>, %arg3: memref<128x128xi32, #tpu.memory_space<vmem>>) attributes {dimension_semantics = [#tpu.dimension_semantics<parallel>], iteration_bounds = array<i64: 1>, scalar_prefetch = 0 : i64, scratch_operands = 0 : i64, tpu.core_type = #tpu.core_type<tc>, window_params = [{transform_indices = @transform_0, window_bounds = array<i64: 128, 8>}, {pipeline_mode = #tpu.pipeline_mode<synchronous>, transform_indices = @transform_1, window_bounds = array<i64: 128, 8>}, {transform_indices = @transform_2, window_bounds = array<i64: 128, 128>}]} {
    %c0 = arith.constant 0 : index
    %c0_0 = arith.constant 0 : index
    %0 = vector.load %arg1[%c0, %c0_0] : memref<128x8xf32, #tpu.memory_space<vmem>>, vector<128x8xf32>
    %c0_1 = arith.constant 0 : index
    %c0_2 = arith.constant 0 : index
    %1 = vector.load %arg2[%c0_1, %c0_2] : memref<128x8xf32, #tpu.memory_space<vmem>>, vector<128x8xf32>
    %cst = arith.constant dense<0.000000e+00> : vector<128x128xf32>
    %2 = tpu.matmul %0, %1, %cst {dimension_numbers = #tpu.dot_dimension_numbers<[1], [1], [0], [0], [0, 0, 1, 0], [], []>} : vector<128x8xf32>, vector<128x8xf32>, vector<128x128xf32> -> vector<128x128xf32>
    %3 = tpu.bitcast %2 : vector<128x128xf32> -> vector<128x128xi32>
    %c0_i32 = arith.constant 0 : i32
    %4 = vector.broadcast %c0_i32 : i32 to vector<128x128xi32>
    %5 = arith.cmpi slt, %3, %4 : vector<128x128xi32>
    %c2147483647_i32 = arith.constant 2147483647 : i32
    %6 = vector.broadcast %c2147483647_i32 : i32 to vector<128x128xi32>
    %7 = arith.xori %3, %6 : vector<128x128xi32>
    %8 = arith.select %5, %7, %3 : vector<128x128xi1>, vector<128x128xi32>
    %9 = tpu.iota {dimensions = array<i32: 1>} : vector<128x128xi32>
    %10 = tpu.iota {dimensions = array<i32: 1>} : vector<128x128xi32>
    %c0_i32_3 = arith.constant 0 : i32
    %11 = vector.broadcast %c0_i32_3 : i32 to vector<128x128xi32>
    %cst_4 = arith.constant dense<-2147483648> : vector<128xi32>
    %12 = vector.multi_reduction <maxsi>, %8, %cst_4 [1] : vector<128x128xi32> to vector<128xi32>
    %13 = vector.shape_cast %12 : vector<128xi32> to vector<128x1xi32>
    %14 = vector.broadcast %13 : vector<128x1xi32> to vector<128x128xi32>
    %15 = arith.cmpi eq, %8, %14 : vector<128x128xi32>
    %c128_i32 = arith.constant 128 : i32
    %16 = vector.broadcast %c128_i32 : i32 to vector<128x128xi32>
    %17 = arith.select %15, %9, %16 : vector<128x128xi1>, vector<128x128xi32>
    %cst_5 = arith.constant dense<2147483647> : vector<128xi32>
    %18 = vector.multi_reduction <minsi>, %17, %cst_5 [1] : vector<128x128xi32> to vector<128xi32>
    %19 = vector.shape_cast %18 : vector<128xi32> to vector<128x1xi32>
    %c0_i32_6 = arith.constant 0 : i32
    %20 = vector.broadcast %c0_i32_6 : i32 to vector<128x128xi32>
    %21 = arith.cmpi eq, %10, %20 : vector<128x128xi32>
    %22 = vector.shape_cast %19 : vector<128x1xi32> to vector<128x1xi32>
    %23 = vector.broadcast %22 : vector<128x1xi32> to vector<128x128xi32>
    %24 = arith.select %21, %23, %11 : vector<128x128xi1>, vector<128x128xi32>
    %c-2147483648_i32 = arith.constant -2147483648 : i32
    %25 = vector.broadcast %c-2147483648_i32 : i32 to vector<128x128xi32>
    %26 = arith.select %15, %25, %8 : vector<128x128xi1>, vector<128x128xi32>
    %cst_7 = arith.constant dense<-2147483648> : vector<128xi32>
    %27 = vector.multi_reduction <maxsi>, %26, %cst_7 [1] : vector<128x128xi32> to vector<128xi32>
    %28 = vector.shape_cast %27 : vector<128xi32> to vector<128x1xi32>
    %29 = vector.broadcast %28 : vector<128x1xi32> to vector<128x128xi32>
    %30 = arith.cmpi eq, %26, %29 : vector<128x128xi32>
    %c128_i32_8 = arith.constant 128 : i32
    %31 = vector.broadcast %c128_i32_8 : i32 to vector<128x128xi32>
    %32 = arith.select %30, %9, %31 : vector<128x128xi1>, vector<128x128xi32>
    %cst_9 = arith.constant dense<2147483647> : vector<128xi32>
    %33 = vector.multi_reduction <minsi>, %32, %cst_9 [1] : vector<128x128xi32> to vector<128xi32>
    %34 = vector.shape_cast %33 : vector<128xi32> to vector<128x1xi32>
    %c1_i32 = arith.constant 1 : i32
    %35 = vector.broadcast %c1_i32 : i32 to vector<128x128xi32>
    %36 = arith.cmpi eq, %10, %35 : vector<128x128xi32>
    %37 = vector.shape_cast %34 : vector<128x1xi32> to vector<128x1xi32>
    %38 = vector.broadcast %37 : vector<128x1xi32> to vector<128x128xi32>
    %39 = arith.select %36, %38, %24 : vector<128x128xi1>, vector<128x128xi32>
    %c-2147483648_i32_10 = arith.constant -2147483648 : i32
    %40 = vector.broadcast %c-2147483648_i32_10 : i32 to vector<128x128xi32>
    %41 = arith.select %30, %40, %26 : vector<128x128xi1>, vector<128x128xi32>
    %cst_11 = arith.constant dense<-2147483648> : vector<128xi32>
    %42 = vector.multi_reduction <maxsi>, %41, %cst_11 [1] : vector<128x128xi32> to vector<128xi32>
    %43 = vector.shape_cast %42 : vector<128xi32> to vector<128x1xi32>
    %44 = vector.broadcast %43 : vector<128x1xi32> to vector<128x128xi32>
    %45 = arith.cmpi eq, %41, %44 : vector<128x128xi32>
    %c128_i32_12 = arith.constant 128 : i32
    %46 = vector.broadcast %c128_i32_12 : i32 to vector<128x128xi32>
    %47 = arith.select %45, %9, %46 : vector<128x128xi1>, vector<128x128xi32>
    %cst_13 = arith.constant dense<2147483647> : vector<128xi32>
    %48 = vector.multi_reduction <minsi>, %47, %cst_13 [1] : vector<128x128xi32> to vector<128xi32>
    %49 = vector.shape_cast %48 : vector<128xi32> to vector<128x1xi32>
    %c2_i32 = arith.constant 2 : i32
    %50 = vector.broadcast %c2_i32 : i32 to vector<128x128xi32>
    %51 = arith.cmpi eq, %10, %50 : vector<128x128xi32>
    %52 = vector.shape_cast %49 : vector<128x1xi32> to vector<128x1xi32>
    %53 = vector.broadcast %52 : vector<128x1xi32> to vector<128x128xi32>
    %54 = arith.select %51, %53, %39 : vector<128x128xi1>, vector<128x128xi32>
    %c-2147483648_i32_14 = arith.constant -2147483648 : i32
    %55 = vector.broadcast %c-2147483648_i32_14 : i32 to vector<128x128xi32>
    %56 = arith.select %45, %55, %41 : vector<128x128xi1>, vector<128x128xi32>
    %cst_15 = arith.constant dense<-2147483648> : vector<128xi32>
    %57 = vector.multi_reduction <maxsi>, %56, %cst_15 [1] : vector<128x128xi32> to vector<128xi32>
    %58 = vector.shape_cast %57 : vector<128xi32> to vector<128x1xi32>
    %59 = vector.broadcast %58 : vector<128x1xi32> to vector<128x128xi32>
    %60 = arith.cmpi eq, %56, %59 : vector<128x128xi32>
    %c128_i32_16 = arith.constant 128 : i32
    %61 = vector.broadcast %c128_i32_16 : i32 to vector<128x128xi32>
    %62 = arith.select %60, %9, %61 : vector<128x128xi1>, vector<128x128xi32>
    %cst_17 = arith.constant dense<2147483647> : vector<128xi32>
    %63 = vector.multi_reduction <minsi>, %62, %cst_17 [1] : vector<128x128xi32> to vector<128xi32>
    %64 = vector.shape_cast %63 : vector<128xi32> to vector<128x1xi32>
    %c3_i32 = arith.constant 3 : i32
    %65 = vector.broadcast %c3_i32 : i32 to vector<128x128xi32>
    %66 = arith.cmpi eq, %10, %65 : vector<128x128xi32>
    %67 = vector.shape_cast %64 : vector<128x1xi32> to vector<128x1xi32>
    %68 = vector.broadcast %67 : vector<128x1xi32> to vector<128x128xi32>
    %69 = arith.select %66, %68, %54 : vector<128x128xi1>, vector<128x128xi32>
    %c-2147483648_i32_18 = arith.constant -2147483648 : i32
    %70 = vector.broadcast %c-2147483648_i32_18 : i32 to vector<128x128xi32>
    %71 = arith.select %60, %70, %56 : vector<128x128xi1>, vector<128x128xi32>
    %cst_19 = arith.constant dense<-2147483648> : vector<128xi32>
    %72 = vector.multi_reduction <maxsi>, %71, %cst_19 [1] : vector<128x128xi32> to vector<128xi32>
    %73 = vector.shape_cast %72 : vector<128xi32> to vector<128x1xi32>
    %74 = vector.broadcast %73 : vector<128x1xi32> to vector<128x128xi32>
    %75 = arith.cmpi eq, %71, %74 : vector<128x128xi32>
    %c128_i32_20 = arith.constant 128 : i32
    %76 = vector.broadcast %c128_i32_20 : i32 to vector<128x128xi32>
    %77 = arith.select %75, %9, %76 : vector<128x128xi1>, vector<128x128xi32>
    %cst_21 = arith.constant dense<2147483647> : vector<128xi32>
    %78 = vector.multi_reduction <minsi>, %77, %cst_21 [1] : vector<128x128xi32> to vector<128xi32>
    %79 = vector.shape_cast %78 : vector<128xi32> to vector<128x1xi32>
    %c4_i32 = arith.constant 4 : i32
    %80 = vector.broadcast %c4_i32 : i32 to vector<128x128xi32>
    %81 = arith.cmpi eq, %10, %80 : vector<128x128xi32>
    %82 = vector.shape_cast %79 : vector<128x1xi32> to vector<128x1xi32>
    %83 = vector.broadcast %82 : vector<128x1xi32> to vector<128x128xi32>
    %84 = arith.select %81, %83, %69 : vector<128x128xi1>, vector<128x128xi32>
    %c-2147483648_i32_22 = arith.constant -2147483648 : i32
    %85 = vector.broadcast %c-2147483648_i32_22 : i32 to vector<128x128xi32>
    %86 = arith.select %75, %85, %71 : vector<128x128xi1>, vector<128x128xi32>
    %cst_23 = arith.constant dense<-2147483648> : vector<128xi32>
    %87 = vector.multi_reduction <maxsi>, %86, %cst_23 [1] : vector<128x128xi32> to vector<128xi32>
    %88 = vector.shape_cast %87 : vector<128xi32> to vector<128x1xi32>
    %89 = vector.broadcast %88 : vector<128x1xi32> to vector<128x128xi32>
    %90 = arith.cmpi eq, %86, %89 : vector<128x128xi32>
    %c128_i32_24 = arith.constant 128 : i32
    %91 = vector.broadcast %c128_i32_24 : i32 to vector<128x128xi32>
    %92 = arith.select %90, %9, %91 : vector<128x128xi1>, vector<128x128xi32>
    %cst_25 = arith.constant dense<2147483647> : vector<128xi32>
    %93 = vector.multi_reduction <minsi>, %92, %cst_25 [1] : vector<128x128xi32> to vector<128xi32>
    %94 = vector.shape_cast %93 : vector<128xi32> to vector<128x1xi32>
    %c5_i32 = arith.constant 5 : i32
    %95 = vector.broadcast %c5_i32 : i32 to vector<128x128xi32>
    %96 = arith.cmpi eq, %10, %95 : vector<128x128xi32>
    %97 = vector.shape_cast %94 : vector<128x1xi32> to vector<128x1xi32>
    %98 = vector.broadcast %97 : vector<128x1xi32> to vector<128x128xi32>
    %99 = arith.select %96, %98, %84 : vector<128x128xi1>, vector<128x128xi32>
    %c-2147483648_i32_26 = arith.constant -2147483648 : i32
    %100 = vector.broadcast %c-2147483648_i32_26 : i32 to vector<128x128xi32>
    %101 = arith.select %90, %100, %86 : vector<128x128xi1>, vector<128x128xi32>
    %cst_27 = arith.constant dense<-2147483648> : vector<128xi32>
    %102 = vector.multi_reduction <maxsi>, %101, %cst_27 [1] : vector<128x128xi32> to vector<128xi32>
    %103 = vector.shape_cast %102 : vector<128xi32> to vector<128x1xi32>
    %104 = vector.broadcast %103 : vector<128x1xi32> to vector<128x128xi32>
    %105 = arith.cmpi eq, %101, %104 : vector<128x128xi32>
    %c128_i32_28 = arith.constant 128 : i32
    %106 = vector.broadcast %c128_i32_28 : i32 to vector<128x128xi32>
    %107 = arith.select %105, %9, %106 : vector<128x128xi1>, vector<128x128xi32>
    %cst_29 = arith.constant dense<2147483647> : vector<128xi32>
    %108 = vector.multi_reduction <minsi>, %107, %cst_29 [1] : vector<128x128xi32> to vector<128xi32>
    %109 = vector.shape_cast %108 : vector<128xi32> to vector<128x1xi32>
    %c6_i32 = arith.constant 6 : i32
    %110 = vector.broadcast %c6_i32 : i32 to vector<128x128xi32>
    %111 = arith.cmpi eq, %10, %110 : vector<128x128xi32>
    %112 = vector.shape_cast %109 : vector<128x1xi32> to vector<128x1xi32>
    %113 = vector.broadcast %112 : vector<128x1xi32> to vector<128x128xi32>
    %114 = arith.select %111, %113, %99 : vector<128x128xi1>, vector<128x128xi32>
    %c-2147483648_i32_30 = arith.constant -2147483648 : i32
    %115 = vector.broadcast %c-2147483648_i32_30 : i32 to vector<128x128xi32>
    %116 = arith.select %105, %115, %101 : vector<128x128xi1>, vector<128x128xi32>
    %cst_31 = arith.constant dense<-2147483648> : vector<128xi32>
    %117 = vector.multi_reduction <maxsi>, %116, %cst_31 [1] : vector<128x128xi32> to vector<128xi32>
    %118 = vector.shape_cast %117 : vector<128xi32> to vector<128x1xi32>
    %119 = vector.broadcast %118 : vector<128x1xi32> to vector<128x128xi32>
    %120 = arith.cmpi eq, %116, %119 : vector<128x128xi32>
    %c128_i32_32 = arith.constant 128 : i32
    %121 = vector.broadcast %c128_i32_32 : i32 to vector<128x128xi32>
    %122 = arith.select %120, %9, %121 : vector<128x128xi1>, vector<128x128xi32>
    %cst_33 = arith.constant dense<2147483647> : vector<128xi32>
    %123 = vector.multi_reduction <minsi>, %122, %cst_33 [1] : vector<128x128xi32> to vector<128xi32>
    %124 = vector.shape_cast %123 : vector<128xi32> to vector<128x1xi32>
    %c7_i32 = arith.constant 7 : i32
    %125 = vector.broadcast %c7_i32 : i32 to vector<128x128xi32>
    %126 = arith.cmpi eq, %10, %125 : vector<128x128xi32>
    %127 = vector.shape_cast %124 : vector<128x1xi32> to vector<128x1xi32>
    %128 = vector.broadcast %127 : vector<128x1xi32> to vector<128x128xi32>
    %129 = arith.select %126, %128, %114 : vector<128x128xi1>, vector<128x128xi32>
    %c-2147483648_i32_34 = arith.constant -2147483648 : i32
    %130 = vector.broadcast %c-2147483648_i32_34 : i32 to vector<128x128xi32>
    %131 = arith.select %120, %130, %116 : vector<128x128xi1>, vector<128x128xi32>
    %cst_35 = arith.constant dense<-2147483648> : vector<128xi32>
    %132 = vector.multi_reduction <maxsi>, %131, %cst_35 [1] : vector<128x128xi32> to vector<128xi32>
    %133 = vector.shape_cast %132 : vector<128xi32> to vector<128x1xi32>
    %134 = vector.broadcast %133 : vector<128x1xi32> to vector<128x128xi32>
    %135 = arith.cmpi eq, %131, %134 : vector<128x128xi32>
    %c128_i32_36 = arith.constant 128 : i32
    %136 = vector.broadcast %c128_i32_36 : i32 to vector<128x128xi32>
    %137 = arith.select %135, %9, %136 : vector<128x128xi1>, vector<128x128xi32>
    %cst_37 = arith.constant dense<2147483647> : vector<128xi32>
    %138 = vector.multi_reduction <minsi>, %137, %cst_37 [1] : vector<128x128xi32> to vector<128xi32>
    %139 = vector.shape_cast %138 : vector<128xi32> to vector<128x1xi32>
    %c8_i32 = arith.constant 8 : i32
    %140 = vector.broadcast %c8_i32 : i32 to vector<128x128xi32>
    %141 = arith.cmpi eq, %10, %140 : vector<128x128xi32>
    %142 = vector.shape_cast %139 : vector<128x1xi32> to vector<128x1xi32>
    %143 = vector.broadcast %142 : vector<128x1xi32> to vector<128x128xi32>
    %144 = arith.select %141, %143, %129 : vector<128x128xi1>, vector<128x128xi32>
    %c-2147483648_i32_38 = arith.constant -2147483648 : i32
    %145 = vector.broadcast %c-2147483648_i32_38 : i32 to vector<128x128xi32>
    %146 = arith.select %135, %145, %131 : vector<128x128xi1>, vector<128x128xi32>
    %cst_39 = arith.constant dense<-2147483648> : vector<128xi32>
    %147 = vector.multi_reduction <maxsi>, %146, %cst_39 [1] : vector<128x128xi32> to vector<128xi32>
    %148 = vector.shape_cast %147 : vector<128xi32> to vector<128x1xi32>
    %149 = vector.broadcast %148 : vector<128x1xi32> to vector<128x128xi32>
    %150 = arith.cmpi eq, %146, %149 : vector<128x128xi32>
    %c128_i32_40 = arith.constant 128 : i32
    %151 = vector.broadcast %c128_i32_40 : i32 to vector<128x128xi32>
    %152 = arith.select %150, %9, %151 : vector<128x128xi1>, vector<128x128xi32>
    %cst_41 = arith.constant dense<2147483647> : vector<128xi32>
    %153 = vector.multi_reduction <minsi>, %152, %cst_41 [1] : vector<128x128xi32> to vector<128xi32>
    %154 = vector.shape_cast %153 : vector<128xi32> to vector<128x1xi32>
    %c9_i32 = arith.constant 9 : i32
    %155 = vector.broadcast %c9_i32 : i32 to vector<128x128xi32>
    %156 = arith.cmpi eq, %10, %155 : vector<128x128xi32>
    %157 = vector.shape_cast %154 : vector<128x1xi32> to vector<128x1xi32>
    %158 = vector.broadcast %157 : vector<128x1xi32> to vector<128x128xi32>
    %159 = arith.select %156, %158, %144 : vector<128x128xi1>, vector<128x128xi32>
    %c-2147483648_i32_42 = arith.constant -2147483648 : i32
    %160 = vector.broadcast %c-2147483648_i32_42 : i32 to vector<128x128xi32>
    %161 = arith.select %150, %160, %146 : vector<128x128xi1>, vector<128x128xi32>
    %cst_43 = arith.constant dense<-2147483648> : vector<128xi32>
    %162 = vector.multi_reduction <maxsi>, %161, %cst_43 [1] : vector<128x128xi32> to vector<128xi32>
    %163 = vector.shape_cast %162 : vector<128xi32> to vector<128x1xi32>
    %164 = vector.broadcast %163 : vector<128x1xi32> to vector<128x128xi32>
    %165 = arith.cmpi eq, %161, %164 : vector<128x128xi32>
    %c128_i32_44 = arith.constant 128 : i32
    %166 = vector.broadcast %c128_i32_44 : i32 to vector<128x128xi32>
    %167 = arith.select %165, %9, %166 : vector<128x128xi1>, vector<128x128xi32>
    %cst_45 = arith.constant dense<2147483647> : vector<128xi32>
    %168 = vector.multi_reduction <minsi>, %167, %cst_45 [1] : vector<128x128xi32> to vector<128xi32>
    %169 = vector.shape_cast %168 : vector<128xi32> to vector<128x1xi32>
    %c10_i32 = arith.constant 10 : i32
    %170 = vector.broadcast %c10_i32 : i32 to vector<128x128xi32>
    %171 = arith.cmpi eq, %10, %170 : vector<128x128xi32>
    %172 = vector.shape_cast %169 : vector<128x1xi32> to vector<128x1xi32>
    %173 = vector.broadcast %172 : vector<128x1xi32> to vector<128x128xi32>
    %174 = arith.select %171, %173, %159 : vector<128x128xi1>, vector<128x128xi32>
    %c0_46 = arith.constant 0 : index
    %c0_47 = arith.constant 0 : index
    %175 = vector.load %arg3[%c0_46, %c0_47] : memref<128x128xi32, #tpu.memory_space<vmem>>, vector<128x128xi32>
    tpu.vector_store %arg3[%c0_46, %c0_47], %174 {strides = array<i32>} : memref<128x128xi32, #tpu.memory_space<vmem>>, vector<128x128xi32>,
    return
  }
  func.func @transform_0(%arg0: i32) -> (i32, i32) {
    %c0_i32 = arith.constant 0 : i32
    %c0_i32_0 = arith.constant 0 : i32
    return %arg0, %c0_i32 : i32, i32
  }
  func.func @transform_1(%arg0: i32) -> (i32, i32) {
    %c0_i32 = arith.constant 0 : i32
    %c0_i32_0 = arith.constant 0 : i32
    %c0_i32_1 = arith.constant 0 : i32
    return %c0_i32, %c0_i32_0 : i32, i32
  }
  func.func @transform_2(%arg0: i32) -> (i32, i32) {
    %c0_i32 = arith.constant 0 : i32
    %c0_i32_0 = arith.constant 0 : i32
    return %arg0, %c0_i32 : i32, i32
  }
}

</mosaic_0001>

<llo_original>
// kernel: tpu_custom_call.1
$region0: #{tpu_custom_call.1}
  #allocation0 [shape = 'u32[]', space=smem, size = 0x4, offset = 0x4, fixed_abs, tag = 'smem constant byte address 0x4 - core index']
  #allocation1 [shape = 'u32[144,128]{1,0:T(1,128)}', space=vmem, size = 0x12000, scoped, tag = 'internal scratch']
  %s0 = inlined_call_operand.vmem [shape: f32[128,8], index: 0, kind: input, shape index: {}]
  %s1 = inlined_call_operand.vmem [shape: f32[128,8], index: 1, kind: input, shape index: {}]
  %s2 = inlined_call_operand.hbm [shape: s32[128,128], index: 2, kind: output, shape index: {}]
  %s3 = sld [smem:[#allocation0]]
  $region18: #{tpu_custom_call.1} parent=0
    _
  %s5 = ssub.s32 1, %s3
  %s6 = scalar_select 0, %s5, %s3
  $region1: #{tpu_custom_call.1} parent=0
    #allocation2 [shape = 'u8[65536]{0}', space=vmem, size = 0x10000, scoped, tag = 'output window, operand 0, single buffered']
    #allocation3 [shape = 's32[1]{0}', space=sflag, size = 0x4, scoped, tag = 'scoped memory for tpu_custom_call.1']
    %7 = vsyncpa [#allocation3], 0
    // Predicated region
    $region2: #{tpu_custom_call.1} parent=1 // pred_check
      _
    $region3: #{tpu_custom_call.1} parent=1 // pred_check_branch
      %9 = sbr.rel (0) target = $region5
    $region4: #{tpu_custom_call.1} parent=1 // pred_region
      _
    $region5: #{tpu_custom_call.1} parent=1 // pred_fallthru
      _
    // Predicated region
    $region6: #{tpu_custom_call.1} parent=1 // pred_check
      _
    $region7: #{tpu_custom_call.1} parent=1 // pred_check_branch
      %11 = sbr.rel (0) target = $region9
    $region8: #{tpu_custom_call.1} parent=1 // pred_region
      _
    $region9: #{tpu_custom_call.1} parent=1 // pred_fallthru
      _
    %v12 = vld [vmem:[%s0] sm:$0xff]
    %v13 = vld [vmem:[%s0 + $0x8] sm:$0xff]
    %v14 = vld [vmem:[%s0 + $0x10] sm:$0xff]
    %v15 = vld [vmem:[%s0 + $0x18] sm:$0xff]
    %v16 = vld [vmem:[%s0 + $0x20] sm:$0xff]
    %v17 = vld [vmem:[%s0 + $0x28] sm:$0xff]
    %v18 = vld [vmem:[%s0 + $0x30] sm:$0xff]
    %v19 = vld [vmem:[%s0 + $0x38] sm:$0xff]
    %v20 = vld [vmem:[%s0 + $0x40] sm:$0xff]
    %v21 = vld [vmem:[%s0 + $0x48] sm:$0xff]
    %v22 = vld [vmem:[%s0 + $0x50] sm:$0xff]
    %v23 = vld [vmem:[%s0 + $0x58] sm:$0xff]
    %v24 = vld [vmem:[%s0 + $0x60] sm:$0xff]
    %v25 = vld [vmem:[%s0 + $0x68] sm:$0xff]
    %v26 = vld [vmem:[%s0 + $0x70] sm:$0xff]
    %v27 = vld [vmem:[%s0 + $0x78] sm:$0xff]
    %v28 = vld [vmem:[%s1] sm:$0xff]
    %v29 = vld [vmem:[%s1 + $0x8] sm:$0xff]
    %v30 = vld [vmem:[%s1 + $0x10] sm:$0xff]
    %v31 = vld [vmem:[%s1 + $0x18] sm:$0xff]
    %v32 = vld [vmem:[%s1 + $0x20] sm:$0xff]
    %v33 = vld [vmem:[%s1 + $0x28] sm:$0xff]
    %v34 = vld [vmem:[%s1 + $0x30] sm:$0xff]
    %v35 = vld [vmem:[%s1 + $0x38] sm:$0xff]
    %v36 = vld [vmem:[%s1 + $0x40] sm:$0xff]
    %v37 = vld [vmem:[%s1 + $0x48] sm:$0xff]
    %v38 = vld [vmem:[%s1 + $0x50] sm:$0xff]
    %v39 = vld [vmem:[%s1 + $0x58] sm:$0xff]
    %v40 = vld [vmem:[%s1 + $0x60] sm:$0xff]
    %v41 = vld [vmem:[%s1 + $0x68] sm:$0xff]
    %v42 = vld [vmem:[%s1 + $0x70] sm:$0xff]
    %v43 = vld [vmem:[%s1 + $0x78] sm:$0xff]
    %vm44 = vcmask 64512
    %v46 = vsel %vm44, %v12, 0
    %v49 = vsel %vm44, %v13, 0
    %v52 = vsel %vm44, %v14, 0
    %v55 = vsel %vm44, %v15, 0
    %v58 = vsel %vm44, %v16, 0
    %v61 = vsel %vm44, %v17, 0
    %v64 = vsel %vm44, %v18, 0
    %v67 = vsel %vm44, %v19, 0
    %v70 = vsel %vm44, %v20, 0
    %v73 = vsel %vm44, %v21, 0
    %v76 = vsel %vm44, %v22, 0
    %v79 = vsel %vm44, %v23, 0
    %v82 = vsel %vm44, %v24, 0
    %v85 = vsel %vm44, %v25, 0
    %v88 = vsel %vm44, %v26, 0
    %v91 = vsel %vm44, %v27, 0
    %v94 = vsel %vm44, %v28, 0
    %v97 = vsel %vm44, %v29, 0
    %v100 = vsel %vm44, %v30, 0
    %v103 = vsel %vm44, %v31, 0
    %v106 = vsel %vm44, %v32, 0
    %v109 = vsel %vm44, %v33, 0
    %v112 = vsel %vm44, %v34, 0
    %v115 = vsel %vm44, %v35, 0
    %v118 = vsel %vm44, %v36, 0
    %v121 = vsel %vm44, %v37, 0
    %v124 = vsel %vm44, %v38, 0
    %v127 = vsel %vm44, %v39, 0
    %v130 = vsel %vm44, %v40, 0
    %v133 = vsel %vm44, %v41, 0
    %v136 = vsel %vm44, %v42, 0
    %v139 = vsel %vm44, %v43, 0
    %141 = vmatprep.subr.mxu0 0.0
    %142 = vmatpush1.xpose.msra.mxu0 %v139
    %143 = vmatprep.subr.mxu0 0.0
    %144 = vmatpush1.xpose.msra.mxu0 %v136
    %145 = vmatprep.subr.mxu0 0.0
    %146 = vmatpush1.xpose.msra.mxu0 %v133
    %147 = vmatprep.subr.mxu0 0.0
    %148 = vmatpush1.xpose.msra.mxu0 %v130
    %149 = vmatprep.subr.mxu0 0.0
    %150 = vmatpush1.xpose.msra.mxu0 %v127
    %151 = vmatprep.subr.mxu0 0.0
    %152 = vmatpush1.xpose.msra.mxu0 %v124
    %153 = vmatprep.subr.mxu0 0.0
    %154 = vmatpush1.xpose.msra.mxu0 %v121
    %155 = vmatprep.subr.mxu0 0.0
    %156 = vmatpush1.xpose.msra.mxu0 %v118
    %157 = vmatprep.subr.mxu0 0.0
    %158 = vmatpush1.xpose.msra.mxu0 %v115
    %159 = vmatprep.subr.mxu0 0.0
    %160 = vmatpush1.xpose.msra.mxu0 %v112
    %161 = vmatprep.subr.mxu0 0.0
    %162 = vmatpush1.xpose.msra.mxu0 %v109
    %163 = vmatprep.subr.mxu0 0.0
    %164 = vmatpush1.xpose.msra.mxu0 %v106
    %165 = vmatprep.subr.mxu0 0.0
    %166 = vmatpush1.xpose.msra.mxu0 %v103
    %167 = vmatprep.subr.mxu0 0.0
    %168 = vmatpush1.xpose.msra.mxu0 %v100
    %169 = vmatprep.subr.mxu0 0.0
    %170 = vmatpush1.xpose.msra.mxu0 %v97
    %171 = vmatprep.subr.mxu0 0.0
    %172 = vmatpush1.xpose.msra.mxu0 %v94
    %173 = vmatprep.subr.mxu0 0.0
    %174 = vmatpush2.xpose.msra.mxu0 0.0
    %175 = vmatprep.subr.mxu0 0.0
    %176 = vmatpush2.xpose.msra.mxu0 0.0
    %177 = vmatprep.subr.mxu0 0.0
    %178 = vmatpush2.xpose.msra.mxu0 0.0
    %179 = vmatprep.subr.mxu0 0.0
    %180 = vmatpush2.xpose.msra.mxu0 0.0
    %181 = vmatprep.subr.mxu0 0.0
    %182 = vmatpush2.xpose.msra.mxu0 0.0
    %183 = vmatprep.subr.mxu0 0.0
    %184 = vmatpush2.xpose.msra.mxu0 0.0
    %185 = vmatprep.subr.mxu0 0.0
    %186 = vmatpush2.xpose.msra.mxu0 0.0
    %187 = vmatprep.subr.mxu0 0.0
    %188 = vmatpush2.xpose.msra.mxu0 0.0
    %189 = vmatprep.subr.mxu0 0.0
    %190 = vmatpush2.xpose.msra.mxu0 0.0
    %191 = vmatprep.subr.mxu0 0.0
    %192 = vmatpush2.xpose.msra.mxu0 0.0
    %193 = vmatprep.subr.mxu0 0.0
    %194 = vmatpush2.xpose.msra.mxu0 0.0
    %195 = vmatprep.subr.mxu0 0.0
    %196 = vmatpush2.xpose.msra.mxu0 0.0
    %197 = vmatprep.subr.mxu0 0.0
    %198 = vmatpush2.xpose.msra.mxu0 0.0
    %199 = vmatprep.subr.mxu0 0.0
    %200 = vmatpush2.xpose.msra.mxu0 0.0
    %201 = vmatprep.subr.mxu0 0.0
    %202 = vmatpush2.xpose.msra.mxu0 0.0
    %203 = vmatprep.subr.mxu0 0.0
    %204 = vmatpush2.xpose.msra.mxu0 0.0
    %205 = vmatprep.mubr.f32.mxu0 0.0
    %206 = vmatmul.mubr.f32.gmra.mxu0 %v46
    %v207 = vpop.f32.mrf.mxu0
    %v208 = vadd.f32 0.0, %v207
    %v209 = vpop.f32.mrf.mxu0
    %210 = vmatprep.mubr.f32.mxu0 0.0
    %211 = vmatmul.mubr.f32.gmra.mxu0 %v49
    %v212 = vpop.f32.mrf.mxu0
    %v213 = vadd.f32 0.0, %v212
    %v214 = vpop.f32.mrf.mxu0
    %215 = vmatprep.mubr.f32.mxu0 0.0
    %216 = vmatmul.mubr.f32.gmra.mxu0 %v52
    %v217 = vpop.f32.mrf.mxu0
    %v218 = vadd.f32 0.0, %v217
    %v219 = vpop.f32.mrf.mxu0
    %220 = vmatprep.mubr.f32.mxu0 0.0
    %221 = vmatmul.mubr.f32.gmra.mxu0 %v55
    %v222 = vpop.f32.mrf.mxu0
    %v223 = vadd.f32 0.0, %v222
    %v224 = vpop.f32.mrf.mxu0
    %225 = vmatprep.mubr.f32.mxu0 0.0
    %226 = vmatmul.mubr.f32.gmra.mxu0 %v58
    %v227 = vpop.f32.mrf.mxu0
    %v228 = vadd.f32 0.0, %v227
    %v229 = vpop.f32.mrf.mxu0
    %230 = vmatprep.mubr.f32.mxu0 0.0
    %231 = vmatmul.mubr.f32.gmra.mxu0 %v61
    %v232 = vpop.f32.mrf.mxu0
    %v233 = vadd.f32 0.0, %v232
    %v234 = vpop.f32.mrf.mxu0
    %235 = vmatprep.mubr.f32.mxu0 0.0
    %236 = vmatmul.mubr.f32.gmra.mxu0 %v64
    %v237 = vpop.f32.mrf.mxu0
    %v238 = vadd.f32 0.0, %v237
    %v239 = vpop.f32.mrf.mxu0
    %240 = vmatprep.mubr.f32.mxu0 0.0
    %241 = vmatmul.mubr.f32.gmra.mxu0 %v67
    %v242 = vpop.f32.mrf.mxu0
    %v243 = vadd.f32 0.0, %v242
    %v244 = vpop.f32.mrf.mxu0
    %245 = vmatprep.mubr.f32.mxu0 0.0
    %246 = vmatmul.mubr.f32.gmra.mxu0 %v70
    %v247 = vpop.f32.mrf.mxu0
    %v248 = vadd.f32 0.0, %v247
    %v249 = vpop.f32.mrf.mxu0
    %250 = vmatprep.mubr.f32.mxu0 0.0
    %251 = vmatmul.mubr.f32.gmra.mxu0 %v73
    %v252 = vpop.f32.mrf.mxu0
    %v253 = vadd.f32 0.0, %v252
    %v254 = vpop.f32.mrf.mxu0
    %255 = vmatprep.mubr.f32.mxu0 0.0
    %256 = vmatmul.mubr.f32.gmra.mxu0 %v76
    %v257 = vpop.f32.mrf.mxu0
    %v258 = vadd.f32 0.0, %v257
    %v259 = vpop.f32.mrf.mxu0
    %260 = vmatprep.mubr.f32.mxu0 0.0
    %261 = vmatmul.mubr.f32.gmra.mxu0 %v79
    %v262 = vpop.f32.mrf.mxu0
    %v263 = vadd.f32 0.0, %v262
    %v264 = vpop.f32.mrf.mxu0
    %265 = vmatprep.mubr.f32.mxu0 0.0
    %266 = vmatmul.mubr.f32.gmra.mxu0 %v82
    %v267 = vpop.f32.mrf.mxu0
    %v268 = vadd.f32 0.0, %v267
    %v269 = vpop.f32.mrf.mxu0
    %270 = vmatprep.mubr.f32.mxu0 0.0
    %271 = vmatmul.mubr.f32.gmra.mxu0 %v85
    %v272 = vpop.f32.mrf.mxu0
    %v273 = vadd.f32 0.0, %v272
    %v274 = vpop.f32.mrf.mxu0
    %275 = vmatprep.mubr.f32.mxu0 0.0
    %276 = vmatmul.mubr.f32.gmra.mxu0 %v88
    %v277 = vpop.f32.mrf.mxu0
    %v278 = vadd.f32 0.0, %v277
    %v279 = vpop.f32.mrf.mxu0
    %280 = vmatprep.mubr.f32.mxu0 0.0
    %281 = vmatmul.mubr.f32.gmra.mxu0 %v91
    %v282 = vpop.f32.mrf.mxu0
    %v283 = vadd.f32 0.0, %v282
    %v284 = vpop.f32.mrf.mxu0
    %285 = vdwg.mxu0
    %vm302 = vcmp.lt.s32.totalorder %v208, 0
    %vm303 = vcmp.lt.s32.totalorder %v213, 0
    %vm304 = vcmp.lt.s32.totalorder %v218, 0
    %vm305 = vcmp.lt.s32.totalorder %v223, 0
    %vm306 = vcmp.lt.s32.totalorder %v228, 0
    %vm307 = vcmp.lt.s32.totalorder %v233, 0
    %vm308 = vcmp.lt.s32.totalorder %v238, 0
    %vm309 = vcmp.lt.s32.totalorder %v243, 0
    %vm310 = vcmp.lt.s32.totalorder %v248, 0
    %vm311 = vcmp.lt.s32.totalorder %v253, 0
    %vm312 = vcmp.lt.s32.totalorder %v258, 0
    %vm313 = vcmp.lt.s32.totalorder %v263, 0
    %vm314 = vcmp.lt.s32.totalorder %v268, 0
    %vm315 = vcmp.lt.s32.totalorder %v273, 0
    %vm316 = vcmp.lt.s32.totalorder %v278, 0
    %vm317 = vcmp.lt.s32.totalorder %v283, 0
    %v318 = vxor.u32 %v208, 2147483647
    %v319 = vxor.u32 %v213, 2147483647
    %v320 = vxor.u32 %v218, 2147483647
    %v321 = vxor.u32 %v223, 2147483647
    %v322 = vxor.u32 %v228, 2147483647
    %v323 = vxor.u32 %v233, 2147483647
    %v324 = vxor.u32 %v238, 2147483647
    %v325 = vxor.u32 %v243, 2147483647
    %v326 = vxor.u32 %v248, 2147483647
    %v327 = vxor.u32 %v253, 2147483647
    %v328 = vxor.u32 %v258, 2147483647
    %v329 = vxor.u32 %v263, 2147483647
    %v330 = vxor.u32 %v268, 2147483647
    %v331 = vxor.u32 %v273, 2147483647
    %v332 = vxor.u32 %v278, 2147483647
    %v333 = vxor.u32 %v283, 2147483647
    %v334 = vsel %vm302, %v318, %v208
    %v335 = vsel %vm303, %v319, %v213
    %v336 = vsel %vm304, %v320, %v218
    %v337 = vsel %vm305, %v321, %v223
    %v338 = vsel %vm306, %v322, %v228
    %v339 = vsel %vm307, %v323, %v233
    %v340 = vsel %vm308, %v324, %v238
    %v341 = vsel %vm309, %v325, %v243
    %v342 = vsel %vm310, %v326, %v248
    %v343 = vsel %vm311, %v327, %v253
    %v344 = vsel %vm312, %v328, %v258
    %v345 = vsel %vm313, %v329, %v263
    %v346 = vsel %vm314, %v330, %v268
    %v347 = vsel %vm315, %v331, %v273
    %v348 = vsel %vm316, %v332, %v278
    %v349 = vsel %vm317, %v333, %v283
    %v350 = vlaneseq
    %v351 = vand.u32 %v350, 127
    %v352 = vand.u32 %v334, 65535
    %v353 = vshra.s32 %v334, 16
    %v354 = vcvt.s32.f32 %v352
    %v355 = vcvt.s32.f32 %v353
    %356 = vmax.xlane.f32.xlu0 %v355
    %v357 = vpop.xlane.xlu0 %356
    %vm358 = vcmp.eq.f32.partialorder %v355, %v357
    %v359 = vsel %vm358, %v354, -inf
    %360 = vmax.xlane.f32.xlu0 %v359
    %v361 = vpop.xlane.xlu0 %360
    %v362 = vcvt.f32.s32 %v361
    %v363 = vcvt.f32.s32 %v357
    %v364 = vshll.u32 %v363, 16
    %v365 = vadd.s32 %v364, %v362
    %v366 = vand.u32 %v335, 65535
    %v367 = vshra.s32 %v335, 16
    %v368 = vcvt.s32.f32 %v366
    %v369 = vcvt.s32.f32 %v367
    %370 = vmax.xlane.f32.xlu0 %v369
    %v371 = vpop.xlane.xlu0 %370
    %vm372 = vcmp.eq.f32.partialorder %v369, %v371
    %v373 = vsel %vm372, %v368, -inf
    %374 = vmax.xlane.f32.xlu0 %v373
    %v375 = vpop.xlane.xlu0 %374
    %v376 = vcvt.f32.s32 %v375
    %v377 = vcvt.f32.s32 %v371
    %v378 = vshll.u32 %v377, 16
    %v379 = vadd.s32 %v378, %v376
    %v380 = vand.u32 %v336, 65535
    %v381 = vshra.s32 %v336, 16
    %v382 = vcvt.s32.f32 %v380
    %v383 = vcvt.s32.f32 %v381
    %384 = vmax.xlane.f32.xlu0 %v383
    %v385 = vpop.xlane.xlu0 %384
    %vm386 = vcmp.eq.f32.partialorder %v383, %v385
    %v387 = vsel %vm386, %v382, -inf
    %388 = vmax.xlane.f32.xlu0 %v387
    %v389 = vpop.xlane.xlu0 %388
    %v390 = vcvt.f32.s32 %v389
    %v391 = vcvt.f32.s32 %v385
    %v392 = vshll.u32 %v391, 16
    %v393 = vadd.s32 %v392, %v390
    %v394 = vand.u32 %v337, 65535
    %v395 = vshra.s32 %v337, 16
    %v396 = vcvt.s32.f32 %v394
    %v397 = vcvt.s32.f32 %v395
    %398 = vmax.xlane.f32.xlu0 %v397
    %v399 = vpop.xlane.xlu0 %398
    %vm400 = vcmp.eq.f32.partialorder %v397, %v399
    %v401 = vsel %vm400, %v396, -inf
    %402 = vmax.xlane.f32.xlu0 %v401
    %v403 = vpop.xlane.xlu0 %402
    %v404 = vcvt.f32.s32 %v403
    %v405 = vcvt.f32.s32 %v399
    %v406 = vshll.u32 %v405, 16
    %v407 = vadd.s32 %v406, %v404
    %v408 = vand.u32 %v338, 65535
    %v409 = vshra.s32 %v338, 16
    %v410 = vcvt.s32.f32 %v408
    %v411 = vcvt.s32.f32 %v409
    %412 = vmax.xlane.f32.xlu0 %v411
    %v413 = vpop.xlane.xlu0 %412
    %vm414 = vcmp.eq.f32.partialorder %v411, %v413
    %v415 = vsel %vm414, %v410, -inf
    %416 = vmax.xlane.f32.xlu0 %v415
    %v417 = vpop.xlane.xlu0 %416
    %v418 = vcvt.f32.s32 %v417
    %v419 = vcvt.f32.s32 %v413
    %v420 = vshll.u32 %v419, 16
    %v421 = vadd.s32 %v420, %v418
    %v422 = vand.u32 %v339, 65535
    %v423 = vshra.s32 %v339, 16
    %v424 = vcvt.s32.f32 %v422
    %v425 = vcvt.s32.f32 %v423
    %426 = vmax.xlane.f32.xlu0 %v425
    %v427 = vpop.xlane.xlu0 %426
    %vm428 = vcmp.eq.f32.partialorder %v425, %v427
    %v429 = vsel %vm428, %v424, -inf
    %430 = vmax.xlane.f32.xlu0 %v429
    %v431 = vpop.xlane.xlu0 %430
    %v432 = vcvt.f32.s32 %v431
    %v433 = vcvt.f32.s32 %v427
    %v434 = vshll.u32 %v433, 16
    %v435 = vadd.s32 %v434, %v432
    %v436 = vand.u32 %v340, 65535
    %v437 = vshra.s32 %v340, 16
    %v438 = vcvt.s32.f32 %v436
    %v439 = vcvt.s32.f32 %v437
    %440 = vmax.xlane.f32.xlu0 %v439
    %v441 = vpop.xlane.xlu0 %440
    %vm442 = vcmp.eq.f32.partialorder %v439, %v441
    %v443 = vsel %vm442, %v438, -inf
    %444 = vmax.xlane.f32.xlu0 %v443
    %v445 = vpop.xlane.xlu0 %444
    %v446 = vcvt.f32.s32 %v445
    %v447 = vcvt.f32.s32 %v441
    %v448 = vshll.u32 %v447, 16
    %v449 = vadd.s32 %v448, %v446
    %v450 = vand.u32 %v341, 65535
    %v451 = vshra.s32 %v341, 16
    %v452 = vcvt.s32.f32 %v450
    %v453 = vcvt.s32.f32 %v451
    %454 = vmax.xlane.f32.xlu0 %v453
    %v455 = vpop.xlane.xlu0 %454
    %vm456 = vcmp.eq.f32.partialorder %v453, %v455
    %v457 = vsel %vm456, %v452, -inf
    %458 = vmax.xlane.f32.xlu0 %v457
    %v459 = vpop.xlane.xlu0 %458
    %v460 = vcvt.f32.s32 %v459
    %v461 = vcvt.f32.s32 %v455
    %v462 = vshll.u32 %v461, 16
    %v463 = vadd.s32 %v462, %v460
    %v464 = vand.u32 %v342, 65535
    %v465 = vshra.s32 %v342, 16
    %v466 = vcvt.s32.f32 %v464
    %v467 = vcvt.s32.f32 %v465
    %468 = vmax.xlane.f32.xlu0 %v467
    %v469 = vpop.xlane.xlu0 %468
    %vm470 = vcmp.eq.f32.partialorder %v467, %v469
    %v471 = vsel %vm470, %v466, -inf
    %472 = vmax.xlane.f32.xlu0 %v471
    %v473 = vpop.xlane.xlu0 %472
    %v474 = vcvt.f32.s32 %v473
    %v475 = vcvt.f32.s32 %v469
    %v476 = vshll.u32 %v475, 16
    %v477 = vadd.s32 %v476, %v474
    %v478 = vand.u32 %v343, 65535
    %v479 = vshra.s32 %v343, 16
    %v480 = vcvt.s32.f32 %v478
    %v481 = vcvt.s32.f32 %v479
    %482 = vmax.xlane.f32.xlu0 %v481
    %v483 = vpop.xlane.xlu0 %482
    %vm484 = vcmp.eq.f32.partialorder %v481, %v483
    %v485 = vsel %vm484, %v480, -inf
    %486 = vmax.xlane.f32.xlu0 %v485
    %v487 = vpop.xlane.xlu0 %486
    %v488 = vcvt.f32.s32 %v487
    %v489 = vcvt.f32.s32 %v483
    %v490 = vshll.u32 %v489, 16
    %v491 = vadd.s32 %v490, %v488
    %v492 = vand.u32 %v344, 65535
    %v493 = vshra.s32 %v344, 16
    %v494 = vcvt.s32.f32 %v492
    %v495 = vcvt.s32.f32 %v493
    %496 = vmax.xlane.f32.xlu0 %v495
    %v497 = vpop.xlane.xlu0 %496
    %vm498 = vcmp.eq.f32.partialorder %v495, %v497
    %v499 = vsel %vm498, %v494, -inf
    %500 = vmax.xlane.f32.xlu0 %v499
    %v501 = vpop.xlane.xlu0 %500
    %v502 = vcvt.f32.s32 %v501
    %v503 = vcvt.f32.s32 %v497
    %v504 = vshll.u32 %v503, 16
    %v505 = vadd.s32 %v504, %v502
    %v506 = vand.u32 %v345, 65535
    %v507 = vshra.s32 %v345, 16
    %v508 = vcvt.s32.f32 %v506
    %v509 = vcvt.s32.f32 %v507
    %510 = vmax.xlane.f32.xlu0 %v509
    %v511 = vpop.xlane.xlu0 %510
    %vm512 = vcmp.eq.f32.partialorder %v509, %v511
    %v513 = vsel %vm512, %v508, -inf
    %514 = vmax.xlane.f32.xlu0 %v513
    %v515 = vpop.xlane.xlu0 %514
    %v516 = vcvt.f32.s32 %v515
    %v517 = vcvt.f32.s32 %v511
    %v518 = vshll.u32 %v517, 16
    %v519 = vadd.s32 %v518, %v516
    %v520 = vand.u32 %v346, 65535
    %v521 = vshra.s32 %v346, 16
    %v522 = vcvt.s32.f32 %v520
    %v523 = vcvt.s32.f32 %v521
    %524 = vmax.xlane.f32.xlu0 %v523
    %v525 = vpop.xlane.xlu0 %524
    %vm526 = vcmp.eq.f32.partialorder %v523, %v525
    %v527 = vsel %vm526, %v522, -inf
    %528 = vmax.xlane.f32.xlu0 %v527
    %v529 = vpop.xlane.xlu0 %528
    %v530 = vcvt.f32.s32 %v529
    %v531 = vcvt.f32.s32 %v525
    %v532 = vshll.u32 %v531, 16
    %v533 = vadd.s32 %v532, %v530
    %v534 = vand.u32 %v347, 65535
    %v535 = vshra.s32 %v347, 16
    %v536 = vcvt.s32.f32 %v534
    %v537 = vcvt.s32.f32 %v535
    %538 = vmax.xlane.f32.xlu0 %v537
    %v539 = vpop.xlane.xlu0 %538
    %vm540 = vcmp.eq.f32.partialorder %v537, %v539
    %v541 = vsel %vm540, %v536, -inf
    %542 = vmax.xlane.f32.xlu0 %v541
    %v543 = vpop.xlane.xlu0 %542
    %v544 = vcvt.f32.s32 %v543
    %v545 = vcvt.f32.s32 %v539
    %v546 = vshll.u32 %v545, 16
    %v547 = vadd.s32 %v546, %v544
    %v548 = vand.u32 %v348, 65535
    %v549 = vshra.s32 %v348, 16
    %v550 = vcvt.s32.f32 %v548
    %v551 = vcvt.s32.f32 %v549
    %552 = vmax.xlane.f32.xlu0 %v551
    %v553 = vpop.xlane.xlu0 %552
    %vm554 = vcmp.eq.f32.partialorder %v551, %v553
    %v555 = vsel %vm554, %v550, -inf
    %556 = vmax.xlane.f32.xlu0 %v555
    %v557 = vpop.xlane.xlu0 %556
    %v558 = vcvt.f32.s32 %v557
    %v559 = vcvt.f32.s32 %v553
    %v560 = vshll.u32 %v559, 16
    %v561 = vadd.s32 %v560, %v558
    %v562 = vand.u32 %v349, 65535
    %v563 = vshra.s32 %v349, 16
    %v564 = vcvt.s32.f32 %v562
    %v565 = vcvt.s32.f32 %v563
    %566 = vmax.xlane.f32.xlu0 %v565
    %v567 = vpop.xlane.xlu0 %566
    %vm568 = vcmp.eq.f32.partialorder %v565, %v567
    %v569 = vsel %vm568, %v564, -inf
    %570 = vmax.xlane.f32.xlu0 %v569
    %v571 = vpop.xlane.xlu0 %570
    %v572 = vcvt.f32.s32 %v571
    %v573 = vcvt.f32.s32 %v567
    %v574 = vshll.u32 %v573, 16
    %v575 = vadd.s32 %v574, %v572
    %vm576 = vcmp.eq.s32.totalorder %v334, %v365
    %vm577 = vcmp.eq.s32.totalorder %v335, %v379
    %vm578 = vcmp.eq.s32.totalorder %v336, %v393
    %vm579 = vcmp.eq.s32.totalorder %v337, %v407
    %vm580 = vcmp.eq.s32.totalorder %v338, %v421
    %vm581 = vcmp.eq.s32.totalorder %v339, %v435
    %vm582 = vcmp.eq.s32.totalorder %v340, %v449
    %vm583 = vcmp.eq.s32.totalorder %v341, %v463
    %vm584 = vcmp.eq.s32.totalorder %v342, %v477
    %vm585 = vcmp.eq.s32.totalorder %v343, %v491
    %vm586 = vcmp.eq.s32.totalorder %v344, %v505
    %vm587 = vcmp.eq.s32.totalorder %v345, %v519
    %vm588 = vcmp.eq.s32.totalorder %v346, %v533
    %vm589 = vcmp.eq.s32.totalorder %v347, %v547
    %vm590 = vcmp.eq.s32.totalorder %v348, %v561
    %vm591 = vcmp.eq.s32.totalorder %v349, %v575
    %v592 = vsel %vm576, %v351, 128
    %v593 = vsel %vm577, %v351, 128
    %v594 = vsel %vm578, %v351, 128
    %v595 = vsel %vm579, %v351, 128
    %v596 = vsel %vm580, %v351, 128
    %v597 = vsel %vm581, %v351, 128
    %v598 = vsel %vm582, %v351, 128
    %v599 = vsel %vm583, %v351, 128
    %v600 = vsel %vm584, %v351, 128
    %v601 = vsel %vm585, %v351, 128
    %v602 = vsel %vm586, %v351, 128
    %v603 = vsel %vm587, %v351, 128
    %v604 = vsel %vm588, %v351, 128
    %v605 = vsel %vm589, %v351, 128
    %v606 = vsel %vm590, %v351, 128
    %v607 = vsel %vm591, %v351, 128
    %v608 = vand.u32 %v592, 65535
    %v609 = vshra.s32 %v592, 16
    %v610 = vcvt.s32.f32 %v608
    %v611 = vcvt.s32.f32 %v609
    %612 = vmin.xlane.f32.xlu0 %v611
    %v613 = vpop.xlane.xlu0 %612
    %vm614 = vcmp.eq.f32.partialorder %v611, %v613
    %v615 = vsel %vm614, %v610, inf
    %616 = vmin.xlane.f32.xlu0 %v615
    %v617 = vpop.xlane.xlu0 %616
    %v618 = vcvt.f32.s32 %v617
    %v619 = vcvt.f32.s32 %v613
    %v620 = vshll.u32 %v619, 16
    %v621 = vadd.s32 %v620, %v618
    %v622 = vand.u32 %v593, 65535
    %v623 = vshra.s32 %v593, 16
    %v624 = vcvt.s32.f32 %v622
    %v625 = vcvt.s32.f32 %v623
    %626 = vmin.xlane.f32.xlu0 %v625
    %v627 = vpop.xlane.xlu0 %626
    %vm628 = vcmp.eq.f32.partialorder %v625, %v627
    %v629 = vsel %vm628, %v624, inf
    %630 = vmin.xlane.f32.xlu0 %v629
    %v631 = vpop.xlane.xlu0 %630
    %v632 = vcvt.f32.s32 %v631
    %v633 = vcvt.f32.s32 %v627
    %v634 = vshll.u32 %v633, 16
    %v635 = vadd.s32 %v634, %v632
    %v636 = vand.u32 %v594, 65535
    %v637 = vshra.s32 %v594, 16
    %v638 = vcvt.s32.f32 %v636
    %v639 = vcvt.s32.f32 %v637
    %640 = vmin.xlane.f32.xlu0 %v639
    %v641 = vpop.xlane.xlu0 %640
    %vm642 = vcmp.eq.f32.partialorder %v639, %v641
    %v643 = vsel %vm642, %v638, inf
    %644 = vmin.xlane.f32.xlu0 %v643
    %v645 = vpop.xlane.xlu0 %644
    %v646 = vcvt.f32.s32 %v645
    %v647 = vcvt.f32.s32 %v641
    %v648 = vshll.u32 %v647, 16
    %v649 = vadd.s32 %v648, %v646
    %v650 = vand.u32 %v595, 65535
    %v651 = vshra.s32 %v595, 16
    %v652 = vcvt.s32.f32 %v650
    %v653 = vcvt.s32.f32 %v651
    %654 = vmin.xlane.f32.xlu0 %v653
    %v655 = vpop.xlane.xlu0 %654
    %vm656 = vcmp.eq.f32.partialorder %v653, %v655
    %v657 = vsel %vm656, %v652, inf
    %658 = vmin.xlane.f32.xlu0 %v657
    %v659 = vpop.xlane.xlu0 %658
    %v660 = vcvt.f32.s32 %v659
    %v661 = vcvt.f32.s32 %v655
    %v662 = vshll.u32 %v661, 16
    %v663 = vadd.s32 %v662, %v660
    %v664 = vand.u32 %v596, 65535
    %v665 = vshra.s32 %v596, 16
    %v666 = vcvt.s32.f32 %v664
    %v667 = vcvt.s32.f32 %v665
    %668 = vmin.xlane.f32.xlu0 %v667
    %v669 = vpop.xlane.xlu0 %668
    %vm670 = vcmp.eq.f32.partialorder %v667, %v669
    %v671 = vsel %vm670, %v666, inf
    %672 = vmin.xlane.f32.xlu0 %v671
    %v673 = vpop.xlane.xlu0 %672
    %v674 = vcvt.f32.s32 %v673
    %v675 = vcvt.f32.s32 %v669
    %v676 = vshll.u32 %v675, 16
    %v677 = vadd.s32 %v676, %v674
    %v678 = vand.u32 %v597, 65535
    %v679 = vshra.s32 %v597, 16
    %v680 = vcvt.s32.f32 %v678
    %v681 = vcvt.s32.f32 %v679
    %682 = vmin.xlane.f32.xlu0 %v681
    %v683 = vpop.xlane.xlu0 %682
    %vm684 = vcmp.eq.f32.partialorder %v681, %v683
    %v685 = vsel %vm684, %v680, inf
    %686 = vmin.xlane.f32.xlu0 %v685
    %v687 = vpop.xlane.xlu0 %686
    %v688 = vcvt.f32.s32 %v687
    %v689 = vcvt.f32.s32 %v683
    %v690 = vshll.u32 %v689, 16
    %v691 = vadd.s32 %v690, %v688
    %v692 = vand.u32 %v598, 65535
    %v693 = vshra.s32 %v598, 16
    %v694 = vcvt.s32.f32 %v692
    %v695 = vcvt.s32.f32 %v693
    %696 = vmin.xlane.f32.xlu0 %v695
    %v697 = vpop.xlane.xlu0 %696
    %vm698 = vcmp.eq.f32.partialorder %v695, %v697
    %v699 = vsel %vm698, %v694, inf
    %700 = vmin.xlane.f32.xlu0 %v699
    %v701 = vpop.xlane.xlu0 %700
    %v702 = vcvt.f32.s32 %v701
    %v703 = vcvt.f32.s32 %v697
    %v704 = vshll.u32 %v703, 16
    %v705 = vadd.s32 %v704, %v702
    %v706 = vand.u32 %v599, 65535
    %v707 = vshra.s32 %v599, 16
    %v708 = vcvt.s32.f32 %v706
    %v709 = vcvt.s32.f32 %v707
    %710 = vmin.xlane.f32.xlu0 %v709
    %v711 = vpop.xlane.xlu0 %710
    %vm712 = vcmp.eq.f32.partialorder %v709, %v711
    %v713 = vsel %vm712, %v708, inf
    %714 = vmin.xlane.f32.xlu0 %v713
    %v715 = vpop.xlane.xlu0 %714
    %v716 = vcvt.f32.s32 %v715
    %v717 = vcvt.f32.s32 %v711
    %v718 = vshll.u32 %v717, 16
    %v719 = vadd.s32 %v718, %v716
    %v720 = vand.u32 %v600, 65535
    %v721 = vshra.s32 %v600, 16
    %v722 = vcvt.s32.f32 %v720
    %v723 = vcvt.s32.f32 %v721
    %724 = vmin.xlane.f32.xlu0 %v723
    %v725 = vpop.xlane.xlu0 %724
    %vm726 = vcmp.eq.f32.partialorder %v723, %v725
    %v727 = vsel %vm726, %v722, inf
    %728 = vmin.xlane.f32.xlu0 %v727
    %v729 = vpop.xlane.xlu0 %728
    %v730 = vcvt.f32.s32 %v729
    %v731 = vcvt.f32.s32 %v725
    %v732 = vshll.u32 %v731, 16
    %v733 = vadd.s32 %v732, %v730
    %v734 = vand.u32 %v601, 65535
    %v735 = vshra.s32 %v601, 16
    %v736 = vcvt.s32.f32 %v734
    %v737 = vcvt.s32.f32 %v735
    %738 = vmin.xlane.f32.xlu0 %v737
    %v739 = vpop.xlane.xlu0 %738
    %vm740 = vcmp.eq.f32.partialorder %v737, %v739
    %v741 = vsel %vm740, %v736, inf
    %742 = vmin.xlane.f32.xlu0 %v741
    %v743 = vpop.xlane.xlu0 %742
    %v744 = vcvt.f32.s32 %v743
    %v745 = vcvt.f32.s32 %v739
    %v746 = vshll.u32 %v745, 16
    %v747 = vadd.s32 %v746, %v744
    %v748 = vand.u32 %v602, 65535
    %v749 = vshra.s32 %v602, 16
    %v750 = vcvt.s32.f32 %v748
    %v751 = vcvt.s32.f32 %v749
    %752 = vmin.xlane.f32.xlu0 %v751
    %v753 = vpop.xlane.xlu0 %752
    %vm754 = vcmp.eq.f32.partialorder %v751, %v753
    %v755 = vsel %vm754, %v750, inf
    %756 = vmin.xlane.f32.xlu0 %v755
    %v757 = vpop.xlane.xlu0 %756
    %v758 = vcvt.f32.s32 %v757
    %v759 = vcvt.f32.s32 %v753
    %v760 = vshll.u32 %v759, 16
    %v761 = vadd.s32 %v760, %v758
    %v762 = vand.u32 %v603, 65535
    %v763 = vshra.s32 %v603, 16
    %v764 = vcvt.s32.f32 %v762
    %v765 = vcvt.s32.f32 %v763
    %766 = vmin.xlane.f32.xlu0 %v765
    %v767 = vpop.xlane.xlu0 %766
    %vm768 = vcmp.eq.f32.partialorder %v765, %v767
    %v769 = vsel %vm768, %v764, inf
    %770 = vmin.xlane.f32.xlu0 %v769
    %v771 = vpop.xlane.xlu0 %770
    %v772 = vcvt.f32.s32 %v771
    %v773 = vcvt.f32.s32 %v767
    %v774 = vshll.u32 %v773, 16
    %v775 = vadd.s32 %v774, %v772
    %v776 = vand.u32 %v604, 65535
    %v777 = vshra.s32 %v604, 16
    %v778 = vcvt.s32.f32 %v776
    %v779 = vcvt.s32.f32 %v777
    %780 = vmin.xlane.f32.xlu0 %v779
    %v781 = vpop.xlane.xlu0 %780
    %vm782 = vcmp.eq.f32.partialorder %v779, %v781
    %v783 = vsel %vm782, %v778, inf
    %784 = vmin.xlane.f32.xlu0 %v783
    %v785 = vpop.xlane.xlu0 %784
    %v786 = vcvt.f32.s32 %v785
    %v787 = vcvt.f32.s32 %v781
    %v788 = vshll.u32 %v787, 16
    %v789 = vadd.s32 %v788, %v786
    %v790 = vand.u32 %v605, 65535
    %v791 = vshra.s32 %v605, 16
    %v792 = vcvt.s32.f32 %v790
    %v793 = vcvt.s32.f32 %v791
    %794 = vmin.xlane.f32.xlu0 %v793
    %v795 = vpop.xlane.xlu0 %794
    %vm796 = vcmp.eq.f32.partialorder %v793, %v795
    %v797 = vsel %vm796, %v792, inf
    %798 = vmin.xlane.f32.xlu0 %v797
    %v799 = vpop.xlane.xlu0 %798
    %v800 = vcvt.f32.s32 %v799
    %v801 = vcvt.f32.s32 %v795
    %v802 = vshll.u32 %v801, 16
    %v803 = vadd.s32 %v802, %v800
    %v804 = vand.u32 %v606, 65535
    %v805 = vshra.s32 %v606, 16
    %v806 = vcvt.s32.f32 %v804
    %v807 = vcvt.s32.f32 %v805
    %808 = vmin.xlane.f32.xlu0 %v807
    %v809 = vpop.xlane.xlu0 %808
    %vm810 = vcmp.eq.f32.partialorder %v807, %v809
    %v811 = vsel %vm810, %v806, inf
    %812 = vmin.xlane.f32.xlu0 %v811
    %v813 = vpop.xlane.xlu0 %812
    %v814 = vcvt.f32.s32 %v813
    %v815 = vcvt.f32.s32 %v809
    %v816 = vshll.u32 %v815, 16
    %v817 = vadd.s32 %v816, %v814
    %v818 = vand.u32 %v607, 65535
    %v819 = vshra.s32 %v607, 16
    %v820 = vcvt.s32.f32 %v818
    %v821 = vcvt.s32.f32 %v819
    %822 = vmin.xlane.f32.xlu0 %v821
    %v823 = vpop.xlane.xlu0 %822
    %vm824 = vcmp.eq.f32.partialorder %v821, %v823
    %v825 = vsel %vm824, %v820, inf
    %826 = vmin.xlane.f32.xlu0 %v825
    %v827 = vpop.xlane.xlu0 %826
    %v828 = vcvt.f32.s32 %v827
    %v829 = vcvt.f32.s32 %v823
    %v830 = vshll.u32 %v829, 16
    %v831 = vadd.s32 %v830, %v828
    %vm832 = vcmp.eq.s32.totalorder %v351, 0
    %v833 = vsel %vm832, %v621, 0
    %v834 = vsel %vm832, %v635, 0
    %v835 = vsel %vm832, %v649, 0
    %v836 = vsel %vm832, %v663, 0
    %v837 = vsel %vm832, %v677, 0
    %v838 = vsel %vm832, %v691, 0
    %v839 = vsel %vm832, %v705, 0
    %v840 = vsel %vm832, %v719, 0
    %v841 = vsel %vm832, %v733, 0
    %v842 = vsel %vm832, %v747, 0
    %v843 = vsel %vm832, %v761, 0
    %v844 = vsel %vm832, %v775, 0
    %v845 = vsel %vm832, %v789, 0
    %v846 = vsel %vm832, %v803, 0
    %v847 = vsel %vm832, %v817, 0
    %v848 = vsel %vm832, %v831, 0
    %v849 = vsel %vm576, 2147483648, %v334
    %v850 = vsel %vm577, 2147483648, %v335
    %v851 = vsel %vm578, 2147483648, %v336
    %v852 = vsel %vm579, 2147483648, %v337
    %v853 = vsel %vm580, 2147483648, %v338
    %v854 = vsel %vm581, 2147483648, %v339
    %v855 = vsel %vm582, 2147483648, %v340
    %v856 = vsel %vm583, 2147483648, %v341
    %v857 = vsel %vm584, 2147483648, %v342
    %v858 = vsel %vm585, 2147483648, %v343
    %v859 = vsel %vm586, 2147483648, %v344
    %v860 = vsel %vm587, 2147483648, %v345
    %v861 = vsel %vm588, 2147483648, %v346
    %v862 = vsel %vm589, 2147483648, %v347
    %v863 = vsel %vm590, 2147483648, %v348
    %v864 = vsel %vm591, 2147483648, %v349
    %v865 = vand.u32 %v849, 65535
    %v866 = vshra.s32 %v849, 16
    %v867 = vcvt.s32.f32 %v865
    %v868 = vcvt.s32.f32 %v866
    %869 = vmax.xlane.f32.xlu0 %v868
    %v870 = vpop.xlane.xlu0 %869
    %vm871 = vcmp.eq.f32.partialorder %v868, %v870
    %v872 = vsel %vm871, %v867, -inf
    %873 = vmax.xlane.f32.xlu0 %v872
    %v874 = vpop.xlane.xlu0 %873
    %v875 = vcvt.f32.s32 %v874
    %v876 = vcvt.f32.s32 %v870
    %v877 = vshll.u32 %v876, 16
    %v878 = vadd.s32 %v877, %v875
    %v879 = vand.u32 %v850, 65535
    %v880 = vshra.s32 %v850, 16
    %v881 = vcvt.s32.f32 %v879
    %v882 = vcvt.s32.f32 %v880
    %883 = vmax.xlane.f32.xlu0 %v882
    %v884 = vpop.xlane.xlu0 %883
    %vm885 = vcmp.eq.f32.partialorder %v882, %v884
    %v886 = vsel %vm885, %v881, -inf
    %887 = vmax.xlane.f32.xlu0 %v886
    %v888 = vpop.xlane.xlu0 %887
    %v889 = vcvt.f32.s32 %v888
    %v890 = vcvt.f32.s32 %v884
    %v891 = vshll.u32 %v890, 16
    %v892 = vadd.s32 %v891, %v889
    %v893 = vand.u32 %v851, 65535
    %v894 = vshra.s32 %v851, 16
    %v895 = vcvt.s32.f32 %v893
    %v896 = vcvt.s32.f32 %v894
    %897 = vmax.xlane.f32.xlu0 %v896
    %v898 = vpop.xlane.xlu0 %897
    %vm899 = vcmp.eq.f32.partialorder %v896, %v898
    %v900 = vsel %vm899, %v895, -inf
    %901 = vmax.xlane.f32.xlu0 %v900
    %v902 = vpop.xlane.xlu0 %901
    %v903 = vcvt.f32.s32 %v902
    %v904 = vcvt.f32.s32 %v898
    %v905 = vshll.u32 %v904, 16
    %v906 = vadd.s32 %v905, %v903
    %v907 = vand.u32 %v852, 65535
    %v908 = vshra.s32 %v852, 16
    %v909 = vcvt.s32.f32 %v907
    %v910 = vcvt.s32.f32 %v908
    %911 = vmax.xlane.f32.xlu0 %v910
    %v912 = vpop.xlane.xlu0 %911
    %vm913 = vcmp.eq.f32.partialorder %v910, %v912
    %v914 = vsel %vm913, %v909, -inf
    %915 = vmax.xlane.f32.xlu0 %v914
    %v916 = vpop.xlane.xlu0 %915
    %v917 = vcvt.f32.s32 %v916
    %v918 = vcvt.f32.s32 %v912
    %v919 = vshll.u32 %v918, 16
    %v920 = vadd.s32 %v919, %v917
    %v921 = vand.u32 %v853, 65535
    %v922 = vshra.s32 %v853, 16
    %v923 = vcvt.s32.f32 %v921
    %v924 = vcvt.s32.f32 %v922
    %925 = vmax.xlane.f32.xlu0 %v924
    %v926 = vpop.xlane.xlu0 %925
    %vm927 = vcmp.eq.f32.partialorder %v924, %v926
    %v928 = vsel %vm927, %v923, -inf
    %929 = vmax.xlane.f32.xlu0 %v928
    %v930 = vpop.xlane.xlu0 %929
    %v931 = vcvt.f32.s32 %v930
    %v932 = vcvt.f32.s32 %v926
    %v933 = vshll.u32 %v932, 16
    %v934 = vadd.s32 %v933, %v931
    %v935 = vand.u32 %v854, 65535
    %v936 = vshra.s32 %v854, 16
    %v937 = vcvt.s32.f32 %v935
    %v938 = vcvt.s32.f32 %v936
    %939 = vmax.xlane.f32.xlu0 %v938
    %v940 = vpop.xlane.xlu0 %939
    %vm941 = vcmp.eq.f32.partialorder %v938, %v940
    %v942 = vsel %vm941, %v937, -inf
    %943 = vmax.xlane.f32.xlu0 %v942
    %v944 = vpop.xlane.xlu0 %943
    %v945 = vcvt.f32.s32 %v944
    %v946 = vcvt.f32.s32 %v940
    %v947 = vshll.u32 %v946, 16
    %v948 = vadd.s32 %v947, %v945
    %v949 = vand.u32 %v855, 65535
    %v950 = vshra.s32 %v855, 16
    %v951 = vcvt.s32.f32 %v949
    %v952 = vcvt.s32.f32 %v950
    %953 = vmax.xlane.f32.xlu0 %v952
    %v954 = vpop.xlane.xlu0 %953
    %vm955 = vcmp.eq.f32.partialorder %v952, %v954
    %v956 = vsel %vm955, %v951, -inf
    %957 = vmax.xlane.f32.xlu0 %v956
    %v958 = vpop.xlane.xlu0 %957
    %v959 = vcvt.f32.s32 %v958
    %v960 = vcvt.f32.s32 %v954
    %v961 = vshll.u32 %v960, 16
    %v962 = vadd.s32 %v961, %v959
    %v963 = vand.u32 %v856, 65535
    %v964 = vshra.s32 %v856, 16
    %v965 = vcvt.s32.f32 %v963
    %v966 = vcvt.s32.f32 %v964
    %967 = vmax.xlane.f32.xlu0 %v966
    %v968 = vpop.xlane.xlu0 %967
    %vm969 = vcmp.eq.f32.partialorder %v966, %v968
    %v970 = vsel %vm969, %v965, -inf
    %971 = vmax.xlane.f32.xlu0 %v970
    %v972 = vpop.xlane.xlu0 %971
    %v973 = vcvt.f32.s32 %v972
    %v974 = vcvt.f32.s32 %v968
    %v975 = vshll.u32 %v974, 16
    %v976 = vadd.s32 %v975, %v973
    %v977 = vand.u32 %v857, 65535
    %v978 = vshra.s32 %v857, 16
    %v979 = vcvt.s32.f32 %v977
    %v980 = vcvt.s32.f32 %v978
    %981 = vmax.xlane.f32.xlu0 %v980
    %v982 = vpop.xlane.xlu0 %981
    %vm983 = vcmp.eq.f32.partialorder %v980, %v982
    %v984 = vsel %vm983, %v979, -inf
    %985 = vmax.xlane.f32.xlu0 %v984
    %v986 = vpop.xlane.xlu0 %985
    %v987 = vcvt.f32.s32 %v986
    %v988 = vcvt.f32.s32 %v982
    %v989 = vshll.u32 %v988, 16
    %v990 = vadd.s32 %v989, %v987
    %v991 = vand.u32 %v858, 65535
    %v992 = vshra.s32 %v858, 16
    %v993 = vcvt.s32.f32 %v991
    %v994 = vcvt.s32.f32 %v992
    %995 = vmax.xlane.f32.xlu0 %v994
    %v996 = vpop.xlane.xlu0 %995
    %vm997 = vcmp.eq.f32.partialorder %v994, %v996
    %v998 = vsel %vm997, %v993, -inf
    %999 = vmax.xlane.f32.xlu0 %v998
    %v1000 = vpop.xlane.xlu0 %999
    %v1001 = vcvt.f32.s32 %v1000
    %v1002 = vcvt.f32.s32 %v996
    %v1003 = vshll.u32 %v1002, 16
    %v1004 = vadd.s32 %v1003, %v1001
    %v1005 = vand.u32 %v859, 65535
    %v1006 = vshra.s32 %v859, 16
    %v1007 = vcvt.s32.f32 %v1005
    %v1008 = vcvt.s32.f32 %v1006
    %1009 = vmax.xlane.f32.xlu0 %v1008
    %v1010 = vpop.xlane.xlu0 %1009
    %vm1011 = vcmp.eq.f32.partialorder %v1008, %v1010
    %v1012 = vsel %vm1011, %v1007, -inf
    %1013 = vmax.xlane.f32.xlu0 %v1012
    %v1014 = vpop.xlane.xlu0 %1013
    %v1015 = vcvt.f32.s32 %v1014
    %v1016 = vcvt.f32.s32 %v1010
    %v1017 = vshll.u32 %v1016, 16
    %v1018 = vadd.s32 %v1017, %v1015
    %v1019 = vand.u32 %v860, 65535
    %v1020 = vshra.s32 %v860, 16
    %v1021 = vcvt.s32.f32 %v1019
    %v1022 = vcvt.s32.f32 %v1020
    %1023 = vmax.xlane.f32.xlu0 %v1022
    %v1024 = vpop.xlane.xlu0 %1023
    %vm1025 = vcmp.eq.f32.partialorder %v1022, %v1024
    %v1026 = vsel %vm1025, %v1021, -inf
    %1027 = vmax.xlane.f32.xlu0 %v1026
    %v1028 = vpop.xlane.xlu0 %1027
    %v1029 = vcvt.f32.s32 %v1028
    %v1030 = vcvt.f32.s32 %v1024
    %v1031 = vshll.u32 %v1030, 16
    %v1032 = vadd.s32 %v1031, %v1029
    %v1033 = vand.u32 %v861, 65535
    %v1034 = vshra.s32 %v861, 16
    %v1035 = vcvt.s32.f32 %v1033
    %v1036 = vcvt.s32.f32 %v1034
    %1037 = vmax.xlane.f32.xlu0 %v1036
    %v1038 = vpop.xlane.xlu0 %1037
    %vm1039 = vcmp.eq.f32.partialorder %v1036, %v1038
    %v1040 = vsel %vm1039, %v1035, -inf
    %1041 = vmax.xlane.f32.xlu0 %v1040
    %v1042 = vpop.xlane.xlu0 %1041
    %v1043 = vcvt.f32.s32 %v1042
    %v1044 = vcvt.f32.s32 %v1038
    %v1045 = vshll.u32 %v1044, 16
    %v1046 = vadd.s32 %v1045, %v1043
    %v1047 = vand.u32 %v862, 65535
    %v1048 = vshra.s32 %v862, 16
    %v1049 = vcvt.s32.f32 %v1047
    %v1050 = vcvt.s32.f32 %v1048
    %1051 = vmax.xlane.f32.xlu0 %v1050
    %v1052 = vpop.xlane.xlu0 %1051
    %vm1053 = vcmp.eq.f32.partialorder %v1050, %v1052
    %v1054 = vsel %vm1053, %v1049, -inf
    %1055 = vmax.xlane.f32.xlu0 %v1054
    %v1056 = vpop.xlane.xlu0 %1055
    %v1057 = vcvt.f32.s32 %v1056
    %v1058 = vcvt.f32.s32 %v1052
    %v1059 = vshll.u32 %v1058, 16
    %v1060 = vadd.s32 %v1059, %v1057
    %v1061 = vand.u32 %v863, 65535
    %v1062 = vshra.s32 %v863, 16
    %v1063 = vcvt.s32.f32 %v1061
    %v1064 = vcvt.s32.f32 %v1062
    %1065 = vmax.xlane.f32.xlu0 %v1064
    %v1066 = vpop.xlane.xlu0 %1065
    %vm1067 = vcmp.eq.f32.partialorder %v1064, %v1066
    %v1068 = vsel %vm1067, %v1063, -inf
    %1069 = vmax.xlane.f32.xlu0 %v1068
    %v1070 = vpop.xlane.xlu0 %1069
    %v1071 = vcvt.f32.s32 %v1070
    %v1072 = vcvt.f32.s32 %v1066
    %v1073 = vshll.u32 %v1072, 16
    %v1074 = vadd.s32 %v1073, %v1071
    %v1075 = vand.u32 %v864, 65535
    %v1076 = vshra.s32 %v864, 16
    %v1077 = vcvt.s32.f32 %v1075
    %v1078 = vcvt.s32.f32 %v1076
    %1079 = vmax.xlane.f32.xlu0 %v1078
    %v1080 = vpop.xlane.xlu0 %1079
    %vm1081 = vcmp.eq.f32.partialorder %v1078, %v1080
    %v1082 = vsel %vm1081, %v1077, -inf
    %1083 = vmax.xlane.f32.xlu0 %v1082
    %v1084 = vpop.xlane.xlu0 %1083
    %v1085 = vcvt.f32.s32 %v1084
    %v1086 = vcvt.f32.s32 %v1080
    %v1087 = vshll.u32 %v1086, 16
    %v1088 = vadd.s32 %v1087, %v1085
    %vm1089 = vcmp.eq.s32.totalorder %v849, %v878
    %vm1090 = vcmp.eq.s32.totalorder %v850, %v892
    %vm1091 = vcmp.eq.s32.totalorder %v851, %v906
    %vm1092 = vcmp.eq.s32.totalorder %v852, %v920
    %vm1093 = vcmp.eq.s32.totalorder %v853, %v934
    %vm1094 = vcmp.eq.s32.totalorder %v854, %v948
    %vm1095 = vcmp.eq.s32.totalorder %v855, %v962
    %vm1096 = vcmp.eq.s32.totalorder %v856, %v976
    %vm1097 = vcmp.eq.s32.totalorder %v857, %v990
    %vm1098 = vcmp.eq.s32.totalorder %v858, %v1004
    %vm1099 = vcmp.eq.s32.totalorder %v859, %v1018
    %vm1100 = vcmp.eq.s32.totalorder %v860, %v1032
    %vm1101 = vcmp.eq.s32.totalorder %v861, %v1046
    %vm1102 = vcmp.eq.s32.totalorder %v862, %v1060
    %vm1103 = vcmp.eq.s32.totalorder %v863, %v1074
    %vm1104 = vcmp.eq.s32.totalorder %v864, %v1088
    %v1105 = vsel %vm1089, %v351, 128
    %v1106 = vsel %vm1090, %v351, 128
    %v1107 = vsel %vm1091, %v351, 128
    %v1108 = vsel %vm1092, %v351, 128
    %v1109 = vsel %vm1093, %v351, 128
    %v1110 = vsel %vm1094, %v351, 128
    %v1111 = vsel %vm1095, %v351, 128
    %v1112 = vsel %vm1096, %v351, 128
    %v1113 = vsel %vm1097, %v351, 128
    %v1114 = vsel %vm1098, %v351, 128
    %v1115 = vsel %vm1099, %v351, 128
    %v1116 = vsel %vm1100, %v351, 128
    %v1117 = vsel %vm1101, %v351, 128
    %v1118 = vsel %vm1102, %v351, 128
    %v1119 = vsel %vm1103, %v351, 128
    %v1120 = vsel %vm1104, %v351, 128
    %v1121 = vand.u32 %v1105, 65535
    %v1122 = vshra.s32 %v1105, 16
    %v1123 = vcvt.s32.f32 %v1121
    %v1124 = vcvt.s32.f32 %v1122
    %1125 = vmin.xlane.f32.xlu0 %v1124
    %v1126 = vpop.xlane.xlu0 %1125
    %vm1127 = vcmp.eq.f32.partialorder %v1124, %v1126
    %v1128 = vsel %vm1127, %v1123, inf
    %1129 = vmin.xlane.f32.xlu0 %v1128
    %v1130 = vpop.xlane.xlu0 %1129
    %v1131 = vcvt.f32.s32 %v1130
    %v1132 = vcvt.f32.s32 %v1126
    %v1133 = vshll.u32 %v1132, 16
    %v1134 = vadd.s32 %v1133, %v1131
    %v1135 = vand.u32 %v1106, 65535
    %v1136 = vshra.s32 %v1106, 16
    %v1137 = vcvt.s32.f32 %v1135
    %v1138 = vcvt.s32.f32 %v1136
    %1139 = vmin.xlane.f32.xlu0 %v1138
    %v1140 = vpop.xlane.xlu0 %1139
    %vm1141 = vcmp.eq.f32.partialorder %v1138, %v1140
    %v1142 = vsel %vm1141, %v1137, inf
    %1143 = vmin.xlane.f32.xlu0 %v1142
    %v1144 = vpop.xlane.xlu0 %1143
    %v1145 = vcvt.f32.s32 %v1144
    %v1146 = vcvt.f32.s32 %v1140
    %v1147 = vshll.u32 %v1146, 16
    %v1148 = vadd.s32 %v1147, %v1145
    %v1149 = vand.u32 %v1107, 65535
    %v1150 = vshra.s32 %v1107, 16
    %v1151 = vcvt.s32.f32 %v1149
    %v1152 = vcvt.s32.f32 %v1150
    %1153 = vmin.xlane.f32.xlu0 %v1152
    %v1154 = vpop.xlane.xlu0 %1153
    %vm1155 = vcmp.eq.f32.partialorder %v1152, %v1154
    %v1156 = vsel %vm1155, %v1151, inf
    %1157 = vmin.xlane.f32.xlu0 %v1156
    %v1158 = vpop.xlane.xlu0 %1157
    %v1159 = vcvt.f32.s32 %v1158
    %v1160 = vcvt.f32.s32 %v1154
    %v1161 = vshll.u32 %v1160, 16
    %v1162 = vadd.s32 %v1161, %v1159
    %v1163 = vand.u32 %v1108, 65535
    %v1164 = vshra.s32 %v1108, 16
    %v1165 = vcvt.s32.f32 %v1163
    %v1166 = vcvt.s32.f32 %v1164
    %1167 = vmin.xlane.f32.xlu0 %v1166
    %v1168 = vpop.xlane.xlu0 %1167
    %vm1169 = vcmp.eq.f32.partialorder %v1166, %v1168
    %v1170 = vsel %vm1169, %v1165, inf
    %1171 = vmin.xlane.f32.xlu0 %v1170
    %v1172 = vpop.xlane.xlu0 %1171
    %v1173 = vcvt.f32.s32 %v1172
    %v1174 = vcvt.f32.s32 %v1168
    %v1175 = vshll.u32 %v1174, 16
    %v1176 = vadd.s32 %v1175, %v1173
    %v1177 = vand.u32 %v1109, 65535
    %v1178 = vshra.s32 %v1109, 16
    %v1179 = vcvt.s32.f32 %v1177
    %v1180 = vcvt.s32.f32 %v1178
    %1181 = vmin.xlane.f32.xlu0 %v1180
    %v1182 = vpop.xlane.xlu0 %1181
    %vm1183 = vcmp.eq.f32.partialorder %v1180, %v1182
    %v1184 = vsel %vm1183, %v1179, inf
    %1185 = vmin.xlane.f32.xlu0 %v1184
    %v1186 = vpop.xlane.xlu0 %1185
    %v1187 = vcvt.f32.s32 %v1186
    %v1188 = vcvt.f32.s32 %v1182
    %v1189 = vshll.u32 %v1188, 16
    %v1190 = vadd.s32 %v1189, %v1187
    %v1191 = vand.u32 %v1110, 65535
    %v1192 = vshra.s32 %v1110, 16
    %v1193 = vcvt.s32.f32 %v1191
    %v1194 = vcvt.s32.f32 %v1192
    %1195 = vmin.xlane.f32.xlu0 %v1194
    %v1196 = vpop.xlane.xlu0 %1195
    %vm1197 = vcmp.eq.f32.partialorder %v1194, %v1196
    %v1198 = vsel %vm1197, %v1193, inf
    %1199 = vmin.xlane.f32.xlu0 %v1198
    %v1200 = vpop.xlane.xlu0 %1199
    %v1201 = vcvt.f32.s32 %v1200
    %v1202 = vcvt.f32.s32 %v1196
    %v1203 = vshll.u32 %v1202, 16
    %v1204 = vadd.s32 %v1203, %v1201
    %v1205 = vand.u32 %v1111, 65535
    %v1206 = vshra.s32 %v1111, 16
    %v1207 = vcvt.s32.f32 %v1205
    %v1208 = vcvt.s32.f32 %v1206
    %1209 = vmin.xlane.f32.xlu0 %v1208
    %v1210 = vpop.xlane.xlu0 %1209
    %vm1211 = vcmp.eq.f32.partialorder %v1208, %v1210
    %v1212 = vsel %vm1211, %v1207, inf
    %1213 = vmin.xlane.f32.xlu0 %v1212
    %v1214 = vpop.xlane.xlu0 %1213
    %v1215 = vcvt.f32.s32 %v1214
    %v1216 = vcvt.f32.s32 %v1210
    %v1217 = vshll.u32 %v1216, 16
    %v1218 = vadd.s32 %v1217, %v1215
    %v1219 = vand.u32 %v1112, 65535
    %v1220 = vshra.s32 %v1112, 16
    %v1221 = vcvt.s32.f32 %v1219
    %v1222 = vcvt.s32.f32 %v1220
    %1223 = vmin.xlane.f32.xlu0 %v1222
    %v1224 = vpop.xlane.xlu0 %1223
    %vm1225 = vcmp.eq.f32.partialorder %v1222, %v1224
    %v1226 = vsel %vm1225, %v1221, inf
    %1227 = vmin.xlane.f32.xlu0 %v1226
    %v1228 = vpop.xlane.xlu0 %1227
    %v1229 = vcvt.f32.s32 %v1228
    %v1230 = vcvt.f32.s32 %v1224
    %v1231 = vshll.u32 %v1230, 16
    %v1232 = vadd.s32 %v1231, %v1229
    %v1233 = vand.u32 %v1113, 65535
    %v1234 = vshra.s32 %v1113, 16
    %v1235 = vcvt.s32.f32 %v1233
    %v1236 = vcvt.s32.f32 %v1234
    %1237 = vmin.xlane.f32.xlu0 %v1236
    %v1238 = vpop.xlane.xlu0 %1237
    %vm1239 = vcmp.eq.f32.partialorder %v1236, %v1238
    %v1240 = vsel %vm1239, %v1235, inf
    %1241 = vmin.xlane.f32.xlu0 %v1240
    %v1242 = vpop.xlane.xlu0 %1241
    %v1243 = vcvt.f32.s32 %v1242
    %v1244 = vcvt.f32.s32 %v1238
    %v1245 = vshll.u32 %v1244, 16
    %v1246 = vadd.s32 %v1245, %v1243
    %v1247 = vand.u32 %v1114, 65535
    %v1248 = vshra.s32 %v1114, 16
    %v1249 = vcvt.s32.f32 %v1247
    %v1250 = vcvt.s32.f32 %v1248
    %1251 = vmin.xlane.f32.xlu0 %v1250
    %v1252 = vpop.xlane.xlu0 %1251
    %vm1253 = vcmp.eq.f32.partialorder %v1250, %v1252
    %v1254 = vsel %vm1253, %v1249, inf
    %1255 = vmin.xlane.f32.xlu0 %v1254
    %v1256 = vpop.xlane.xlu0 %1255
    %v1257 = vcvt.f32.s32 %v1256
    %v1258 = vcvt.f32.s32 %v1252
    %v1259 = vshll.u32 %v1258, 16
    %v1260 = vadd.s32 %v1259, %v1257
    %v1261 = vand.u32 %v1115, 65535
    %v1262 = vshra.s32 %v1115, 16
    %v1263 = vcvt.s32.f32 %v1261
    %v1264 = vcvt.s32.f32 %v1262
    %1265 = vmin.xlane.f32.xlu0 %v1264
    %v1266 = vpop.xlane.xlu0 %1265
    %vm1267 = vcmp.eq.f32.partialorder %v1264, %v1266
    %v1268 = vsel %vm1267, %v1263, inf
    %1269 = vmin.xlane.f32.xlu0 %v1268
    %v1270 = vpop.xlane.xlu0 %1269
    %v1271 = vcvt.f32.s32 %v1270
    %v1272 = vcvt.f32.s32 %v1266
    %v1273 = vshll.u32 %v1272, 16
    %v1274 = vadd.s32 %v1273, %v1271
    %v1275 = vand.u32 %v1116, 65535
    %v1276 = vshra.s32 %v1116, 16
    %v1277 = vcvt.s32.f32 %v1275
    %v1278 = vcvt.s32.f32 %v1276
    %1279 = vmin.xlane.f32.xlu0 %v1278
    %v1280 = vpop.xlane.xlu0 %1279
    %vm1281 = vcmp.eq.f32.partialorder %v1278, %v1280
    %v1282 = vsel %vm1281, %v1277, inf
    %1283 = vmin.xlane.f32.xlu0 %v1282
    %v1284 = vpop.xlane.xlu0 %1283
    %v1285 = vcvt.f32.s32 %v1284
    %v1286 = vcvt.f32.s32 %v1280
    %v1287 = vshll.u32 %v1286, 16
    %v1288 = vadd.s32 %v1287, %v1285
    %v1289 = vand.u32 %v1117, 65535
    %v1290 = vshra.s32 %v1117, 16
    %v1291 = vcvt.s32.f32 %v1289
    %v1292 = vcvt.s32.f32 %v1290
    %1293 = vmin.xlane.f32.xlu0 %v1292
    %v1294 = vpop.xlane.xlu0 %1293
    %vm1295 = vcmp.eq.f32.partialorder %v1292, %v1294
    %v1296 = vsel %vm1295, %v1291, inf
    %1297 = vmin.xlane.f32.xlu0 %v1296
    %v1298 = vpop.xlane.xlu0 %1297
    %v1299 = vcvt.f32.s32 %v1298
    %v1300 = vcvt.f32.s32 %v1294
    %v1301 = vshll.u32 %v1300, 16
    %v1302 = vadd.s32 %v1301, %v1299
    %v1303 = vand.u32 %v1118, 65535
    %v1304 = vshra.s32 %v1118, 16
    %v1305 = vcvt.s32.f32 %v1303
    %v1306 = vcvt.s32.f32 %v1304
    %1307 = vmin.xlane.f32.xlu0 %v1306
    %v1308 = vpop.xlane.xlu0 %1307
    %vm1309 = vcmp.eq.f32.partialorder %v1306, %v1308
    %v1310 = vsel %vm1309, %v1305, inf
    %1311 = vmin.xlane.f32.xlu0 %v1310
    %v1312 = vpop.xlane.xlu0 %1311
    %v1313 = vcvt.f32.s32 %v1312
    %v1314 = vcvt.f32.s32 %v1308
    %v1315 = vshll.u32 %v1314, 16
    %v1316 = vadd.s32 %v1315, %v1313
    %v1317 = vand.u32 %v1119, 65535
    %v1318 = vshra.s32 %v1119, 16
    %v1319 = vcvt.s32.f32 %v1317
    %v1320 = vcvt.s32.f32 %v1318
    %1321 = vmin.xlane.f32.xlu0 %v1320
    %v1322 = vpop.xlane.xlu0 %1321
    %vm1323 = vcmp.eq.f32.partialorder %v1320, %v1322
    %v1324 = vsel %vm1323, %v1319, inf
    %1325 = vmin.xlane.f32.xlu0 %v1324
    %v1326 = vpop.xlane.xlu0 %1325
    %v1327 = vcvt.f32.s32 %v1326
    %v1328 = vcvt.f32.s32 %v1322
    %v1329 = vshll.u32 %v1328, 16
    %v1330 = vadd.s32 %v1329, %v1327
    %v1331 = vand.u32 %v1120, 65535
    %v1332 = vshra.s32 %v1120, 16
    %v1333 = vcvt.s32.f32 %v1331
    %v1334 = vcvt.s32.f32 %v1332
    %1335 = vmin.xlane.f32.xlu0 %v1334
    %v1336 = vpop.xlane.xlu0 %1335
    %vm1337 = vcmp.eq.f32.partialorder %v1334, %v1336
    %v1338 = vsel %vm1337, %v1333, inf
    %1339 = vmin.xlane.f32.xlu0 %v1338
    %v1340 = vpop.xlane.xlu0 %1339
    %v1341 = vcvt.f32.s32 %v1340
    %v1342 = vcvt.f32.s32 %v1336
    %v1343 = vshll.u32 %v1342, 16
    %v1344 = vadd.s32 %v1343, %v1341
    %vm1345 = vcmp.eq.s32.totalorder %v351, 1
    %v1346 = vsel %vm1345, %v1134, %v833
    %v1347 = vsel %vm1345, %v1148, %v834
    %v1348 = vsel %vm1345, %v1162, %v835
    %v1349 = vsel %vm1345, %v1176, %v836
    %v1350 = vsel %vm1345, %v1190, %v837
    %v1351 = vsel %vm1345, %v1204, %v838
    %v1352 = vsel %vm1345, %v1218, %v839
    %v1353 = vsel %vm1345, %v1232, %v840
    %v1354 = vsel %vm1345, %v1246, %v841
    %v1355 = vsel %vm1345, %v1260, %v842
    %v1356 = vsel %vm1345, %v1274, %v843
    %v1357 = vsel %vm1345, %v1288, %v844
    %v1358 = vsel %vm1345, %v1302, %v845
    %v1359 = vsel %vm1345, %v1316, %v846
    %v1360 = vsel %vm1345, %v1330, %v847
    %v1361 = vsel %vm1345, %v1344, %v848
    %v1362 = vsel %vm1089, 2147483648, %v849
    %v1363 = vsel %vm1090, 2147483648, %v850
    %v1364 = vsel %vm1091, 2147483648, %v851
    %v1365 = vsel %vm1092, 2147483648, %v852
    %v1366 = vsel %vm1093, 2147483648, %v853
    %v1367 = vsel %vm1094, 2147483648, %v854
    %v1368 = vsel %vm1095, 2147483648, %v855
    %v1369 = vsel %vm1096, 2147483648, %v856
    %v1370 = vsel %vm1097, 2147483648, %v857
    %v1371 = vsel %vm1098, 2147483648, %v858
    %v1372 = vsel %vm1099, 2147483648, %v859
    %v1373 = vsel %vm1100, 2147483648, %v860
    %v1374 = vsel %vm1101, 2147483648, %v861
    %v1375 = vsel %vm1102, 2147483648, %v862
    %v1376 = vsel %vm1103, 2147483648, %v863
    %v1377 = vsel %vm1104, 2147483648, %v864
    %v1378 = vand.u32 %v1362, 65535
    %v1379 = vshra.s32 %v1362, 16
    %v1380 = vcvt.s32.f32 %v1378
    %v1381 = vcvt.s32.f32 %v1379
    %1382 = vmax.xlane.f32.xlu0 %v1381
    %v1383 = vpop.xlane.xlu0 %1382
    %vm1384 = vcmp.eq.f32.partialorder %v1381, %v1383
    %v1385 = vsel %vm1384, %v1380, -inf
    %1386 = vmax.xlane.f32.xlu0 %v1385
    %v1387 = vpop.xlane.xlu0 %1386
    %v1388 = vcvt.f32.s32 %v1387
    %v1389 = vcvt.f32.s32 %v1383
    %v1390 = vshll.u32 %v1389, 16
    %v1391 = vadd.s32 %v1390, %v1388
    %v1392 = vand.u32 %v1363, 65535
    %v1393 = vshra.s32 %v1363, 16
    %v1394 = vcvt.s32.f32 %v1392
    %v1395 = vcvt.s32.f32 %v1393
    %1396 = vmax.xlane.f32.xlu0 %v1395
    %v1397 = vpop.xlane.xlu0 %1396
    %vm1398 = vcmp.eq.f32.partialorder %v1395, %v1397
    %v1399 = vsel %vm1398, %v1394, -inf
    %1400 = vmax.xlane.f32.xlu0 %v1399
    %v1401 = vpop.xlane.xlu0 %1400
    %v1402 = vcvt.f32.s32 %v1401
    %v1403 = vcvt.f32.s32 %v1397
    %v1404 = vshll.u32 %v1403, 16
    %v1405 = vadd.s32 %v1404, %v1402
    %v1406 = vand.u32 %v1364, 65535
    %v1407 = vshra.s32 %v1364, 16
    %v1408 = vcvt.s32.f32 %v1406
    %v1409 = vcvt.s32.f32 %v1407
    %1410 = vmax.xlane.f32.xlu0 %v1409
    %v1411 = vpop.xlane.xlu0 %1410
    %vm1412 = vcmp.eq.f32.partialorder %v1409, %v1411
    %v1413 = vsel %vm1412, %v1408, -inf
    %1414 = vmax.xlane.f32.xlu0 %v1413
    %v1415 = vpop.xlane.xlu0 %1414
    %v1416 = vcvt.f32.s32 %v1415
    %v1417 = vcvt.f32.s32 %v1411
    %v1418 = vshll.u32 %v1417, 16
    %v1419 = vadd.s32 %v1418, %v1416
    %v1420 = vand.u32 %v1365, 65535
    %v1421 = vshra.s32 %v1365, 16
    %v1422 = vcvt.s32.f32 %v1420
    %v1423 = vcvt.s32.f32 %v1421
    %1424 = vmax.xlane.f32.xlu0 %v1423
    %v1425 = vpop.xlane.xlu0 %1424
    %vm1426 = vcmp.eq.f32.partialorder %v1423, %v1425
    %v1427 = vsel %vm1426, %v1422, -inf
    %1428 = vmax.xlane.f32.xlu0 %v1427
    %v1429 = vpop.xlane.xlu0 %1428
    %v1430 = vcvt.f32.s32 %v1429
    %v1431 = vcvt.f32.s32 %v1425
    %v1432 = vshll.u32 %v1431, 16
    %v1433 = vadd.s32 %v1432, %v1430
    %v1434 = vand.u32 %v1366, 65535
    %v1435 = vshra.s32 %v1366, 16
    %v1436 = vcvt.s32.f32 %v1434
    %v1437 = vcvt.s32.f32 %v1435
    %1438 = vmax.xlane.f32.xlu0 %v1437
    %v1439 = vpop.xlane.xlu0 %1438
    %vm1440 = vcmp.eq.f32.partialorder %v1437, %v1439
    %v1441 = vsel %vm1440, %v1436, -inf
    %1442 = vmax.xlane.f32.xlu0 %v1441
    %v1443 = vpop.xlane.xlu0 %1442
    %v1444 = vcvt.f32.s32 %v1443
    %v1445 = vcvt.f32.s32 %v1439
    %v1446 = vshll.u32 %v1445, 16
    %v1447 = vadd.s32 %v1446, %v1444
    %v1448 = vand.u32 %v1367, 65535
    %v1449 = vshra.s32 %v1367, 16
    %v1450 = vcvt.s32.f32 %v1448
    %v1451 = vcvt.s32.f32 %v1449
    %1452 = vmax.xlane.f32.xlu0 %v1451
    %v1453 = vpop.xlane.xlu0 %1452
    %vm1454 = vcmp.eq.f32.partialorder %v1451, %v1453
    %v1455 = vsel %vm1454, %v1450, -inf
    %1456 = vmax.xlane.f32.xlu0 %v1455
    %v1457 = vpop.xlane.xlu0 %1456
    %v1458 = vcvt.f32.s32 %v1457
    %v1459 = vcvt.f32.s32 %v1453
    %v1460 = vshll.u32 %v1459, 16
    %v1461 = vadd.s32 %v1460, %v1458
    %v1462 = vand.u32 %v1368, 65535
    %v1463 = vshra.s32 %v1368, 16
    %v1464 = vcvt.s32.f32 %v1462
    %v1465 = vcvt.s32.f32 %v1463
    %1466 = vmax.xlane.f32.xlu0 %v1465
    %v1467 = vpop.xlane.xlu0 %1466
    %vm1468 = vcmp.eq.f32.partialorder %v1465, %v1467
    %v1469 = vsel %vm1468, %v1464, -inf
    %1470 = vmax.xlane.f32.xlu0 %v1469
    %v1471 = vpop.xlane.xlu0 %1470
    %v1472 = vcvt.f32.s32 %v1471
    %v1473 = vcvt.f32.s32 %v1467
    %v1474 = vshll.u32 %v1473, 16
    %v1475 = vadd.s32 %v1474, %v1472
    %v1476 = vand.u32 %v1369, 65535
    %v1477 = vshra.s32 %v1369, 16
    %v1478 = vcvt.s32.f32 %v1476
    %v1479 = vcvt.s32.f32 %v1477
    %1480 = vmax.xlane.f32.xlu0 %v1479
    %v1481 = vpop.xlane.xlu0 %1480
    %vm1482 = vcmp.eq.f32.partialorder %v1479, %v1481
    %v1483 = vsel %vm1482, %v1478, -inf
    %1484 = vmax.xlane.f32.xlu0 %v1483
    %v1485 = vpop.xlane.xlu0 %1484
    %v1486 = vcvt.f32.s32 %v1485
    %v1487 = vcvt.f32.s32 %v1481
    %v1488 = vshll.u32 %v1487, 16
    %v1489 = vadd.s32 %v1488, %v1486
    %v1490 = vand.u32 %v1370, 65535
    %v1491 = vshra.s32 %v1370, 16
    %v1492 = vcvt.s32.f32 %v1490
    %v1493 = vcvt.s32.f32 %v1491
    %1494 = vmax.xlane.f32.xlu0 %v1493
    %v1495 = vpop.xlane.xlu0 %1494
    %vm1496 = vcmp.eq.f32.partialorder %v1493, %v1495
    %v1497 = vsel %vm1496, %v1492, -inf
    %1498 = vmax.xlane.f32.xlu0 %v1497
    %v1499 = vpop.xlane.xlu0 %1498
    %v1500 = vcvt.f32.s32 %v1499
    %v1501 = vcvt.f32.s32 %v1495
    %v1502 = vshll.u32 %v1501, 16
    %v1503 = vadd.s32 %v1502, %v1500
    %v1504 = vand.u32 %v1371, 65535
    %v1505 = vshra.s32 %v1371, 16
    %v1506 = vcvt.s32.f32 %v1504
    %v1507 = vcvt.s32.f32 %v1505
    %1508 = vmax.xlane.f32.xlu0 %v1507
    %v1509 = vpop.xlane.xlu0 %1508
    %vm1510 = vcmp.eq.f32.partialorder %v1507, %v1509
    %v1511 = vsel %vm1510, %v1506, -inf
    %1512 = vmax.xlane.f32.xlu0 %v1511
    %v1513 = vpop.xlane.xlu0 %1512
    %v1514 = vcvt.f32.s32 %v1513
    %v1515 = vcvt.f32.s32 %v1509
    %v1516 = vshll.u32 %v1515, 16
    %v1517 = vadd.s32 %v1516, %v1514
    %v1518 = vand.u32 %v1372, 65535
    %v1519 = vshra.s32 %v1372, 16
    %v1520 = vcvt.s32.f32 %v1518
    %v1521 = vcvt.s32.f32 %v1519
    %1522 = vmax.xlane.f32.xlu0 %v1521
    %v1523 = vpop.xlane.xlu0 %1522
    %vm1524 = vcmp.eq.f32.partialorder %v1521, %v1523
    %v1525 = vsel %vm1524, %v1520, -inf
    %1526 = vmax.xlane.f32.xlu0 %v1525
    %v1527 = vpop.xlane.xlu0 %1526
    %v1528 = vcvt.f32.s32 %v1527
    %v1529 = vcvt.f32.s32 %v1523
    %v1530 = vshll.u32 %v1529, 16
    %v1531 = vadd.s32 %v1530, %v1528
    %v1532 = vand.u32 %v1373, 65535
    %v1533 = vshra.s32 %v1373, 16
    %v1534 = vcvt.s32.f32 %v1532
    %v1535 = vcvt.s32.f32 %v1533
    %1536 = vmax.xlane.f32.xlu0 %v1535
    %v1537 = vpop.xlane.xlu0 %1536
    %vm1538 = vcmp.eq.f32.partialorder %v1535, %v1537
    %v1539 = vsel %vm1538, %v1534, -inf
    %1540 = vmax.xlane.f32.xlu0 %v1539
    %v1541 = vpop.xlane.xlu0 %1540
    %v1542 = vcvt.f32.s32 %v1541
    %v1543 = vcvt.f32.s32 %v1537
    %v1544 = vshll.u32 %v1543, 16
    %v1545 = vadd.s32 %v1544, %v1542
    %v1546 = vand.u32 %v1374, 65535
    %v1547 = vshra.s32 %v1374, 16
    %v1548 = vcvt.s32.f32 %v1546
    %v1549 = vcvt.s32.f32 %v1547
    %1550 = vmax.xlane.f32.xlu0 %v1549
    %v1551 = vpop.xlane.xlu0 %1550
    %vm1552 = vcmp.eq.f32.partialorder %v1549, %v1551
    %v1553 = vsel %vm1552, %v1548, -inf
    %1554 = vmax.xlane.f32.xlu0 %v1553
    %v1555 = vpop.xlane.xlu0 %1554
    %v1556 = vcvt.f32.s32 %v1555
    %v1557 = vcvt.f32.s32 %v1551
    %v1558 = vshll.u32 %v1557, 16
    %v1559 = vadd.s32 %v1558, %v1556
    %v1560 = vand.u32 %v1375, 65535
    %v1561 = vshra.s32 %v1375, 16
    %v1562 = vcvt.s32.f32 %v1560
    %v1563 = vcvt.s32.f32 %v1561
    %1564 = vmax.xlane.f32.xlu0 %v1563
    %v1565 = vpop.xlane.xlu0 %1564
    %vm1566 = vcmp.eq.f32.partialorder %v1563, %v1565
    %v1567 = vsel %vm1566, %v1562, -inf
    %1568 = vmax.xlane.f32.xlu0 %v1567
    %v1569 = vpop.xlane.xlu0 %1568
    %v1570 = vcvt.f32.s32 %v1569
    %v1571 = vcvt.f32.s32 %v1565
    %v1572 = vshll.u32 %v1571, 16
    %v1573 = vadd.s32 %v1572, %v1570
    %v1574 = vand.u32 %v1376, 65535
    %v1575 = vshra.s32 %v1376, 16
    %v1576 = vcvt.s32.f32 %v1574
    %v1577 = vcvt.s32.f32 %v1575
    %1578 = vmax.xlane.f32.xlu0 %v1577
    %v1579 = vpop.xlane.xlu0 %1578
    %vm1580 = vcmp.eq.f32.partialorder %v1577, %v1579
    %v1581 = vsel %vm1580, %v1576, -inf
    %1582 = vmax.xlane.f32.xlu0 %v1581
    %v1583 = vpop.xlane.xlu0 %1582
    %v1584 = vcvt.f32.s32 %v1583
    %v1585 = vcvt.f32.s32 %v1579
    %v1586 = vshll.u32 %v1585, 16
    %v1587 = vadd.s32 %v1586, %v1584
    %v1588 = vand.u32 %v1377, 65535
    %v1589 = vshra.s32 %v1377, 16
    %v1590 = vcvt.s32.f32 %v1588
    %v1591 = vcvt.s32.f32 %v1589
    %1592 = vmax.xlane.f32.xlu0 %v1591
    %v1593 = vpop.xlane.xlu0 %1592
    %vm1594 = vcmp.eq.f32.partialorder %v1591, %v1593
    %v1595 = vsel %vm1594, %v1590, -inf
    %1596 = vmax.xlane.f32.xlu0 %v1595
    %v1597 = vpop.xlane.xlu0 %1596
    %v1598 = vcvt.f32.s32 %v1597
    %v1599 = vcvt.f32.s32 %v1593
    %v1600 = vshll.u32 %v1599, 16
    %v1601 = vadd.s32 %v1600, %v1598
    %vm1602 = vcmp.eq.s32.totalorder %v1362, %v1391
    %vm1603 = vcmp.eq.s32.totalorder %v1363, %v1405
    %vm1604 = vcmp.eq.s32.totalorder %v1364, %v1419
    %vm1605 = vcmp.eq.s32.totalorder %v1365, %v1433
    %vm1606 = vcmp.eq.s32.totalorder %v1366, %v1447
    %vm1607 = vcmp.eq.s32.totalorder %v1367, %v1461
    %vm1608 = vcmp.eq.s32.totalorder %v1368, %v1475
    %vm1609 = vcmp.eq.s32.totalorder %v1369, %v1489
    %vm1610 = vcmp.eq.s32.totalorder %v1370, %v1503
    %vm1611 = vcmp.eq.s32.totalorder %v1371, %v1517
    %vm1612 = vcmp.eq.s32.totalorder %v1372, %v1531
    %vm1613 = vcmp.eq.s32.totalorder %v1373, %v1545
    %vm1614 = vcmp.eq.s32.totalorder %v1374, %v1559
    %vm1615 = vcmp.eq.s32.totalorder %v1375, %v1573
    %vm1616 = vcmp.eq.s32.totalorder %v1376, %v1587
    %vm1617 = vcmp.eq.s32.totalorder %v1377, %v1601
    %v1618 = vsel %vm1602, %v351, 128
    %v1619 = vsel %vm1603, %v351, 128
    %v1620 = vsel %vm1604, %v351, 128
    %v1621 = vsel %vm1605, %v351, 128
    %v1622 = vsel %vm1606, %v351, 128
    %v1623 = vsel %vm1607, %v351, 128
    %v1624 = vsel %vm1608, %v351, 128
    %v1625 = vsel %vm1609, %v351, 128
    %v1626 = vsel %vm1610, %v351, 128
    %v1627 = vsel %vm1611, %v351, 128
    %v1628 = vsel %vm1612, %v351, 128
    %v1629 = vsel %vm1613, %v351, 128
    %v1630 = vsel %vm1614, %v351, 128
    %v1631 = vsel %vm1615, %v351, 128
    %v1632 = vsel %vm1616, %v351, 128
    %v1633 = vsel %vm1617, %v351, 128
    %v1634 = vand.u32 %v1618, 65535
    %v1635 = vshra.s32 %v1618, 16
    %v1636 = vcvt.s32.f32 %v1634
    %v1637 = vcvt.s32.f32 %v1635
    %1638 = vmin.xlane.f32.xlu0 %v1637
    %v1639 = vpop.xlane.xlu0 %1638
    %vm1640 = vcmp.eq.f32.partialorder %v1637, %v1639
    %v1641 = vsel %vm1640, %v1636, inf
    %1642 = vmin.xlane.f32.xlu0 %v1641
    %v1643 = vpop.xlane.xlu0 %1642
    %v1644 = vcvt.f32.s32 %v1643
    %v1645 = vcvt.f32.s32 %v1639
    %v1646 = vshll.u32 %v1645, 16
    %v1647 = vadd.s32 %v1646, %v1644
    %v1648 = vand.u32 %v1619, 65535
    %v1649 = vshra.s32 %v1619, 16
    %v1650 = vcvt.s32.f32 %v1648
    %v1651 = vcvt.s32.f32 %v1649
    %1652 = vmin.xlane.f32.xlu0 %v1651
    %v1653 = vpop.xlane.xlu0 %1652
    %vm1654 = vcmp.eq.f32.partialorder %v1651, %v1653
    %v1655 = vsel %vm1654, %v1650, inf
    %1656 = vmin.xlane.f32.xlu0 %v1655
    %v1657 = vpop.xlane.xlu0 %1656
    %v1658 = vcvt.f32.s32 %v1657
    %v1659 = vcvt.f32.s32 %v1653
    %v1660 = vshll.u32 %v1659, 16
    %v1661 = vadd.s32 %v1660, %v1658
    %v1662 = vand.u32 %v1620, 65535
    %v1663 = vshra.s32 %v1620, 16
    %v1664 = vcvt.s32.f32 %v1662
    %v1665 = vcvt.s32.f32 %v1663
    %1666 = vmin.xlane.f32.xlu0 %v1665
    %v1667 = vpop.xlane.xlu0 %1666
    %vm1668 = vcmp.eq.f32.partialorder %v1665, %v1667
    %v1669 = vsel %vm1668, %v1664, inf
    %1670 = vmin.xlane.f32.xlu0 %v1669
    %v1671 = vpop.xlane.xlu0 %1670
    %v1672 = vcvt.f32.s32 %v1671
    %v1673 = vcvt.f32.s32 %v1667
    %v1674 = vshll.u32 %v1673, 16
    %v1675 = vadd.s32 %v1674, %v1672
    %v1676 = vand.u32 %v1621, 65535
    %v1677 = vshra.s32 %v1621, 16
    %v1678 = vcvt.s32.f32 %v1676
    %v1679 = vcvt.s32.f32 %v1677
    %1680 = vmin.xlane.f32.xlu0 %v1679
    %v1681 = vpop.xlane.xlu0 %1680
    %vm1682 = vcmp.eq.f32.partialorder %v1679, %v1681
    %v1683 = vsel %vm1682, %v1678, inf
    %1684 = vmin.xlane.f32.xlu0 %v1683
    %v1685 = vpop.xlane.xlu0 %1684
    %v1686 = vcvt.f32.s32 %v1685
    %v1687 = vcvt.f32.s32 %v1681
    %v1688 = vshll.u32 %v1687, 16
    %v1689 = vadd.s32 %v1688, %v1686
    %v1690 = vand.u32 %v1622, 65535
    %v1691 = vshra.s32 %v1622, 16
    %v1692 = vcvt.s32.f32 %v1690
    %v1693 = vcvt.s32.f32 %v1691
    %1694 = vmin.xlane.f32.xlu0 %v1693
    %v1695 = vpop.xlane.xlu0 %1694
    %vm1696 = vcmp.eq.f32.partialorder %v1693, %v1695
    %v1697 = vsel %vm1696, %v1692, inf
    %1698 = vmin.xlane.f32.xlu0 %v1697
    %v1699 = vpop.xlane.xlu0 %1698
    %v1700 = vcvt.f32.s32 %v1699
    %v1701 = vcvt.f32.s32 %v1695
    %v1702 = vshll.u32 %v1701, 16
    %v1703 = vadd.s32 %v1702, %v1700
    %v1704 = vand.u32 %v1623, 65535
    %v1705 = vshra.s32 %v1623, 16
    %v1706 = vcvt.s32.f32 %v1704
    %v1707 = vcvt.s32.f32 %v1705
    %1708 = vmin.xlane.f32.xlu0 %v1707
    %v1709 = vpop.xlane.xlu0 %1708
    %vm1710 = vcmp.eq.f32.partialorder %v1707, %v1709
    %v1711 = vsel %vm1710, %v1706, inf
    %1712 = vmin.xlane.f32.xlu0 %v1711
    %v1713 = vpop.xlane.xlu0 %1712
    %v1714 = vcvt.f32.s32 %v1713
    %v1715 = vcvt.f32.s32 %v1709
    %v1716 = vshll.u32 %v1715, 16
    %v1717 = vadd.s32 %v1716, %v1714
    %v1718 = vand.u32 %v1624, 65535
    %v1719 = vshra.s32 %v1624, 16
    %v1720 = vcvt.s32.f32 %v1718
    %v1721 = vcvt.s32.f32 %v1719
    %1722 = vmin.xlane.f32.xlu0 %v1721
    %v1723 = vpop.xlane.xlu0 %1722
    %vm1724 = vcmp.eq.f32.partialorder %v1721, %v1723
    %v1725 = vsel %vm1724, %v1720, inf
    %1726 = vmin.xlane.f32.xlu0 %v1725
    %v1727 = vpop.xlane.xlu0 %1726
    %v1728 = vcvt.f32.s32 %v1727
    %v1729 = vcvt.f32.s32 %v1723
    %v1730 = vshll.u32 %v1729, 16
    %v1731 = vadd.s32 %v1730, %v1728
    %v1732 = vand.u32 %v1625, 65535
    %v1733 = vshra.s32 %v1625, 16
    %v1734 = vcvt.s32.f32 %v1732
    %v1735 = vcvt.s32.f32 %v1733
    %1736 = vmin.xlane.f32.xlu0 %v1735
    %v1737 = vpop.xlane.xlu0 %1736
    %vm1738 = vcmp.eq.f32.partialorder %v1735, %v1737
    %v1739 = vsel %vm1738, %v1734, inf
    %1740 = vmin.xlane.f32.xlu0 %v1739
    %v1741 = vpop.xlane.xlu0 %1740
    %v1742 = vcvt.f32.s32 %v1741
    %v1743 = vcvt.f32.s32 %v1737
    %v1744 = vshll.u32 %v1743, 16
    %v1745 = vadd.s32 %v1744, %v1742
    %v1746 = vand.u32 %v1626, 65535
    %v1747 = vshra.s32 %v1626, 16
    %v1748 = vcvt.s32.f32 %v1746
    %v1749 = vcvt.s32.f32 %v1747
    %1750 = vmin.xlane.f32.xlu0 %v1749
    %v1751 = vpop.xlane.xlu0 %1750
    %vm1752 = vcmp.eq.f32.partialorder %v1749, %v1751
    %v1753 = vsel %vm1752, %v1748, inf
    %1754 = vmin.xlane.f32.xlu0 %v1753
    %v1755 = vpop.xlane.xlu0 %1754
    %v1756 = vcvt.f32.s32 %v1755
    %v1757 = vcvt.f32.s32 %v1751
    %v1758 = vshll.u32 %v1757, 16
    %v1759 = vadd.s32 %v1758, %v1756
    %v1760 = vand.u32 %v1627, 65535
    %v1761 = vshra.s32 %v1627, 16
    %v1762 = vcvt.s32.f32 %v1760
    %v1763 = vcvt.s32.f32 %v1761
    %1764 = vmin.xlane.f32.xlu0 %v1763
    %v1765 = vpop.xlane.xlu0 %1764
    %vm1766 = vcmp.eq.f32.partialorder %v1763, %v1765
    %v1767 = vsel %vm1766, %v1762, inf
    %1768 = vmin.xlane.f32.xlu0 %v1767
    %v1769 = vpop.xlane.xlu0 %1768
    %v1770 = vcvt.f32.s32 %v1769
    %v1771 = vcvt.f32.s32 %v1765
    %v1772 = vshll.u32 %v1771, 16
    %v1773 = vadd.s32 %v1772, %v1770
    %v1774 = vand.u32 %v1628, 65535
    %v1775 = vshra.s32 %v1628, 16
    %v1776 = vcvt.s32.f32 %v1774
    %v1777 = vcvt.s32.f32 %v1775
    %1778 = vmin.xlane.f32.xlu0 %v1777
    %v1779 = vpop.xlane.xlu0 %1778
    %vm1780 = vcmp.eq.f32.partialorder %v1777, %v1779
    %v1781 = vsel %vm1780, %v1776, inf
    %1782 = vmin.xlane.f32.xlu0 %v1781
    %v1783 = vpop.xlane.xlu0 %1782
    %v1784 = vcvt.f32.s32 %v1783
    %v1785 = vcvt.f32.s32 %v1779
    %v1786 = vshll.u32 %v1785, 16
    %v1787 = vadd.s32 %v1786, %v1784
    %v1788 = vand.u32 %v1629, 65535
    %v1789 = vshra.s32 %v1629, 16
    %v1790 = vcvt.s32.f32 %v1788
    %v1791 = vcvt.s32.f32 %v1789
    %1792 = vmin.xlane.f32.xlu0 %v1791
    %v1793 = vpop.xlane.xlu0 %1792
    %vm1794 = vcmp.eq.f32.partialorder %v1791, %v1793
    %v1795 = vsel %vm1794, %v1790, inf
    %1796 = vmin.xlane.f32.xlu0 %v1795
    %v1797 = vpop.xlane.xlu0 %1796
    %v1798 = vcvt.f32.s32 %v1797
    %v1799 = vcvt.f32.s32 %v1793
    %v1800 = vshll.u32 %v1799, 16
    %v1801 = vadd.s32 %v1800, %v1798
    %v1802 = vand.u32 %v1630, 65535
    %v1803 = vshra.s32 %v1630, 16
    %v1804 = vcvt.s32.f32 %v1802
    %v1805 = vcvt.s32.f32 %v1803
    %1806 = vmin.xlane.f32.xlu0 %v1805
    %v1807 = vpop.xlane.xlu0 %1806
    %vm1808 = vcmp.eq.f32.partialorder %v1805, %v1807
    %v1809 = vsel %vm1808, %v1804, inf
    %1810 = vmin.xlane.f32.xlu0 %v1809
    %v1811 = vpop.xlane.xlu0 %1810
    %v1812 = vcvt.f32.s32 %v1811
    %v1813 = vcvt.f32.s32 %v1807
    %v1814 = vshll.u32 %v1813, 16
    %v1815 = vadd.s32 %v1814, %v1812
    %v1816 = vand.u32 %v1631, 65535
    %v1817 = vshra.s32 %v1631, 16
    %v1818 = vcvt.s32.f32 %v1816
    %v1819 = vcvt.s32.f32 %v1817
    %1820 = vmin.xlane.f32.xlu0 %v1819
    %v1821 = vpop.xlane.xlu0 %1820
    %vm1822 = vcmp.eq.f32.partialorder %v1819, %v1821
    %v1823 = vsel %vm1822, %v1818, inf
    %1824 = vmin.xlane.f32.xlu0 %v1823
    %v1825 = vpop.xlane.xlu0 %1824
    %v1826 = vcvt.f32.s32 %v1825
    %v1827 = vcvt.f32.s32 %v1821
    %v1828 = vshll.u32 %v1827, 16
    %v1829 = vadd.s32 %v1828, %v1826
    %v1830 = vand.u32 %v1632, 65535
    %v1831 = vshra.s32 %v1632, 16
    %v1832 = vcvt.s32.f32 %v1830
    %v1833 = vcvt.s32.f32 %v1831
    %1834 = vmin.xlane.f32.xlu0 %v1833
    %v1835 = vpop.xlane.xlu0 %1834
    %vm1836 = vcmp.eq.f32.partialorder %v1833, %v1835
    %v1837 = vsel %vm1836, %v1832, inf
    %1838 = vmin.xlane.f32.xlu0 %v1837
    %v1839 = vpop.xlane.xlu0 %1838
    %v1840 = vcvt.f32.s32 %v1839
    %v1841 = vcvt.f32.s32 %v1835
    %v1842 = vshll.u32 %v1841, 16
    %v1843 = vadd.s32 %v1842, %v1840
    %v1844 = vand.u32 %v1633, 65535
    %v1845 = vshra.s32 %v1633, 16
    %v1846 = vcvt.s32.f32 %v1844
    %v1847 = vcvt.s32.f32 %v1845
    %1848 = vmin.xlane.f32.xlu0 %v1847
    %v1849 = vpop.xlane.xlu0 %1848
    %vm1850 = vcmp.eq.f32.partialorder %v1847, %v1849
    %v1851 = vsel %vm1850, %v1846, inf
    %1852 = vmin.xlane.f32.xlu0 %v1851
    %v1853 = vpop.xlane.xlu0 %1852
    %v1854 = vcvt.f32.s32 %v1853
    %v1855 = vcvt.f32.s32 %v1849
    %v1856 = vshll.u32 %v1855, 16
    %v1857 = vadd.s32 %v1856, %v1854
    %vm1858 = vcmp.eq.s32.totalorder %v351, 2
    %v1859 = vsel %vm1858, %v1647, %v1346
    %v1860 = vsel %vm1858, %v1661, %v1347
    %v1861 = vsel %vm1858, %v1675, %v1348
    %v1862 = vsel %vm1858, %v1689, %v1349
    %v1863 = vsel %vm1858, %v1703, %v1350
    %v1864 = vsel %vm1858, %v1717, %v1351
    %v1865 = vsel %vm1858, %v1731, %v1352
    %v1866 = vsel %vm1858, %v1745, %v1353
    %v1867 = vsel %vm1858, %v1759, %v1354
    %v1868 = vsel %vm1858, %v1773, %v1355
    %v1869 = vsel %vm1858, %v1787, %v1356
    %v1870 = vsel %vm1858, %v1801, %v1357
    %v1871 = vsel %vm1858, %v1815, %v1358
    %v1872 = vsel %vm1858, %v1829, %v1359
    %v1873 = vsel %vm1858, %v1843, %v1360
    %v1874 = vsel %vm1858, %v1857, %v1361
    %v1875 = vsel %vm1602, 2147483648, %v1362
    %v1876 = vsel %vm1603, 2147483648, %v1363
    %v1877 = vsel %vm1604, 2147483648, %v1364
    %v1878 = vsel %vm1605, 2147483648, %v1365
    %v1879 = vsel %vm1606, 2147483648, %v1366
    %v1880 = vsel %vm1607, 2147483648, %v1367
    %v1881 = vsel %vm1608, 2147483648, %v1368
    %v1882 = vsel %vm1609, 2147483648, %v1369
    %v1883 = vsel %vm1610, 2147483648, %v1370
    %v1884 = vsel %vm1611, 2147483648, %v1371
    %v1885 = vsel %vm1612, 2147483648, %v1372
    %v1886 = vsel %vm1613, 2147483648, %v1373
    %v1887 = vsel %vm1614, 2147483648, %v1374
    %v1888 = vsel %vm1615, 2147483648, %v1375
    %v1889 = vsel %vm1616, 2147483648, %v1376
    %v1890 = vsel %vm1617, 2147483648, %v1377
    %v1891 = vand.u32 %v1875, 65535
    %v1892 = vshra.s32 %v1875, 16
    %v1893 = vcvt.s32.f32 %v1891
    %v1894 = vcvt.s32.f32 %v1892
    %1895 = vmax.xlane.f32.xlu0 %v1894
    %v1896 = vpop.xlane.xlu0 %1895
    %vm1897 = vcmp.eq.f32.partialorder %v1894, %v1896
    %v1898 = vsel %vm1897, %v1893, -inf
    %1899 = vmax.xlane.f32.xlu0 %v1898
    %v1900 = vpop.xlane.xlu0 %1899
    %v1901 = vcvt.f32.s32 %v1900
    %v1902 = vcvt.f32.s32 %v1896
    %v1903 = vshll.u32 %v1902, 16
    %v1904 = vadd.s32 %v1903, %v1901
    %v1905 = vand.u32 %v1876, 65535
    %v1906 = vshra.s32 %v1876, 16
    %v1907 = vcvt.s32.f32 %v1905
    %v1908 = vcvt.s32.f32 %v1906
    %1909 = vmax.xlane.f32.xlu0 %v1908
    %v1910 = vpop.xlane.xlu0 %1909
    %vm1911 = vcmp.eq.f32.partialorder %v1908, %v1910
    %v1912 = vsel %vm1911, %v1907, -inf
    %1913 = vmax.xlane.f32.xlu0 %v1912
    %v1914 = vpop.xlane.xlu0 %1913
    %v1915 = vcvt.f32.s32 %v1914
    %v1916 = vcvt.f32.s32 %v1910
    %v1917 = vshll.u32 %v1916, 16
    %v1918 = vadd.s32 %v1917, %v1915
    %v1919 = vand.u32 %v1877, 65535
    %v1920 = vshra.s32 %v1877, 16
    %v1921 = vcvt.s32.f32 %v1919
    %v1922 = vcvt.s32.f32 %v1920
    %1923 = vmax.xlane.f32.xlu0 %v1922
    %v1924 = vpop.xlane.xlu0 %1923
    %vm1925 = vcmp.eq.f32.partialorder %v1922, %v1924
    %v1926 = vsel %vm1925, %v1921, -inf
    %1927 = vmax.xlane.f32.xlu0 %v1926
    %v1928 = vpop.xlane.xlu0 %1927
    %v1929 = vcvt.f32.s32 %v1928
    %v1930 = vcvt.f32.s32 %v1924
    %v1931 = vshll.u32 %v1930, 16
    %v1932 = vadd.s32 %v1931, %v1929
    %v1933 = vand.u32 %v1878, 65535
    %v1934 = vshra.s32 %v1878, 16
    %v1935 = vcvt.s32.f32 %v1933
    %v1936 = vcvt.s32.f32 %v1934
    %1937 = vmax.xlane.f32.xlu0 %v1936
    %v1938 = vpop.xlane.xlu0 %1937
    %vm1939 = vcmp.eq.f32.partialorder %v1936, %v1938
    %v1940 = vsel %vm1939, %v1935, -inf
    %1941 = vmax.xlane.f32.xlu0 %v1940
    %v1942 = vpop.xlane.xlu0 %1941
    %v1943 = vcvt.f32.s32 %v1942
    %v1944 = vcvt.f32.s32 %v1938
    %v1945 = vshll.u32 %v1944, 16
    %v1946 = vadd.s32 %v1945, %v1943
    %v1947 = vand.u32 %v1879, 65535
    %v1948 = vshra.s32 %v1879, 16
    %v1949 = vcvt.s32.f32 %v1947
    %v1950 = vcvt.s32.f32 %v1948
    %1951 = vmax.xlane.f32.xlu0 %v1950
    %v1952 = vpop.xlane.xlu0 %1951
    %vm1953 = vcmp.eq.f32.partialorder %v1950, %v1952
    %v1954 = vsel %vm1953, %v1949, -inf
    %1955 = vmax.xlane.f32.xlu0 %v1954
    %v1956 = vpop.xlane.xlu0 %1955
    %v1957 = vcvt.f32.s32 %v1956
    %v1958 = vcvt.f32.s32 %v1952
    %v1959 = vshll.u32 %v1958, 16
    %v1960 = vadd.s32 %v1959, %v1957
    %v1961 = vand.u32 %v1880, 65535
    %v1962 = vshra.s32 %v1880, 16
    %v1963 = vcvt.s32.f32 %v1961
    %v1964 = vcvt.s32.f32 %v1962
    %1965 = vmax.xlane.f32.xlu0 %v1964
    %v1966 = vpop.xlane.xlu0 %1965
    %vm1967 = vcmp.eq.f32.partialorder %v1964, %v1966
    %v1968 = vsel %vm1967, %v1963, -inf
    %1969 = vmax.xlane.f32.xlu0 %v1968
    %v1970 = vpop.xlane.xlu0 %1969
    %v1971 = vcvt.f32.s32 %v1970
    %v1972 = vcvt.f32.s32 %v1966
    %v1973 = vshll.u32 %v1972, 16
    %v1974 = vadd.s32 %v1973, %v1971
    %v1975 = vand.u32 %v1881, 65535
    %v1976 = vshra.s32 %v1881, 16
    %v1977 = vcvt.s32.f32 %v1975
    %v1978 = vcvt.s32.f32 %v1976
    %1979 = vmax.xlane.f32.xlu0 %v1978
    %v1980 = vpop.xlane.xlu0 %1979
    %vm1981 = vcmp.eq.f32.partialorder %v1978, %v1980
    %v1982 = vsel %vm1981, %v1977, -inf
    %1983 = vmax.xlane.f32.xlu0 %v1982
    %v1984 = vpop.xlane.xlu0 %1983
    %v1985 = vcvt.f32.s32 %v1984
    %v1986 = vcvt.f32.s32 %v1980
    %v1987 = vshll.u32 %v1986, 16
    %v1988 = vadd.s32 %v1987, %v1985
    %v1989 = vand.u32 %v1882, 65535
    %v1990 = vshra.s32 %v1882, 16
    %v1991 = vcvt.s32.f32 %v1989
    %v1992 = vcvt.s32.f32 %v1990
    %1993 = vmax.xlane.f32.xlu0 %v1992
    %v1994 = vpop.xlane.xlu0 %1993
    %vm1995 = vcmp.eq.f32.partialorder %v1992, %v1994
    %v1996 = vsel %vm1995, %v1991, -inf
    %1997 = vmax.xlane.f32.xlu0 %v1996
    %v1998 = vpop.xlane.xlu0 %1997
    %v1999 = vcvt.f32.s32 %v1998
    %v2000 = vcvt.f32.s32 %v1994
    %v2001 = vshll.u32 %v2000, 16
    %v2002 = vadd.s32 %v2001, %v1999
    %v2003 = vand.u32 %v1883, 65535
    %v2004 = vshra.s32 %v1883, 16
    %v2005 = vcvt.s32.f32 %v2003
    %v2006 = vcvt.s32.f32 %v2004
    %2007 = vmax.xlane.f32.xlu0 %v2006
    %v2008 = vpop.xlane.xlu0 %2007
    %vm2009 = vcmp.eq.f32.partialorder %v2006, %v2008
    %v2010 = vsel %vm2009, %v2005, -inf
    %2011 = vmax.xlane.f32.xlu0 %v2010
    %v2012 = vpop.xlane.xlu0 %2011
    %v2013 = vcvt.f32.s32 %v2012
    %v2014 = vcvt.f32.s32 %v2008
    %v2015 = vshll.u32 %v2014, 16
    %v2016 = vadd.s32 %v2015, %v2013
    %v2017 = vand.u32 %v1884, 65535
    %v2018 = vshra.s32 %v1884, 16
    %v2019 = vcvt.s32.f32 %v2017
    %v2020 = vcvt.s32.f32 %v2018
    %2021 = vmax.xlane.f32.xlu0 %v2020
    %v2022 = vpop.xlane.xlu0 %2021
    %vm2023 = vcmp.eq.f32.partialorder %v2020, %v2022
    %v2024 = vsel %vm2023, %v2019, -inf
    %2025 = vmax.xlane.f32.xlu0 %v2024
    %v2026 = vpop.xlane.xlu0 %2025
    %v2027 = vcvt.f32.s32 %v2026
    %v2028 = vcvt.f32.s32 %v2022
    %v2029 = vshll.u32 %v2028, 16
    %v2030 = vadd.s32 %v2029, %v2027
    %v2031 = vand.u32 %v1885, 65535
    %v2032 = vshra.s32 %v1885, 16
    %v2033 = vcvt.s32.f32 %v2031
    %v2034 = vcvt.s32.f32 %v2032
    %2035 = vmax.xlane.f32.xlu0 %v2034
    %v2036 = vpop.xlane.xlu0 %2035
    %vm2037 = vcmp.eq.f32.partialorder %v2034, %v2036
    %v2038 = vsel %vm2037, %v2033, -inf
    %2039 = vmax.xlane.f32.xlu0 %v2038
    %v2040 = vpop.xlane.xlu0 %2039
    %v2041 = vcvt.f32.s32 %v2040
    %v2042 = vcvt.f32.s32 %v2036
    %v2043 = vshll.u32 %v2042, 16
    %v2044 = vadd.s32 %v2043, %v2041
    %v2045 = vand.u32 %v1886, 65535
    %v2046 = vshra.s32 %v1886, 16
    %v2047 = vcvt.s32.f32 %v2045
    %v2048 = vcvt.s32.f32 %v2046
    %2049 = vmax.xlane.f32.xlu0 %v2048
    %v2050 = vpop.xlane.xlu0 %2049
    %vm2051 = vcmp.eq.f32.partialorder %v2048, %v2050
    %v2052 = vsel %vm2051, %v2047, -inf
    %2053 = vmax.xlane.f32.xlu0 %v2052
    %v2054 = vpop.xlane.xlu0 %2053
    %v2055 = vcvt.f32.s32 %v2054
    %v2056 = vcvt.f32.s32 %v2050
    %v2057 = vshll.u32 %v2056, 16
    %v2058 = vadd.s32 %v2057, %v2055
    %v2059 = vand.u32 %v1887, 65535
    %v2060 = vshra.s32 %v1887, 16
    %v2061 = vcvt.s32.f32 %v2059
    %v2062 = vcvt.s32.f32 %v2060
    %2063 = vmax.xlane.f32.xlu0 %v2062
    %v2064 = vpop.xlane.xlu0 %2063
    %vm2065 = vcmp.eq.f32.partialorder %v2062, %v2064
    %v2066 = vsel %vm2065, %v2061, -inf
    %2067 = vmax.xlane.f32.xlu0 %v2066
    %v2068 = vpop.xlane.xlu0 %2067
    %v2069 = vcvt.f32.s32 %v2068
    %v2070 = vcvt.f32.s32 %v2064
    %v2071 = vshll.u32 %v2070, 16
    %v2072 = vadd.s32 %v2071, %v2069
    %v2073 = vand.u32 %v1888, 65535
    %v2074 = vshra.s32 %v1888, 16
    %v2075 = vcvt.s32.f32 %v2073
    %v2076 = vcvt.s32.f32 %v2074
    %2077 = vmax.xlane.f32.xlu0 %v2076
    %v2078 = vpop.xlane.xlu0 %2077
    %vm2079 = vcmp.eq.f32.partialorder %v2076, %v2078
    %v2080 = vsel %vm2079, %v2075, -inf
    %2081 = vmax.xlane.f32.xlu0 %v2080
    %v2082 = vpop.xlane.xlu0 %2081
    %v2083 = vcvt.f32.s32 %v2082
    %v2084 = vcvt.f32.s32 %v2078
    %v2085 = vshll.u32 %v2084, 16
    %v2086 = vadd.s32 %v2085, %v2083
    %v2087 = vand.u32 %v1889, 65535
    %v2088 = vshra.s32 %v1889, 16
    %v2089 = vcvt.s32.f32 %v2087
    %v2090 = vcvt.s32.f32 %v2088
    %2091 = vmax.xlane.f32.xlu0 %v2090
    %v2092 = vpop.xlane.xlu0 %2091
    %vm2093 = vcmp.eq.f32.partialorder %v2090, %v2092
    %v2094 = vsel %vm2093, %v2089, -inf
    %2095 = vmax.xlane.f32.xlu0 %v2094
    %v2096 = vpop.xlane.xlu0 %2095
    %v2097 = vcvt.f32.s32 %v2096
    %v2098 = vcvt.f32.s32 %v2092
    %v2099 = vshll.u32 %v2098, 16
    %v2100 = vadd.s32 %v2099, %v2097
    %v2101 = vand.u32 %v1890, 65535
    %v2102 = vshra.s32 %v1890, 16
    %v2103 = vcvt.s32.f32 %v2101
    %v2104 = vcvt.s32.f32 %v2102
    %2105 = vmax.xlane.f32.xlu0 %v2104
    %v2106 = vpop.xlane.xlu0 %2105
    %vm2107 = vcmp.eq.f32.partialorder %v2104, %v2106
    %v2108 = vsel %vm2107, %v2103, -inf
    %2109 = vmax.xlane.f32.xlu0 %v2108
    %v2110 = vpop.xlane.xlu0 %2109
    %v2111 = vcvt.f32.s32 %v2110
    %v2112 = vcvt.f32.s32 %v2106
    %v2113 = vshll.u32 %v2112, 16
    %v2114 = vadd.s32 %v2113, %v2111
    %vm2115 = vcmp.eq.s32.totalorder %v1875, %v1904
    %vm2116 = vcmp.eq.s32.totalorder %v1876, %v1918
    %vm2117 = vcmp.eq.s32.totalorder %v1877, %v1932
    %vm2118 = vcmp.eq.s32.totalorder %v1878, %v1946
    %vm2119 = vcmp.eq.s32.totalorder %v1879, %v1960
    %vm2120 = vcmp.eq.s32.totalorder %v1880, %v1974
    %vm2121 = vcmp.eq.s32.totalorder %v1881, %v1988
    %vm2122 = vcmp.eq.s32.totalorder %v1882, %v2002
    %vm2123 = vcmp.eq.s32.totalorder %v1883, %v2016
    %vm2124 = vcmp.eq.s32.totalorder %v1884, %v2030
    %vm2125 = vcmp.eq.s32.totalorder %v1885, %v2044
    %vm2126 = vcmp.eq.s32.totalorder %v1886, %v2058
    %vm2127 = vcmp.eq.s32.totalorder %v1887, %v2072
    %vm2128 = vcmp.eq.s32.totalorder %v1888, %v2086
    %vm2129 = vcmp.eq.s32.totalorder %v1889, %v2100
    %vm2130 = vcmp.eq.s32.totalorder %v1890, %v2114
    %v2131 = vsel %vm2115, %v351, 128
    %v2132 = vsel %vm2116, %v351, 128
    %v2133 = vsel %vm2117, %v351, 128
    %v2134 = vsel %vm2118, %v351, 128
    %v2135 = vsel %vm2119, %v351, 128
    %v2136 = vsel %vm2120, %v351, 128
    %v2137 = vsel %vm2121, %v351, 128
    %v2138 = vsel %vm2122, %v351, 128
    %v2139 = vsel %vm2123, %v351, 128
    %v2140 = vsel %vm2124, %v351, 128
    %v2141 = vsel %vm2125, %v351, 128
    %v2142 = vsel %vm2126, %v351, 128
    %v2143 = vsel %vm2127, %v351, 128
    %v2144 = vsel %vm2128, %v351, 128
    %v2145 = vsel %vm2129, %v351, 128
    %v2146 = vsel %vm2130, %v351, 128
    %v2147 = vand.u32 %v2131, 65535
    %v2148 = vshra.s32 %v2131, 16
    %v2149 = vcvt.s32.f32 %v2147
    %v2150 = vcvt.s32.f32 %v2148
    %2151 = vmin.xlane.f32.xlu0 %v2150
    %v2152 = vpop.xlane.xlu0 %2151
    %vm2153 = vcmp.eq.f32.partialorder %v2150, %v2152
    %v2154 = vsel %vm2153, %v2149, inf
    %2155 = vmin.xlane.f32.xlu0 %v2154
    %v2156 = vpop.xlane.xlu0 %2155
    %v2157 = vcvt.f32.s32 %v2156
    %v2158 = vcvt.f32.s32 %v2152
    %v2159 = vshll.u32 %v2158, 16
    %v2160 = vadd.s32 %v2159, %v2157
    %v2161 = vand.u32 %v2132, 65535
    %v2162 = vshra.s32 %v2132, 16
    %v2163 = vcvt.s32.f32 %v2161
    %v2164 = vcvt.s32.f32 %v2162
    %2165 = vmin.xlane.f32.xlu0 %v2164
    %v2166 = vpop.xlane.xlu0 %2165
    %vm2167 = vcmp.eq.f32.partialorder %v2164, %v2166
    %v2168 = vsel %vm2167, %v2163, inf
    %2169 = vmin.xlane.f32.xlu0 %v2168
    %v2170 = vpop.xlane.xlu0 %2169
    %v2171 = vcvt.f32.s32 %v2170
    %v2172 = vcvt.f32.s32 %v2166
    %v2173 = vshll.u32 %v2172, 16
    %v2174 = vadd.s32 %v2173, %v2171
    %v2175 = vand.u32 %v2133, 65535
    %v2176 = vshra.s32 %v2133, 16
    %v2177 = vcvt.s32.f32 %v2175
    %v2178 = vcvt.s32.f32 %v2176
    %2179 = vmin.xlane.f32.xlu0 %v2178
    %v2180 = vpop.xlane.xlu0 %2179
    %vm2181 = vcmp.eq.f32.partialorder %v2178, %v2180
    %v2182 = vsel %vm2181, %v2177, inf
    %2183 = vmin.xlane.f32.xlu0 %v2182
    %v2184 = vpop.xlane.xlu0 %2183
    %v2185 = vcvt.f32.s32 %v2184
    %v2186 = vcvt.f32.s32 %v2180
    %v2187 = vshll.u32 %v2186, 16
    %v2188 = vadd.s32 %v2187, %v2185
    %v2189 = vand.u32 %v2134, 65535
    %v2190 = vshra.s32 %v2134, 16
    %v2191 = vcvt.s32.f32 %v2189
    %v2192 = vcvt.s32.f32 %v2190
    %2193 = vmin.xlane.f32.xlu0 %v2192
    %v2194 = vpop.xlane.xlu0 %2193
    %vm2195 = vcmp.eq.f32.partialorder %v2192, %v2194
    %v2196 = vsel %vm2195, %v2191, inf
    %2197 = vmin.xlane.f32.xlu0 %v2196
    %v2198 = vpop.xlane.xlu0 %2197
    %v2199 = vcvt.f32.s32 %v2198
    %v2200 = vcvt.f32.s32 %v2194
    %v2201 = vshll.u32 %v2200, 16
    %v2202 = vadd.s32 %v2201, %v2199
    %v2203 = vand.u32 %v2135, 65535
    %v2204 = vshra.s32 %v2135, 16
    %v2205 = vcvt.s32.f32 %v2203
    %v2206 = vcvt.s32.f32 %v2204
    %2207 = vmin.xlane.f32.xlu0 %v2206
    %v2208 = vpop.xlane.xlu0 %2207
    %vm2209 = vcmp.eq.f32.partialorder %v2206, %v2208
    %v2210 = vsel %vm2209, %v2205, inf
    %2211 = vmin.xlane.f32.xlu0 %v2210
    %v2212 = vpop.xlane.xlu0 %2211
    %v2213 = vcvt.f32.s32 %v2212
    %v2214 = vcvt.f32.s32 %v2208
    %v2215 = vshll.u32 %v2214, 16
    %v2216 = vadd.s32 %v2215, %v2213
    %v2217 = vand.u32 %v2136, 65535
    %v2218 = vshra.s32 %v2136, 16
    %v2219 = vcvt.s32.f32 %v2217
    %v2220 = vcvt.s32.f32 %v2218
    %2221 = vmin.xlane.f32.xlu0 %v2220
    %v2222 = vpop.xlane.xlu0 %2221
    %vm2223 = vcmp.eq.f32.partialorder %v2220, %v2222
    %v2224 = vsel %vm2223, %v2219, inf
    %2225 = vmin.xlane.f32.xlu0 %v2224
    %v2226 = vpop.xlane.xlu0 %2225
    %v2227 = vcvt.f32.s32 %v2226
    %v2228 = vcvt.f32.s32 %v2222
    %v2229 = vshll.u32 %v2228, 16
    %v2230 = vadd.s32 %v2229, %v2227
    %v2231 = vand.u32 %v2137, 65535
    %v2232 = vshra.s32 %v2137, 16
    %v2233 = vcvt.s32.f32 %v2231
    %v2234 = vcvt.s32.f32 %v2232
    %2235 = vmin.xlane.f32.xlu0 %v2234
    %v2236 = vpop.xlane.xlu0 %2235
    %vm2237 = vcmp.eq.f32.partialorder %v2234, %v2236
    %v2238 = vsel %vm2237, %v2233, inf
    %2239 = vmin.xlane.f32.xlu0 %v2238
    %v2240 = vpop.xlane.xlu0 %2239
    %v2241 = vcvt.f32.s32 %v2240
    %v2242 = vcvt.f32.s32 %v2236
    %v2243 = vshll.u32 %v2242, 16
    %v2244 = vadd.s32 %v2243, %v2241
    %v2245 = vand.u32 %v2138, 65535
    %v2246 = vshra.s32 %v2138, 16
    %v2247 = vcvt.s32.f32 %v2245
    %v2248 = vcvt.s32.f32 %v2246
    %2249 = vmin.xlane.f32.xlu0 %v2248
    %v2250 = vpop.xlane.xlu0 %2249
    %vm2251 = vcmp.eq.f32.partialorder %v2248, %v2250
    %v2252 = vsel %vm2251, %v2247, inf
    %2253 = vmin.xlane.f32.xlu0 %v2252
    %v2254 = vpop.xlane.xlu0 %2253
    %v2255 = vcvt.f32.s32 %v2254
    %v2256 = vcvt.f32.s32 %v2250
    %v2257 = vshll.u32 %v2256, 16
    %v2258 = vadd.s32 %v2257, %v2255
    %v2259 = vand.u32 %v2139, 65535
    %v2260 = vshra.s32 %v2139, 16
    %v2261 = vcvt.s32.f32 %v2259
    %v2262 = vcvt.s32.f32 %v2260
    %2263 = vmin.xlane.f32.xlu0 %v2262
    %v2264 = vpop.xlane.xlu0 %2263
    %vm2265 = vcmp.eq.f32.partialorder %v2262, %v2264
    %v2266 = vsel %vm2265, %v2261, inf
    %2267 = vmin.xlane.f32.xlu0 %v2266
    %v2268 = vpop.xlane.xlu0 %2267
    %v2269 = vcvt.f32.s32 %v2268
    %v2270 = vcvt.f32.s32 %v2264
    %v2271 = vshll.u32 %v2270, 16
    %v2272 = vadd.s32 %v2271, %v2269
    %v2273 = vand.u32 %v2140, 65535
    %v2274 = vshra.s32 %v2140, 16
    %v2275 = vcvt.s32.f32 %v2273
    %v2276 = vcvt.s32.f32 %v2274
    %2277 = vmin.xlane.f32.xlu0 %v2276
    %v2278 = vpop.xlane.xlu0 %2277
    %vm2279 = vcmp.eq.f32.partialorder %v2276, %v2278
    %v2280 = vsel %vm2279, %v2275, inf
    %2281 = vmin.xlane.f32.xlu0 %v2280
    %v2282 = vpop.xlane.xlu0 %2281
    %v2283 = vcvt.f32.s32 %v2282
    %v2284 = vcvt.f32.s32 %v2278
    %v2285 = vshll.u32 %v2284, 16
    %v2286 = vadd.s32 %v2285, %v2283
    %v2287 = vand.u32 %v2141, 65535
    %v2288 = vshra.s32 %v2141, 16
    %v2289 = vcvt.s32.f32 %v2287
    %v2290 = vcvt.s32.f32 %v2288
    %2291 = vmin.xlane.f32.xlu0 %v2290
    %v2292 = vpop.xlane.xlu0 %2291
    %vm2293 = vcmp.eq.f32.partialorder %v2290, %v2292
    %v2294 = vsel %vm2293, %v2289, inf
    %2295 = vmin.xlane.f32.xlu0 %v2294
    %v2296 = vpop.xlane.xlu0 %2295
    %v2297 = vcvt.f32.s32 %v2296
    %v2298 = vcvt.f32.s32 %v2292
    %v2299 = vshll.u32 %v2298, 16
    %v2300 = vadd.s32 %v2299, %v2297
    %v2301 = vand.u32 %v2142, 65535
    %v2302 = vshra.s32 %v2142, 16
    %v2303 = vcvt.s32.f32 %v2301
    %v2304 = vcvt.s32.f32 %v2302
    %2305 = vmin.xlane.f32.xlu0 %v2304
    %v2306 = vpop.xlane.xlu0 %2305
    %vm2307 = vcmp.eq.f32.partialorder %v2304, %v2306
    %v2308 = vsel %vm2307, %v2303, inf
    %2309 = vmin.xlane.f32.xlu0 %v2308
    %v2310 = vpop.xlane.xlu0 %2309
    %v2311 = vcvt.f32.s32 %v2310
    %v2312 = vcvt.f32.s32 %v2306
    %v2313 = vshll.u32 %v2312, 16
    %v2314 = vadd.s32 %v2313, %v2311
    %v2315 = vand.u32 %v2143, 65535
    %v2316 = vshra.s32 %v2143, 16
    %v2317 = vcvt.s32.f32 %v2315
    %v2318 = vcvt.s32.f32 %v2316
    %2319 = vmin.xlane.f32.xlu0 %v2318
    %v2320 = vpop.xlane.xlu0 %2319
    %vm2321 = vcmp.eq.f32.partialorder %v2318, %v2320
    %v2322 = vsel %vm2321, %v2317, inf
    %2323 = vmin.xlane.f32.xlu0 %v2322
    %v2324 = vpop.xlane.xlu0 %2323
    %v2325 = vcvt.f32.s32 %v2324
    %v2326 = vcvt.f32.s32 %v2320
    %v2327 = vshll.u32 %v2326, 16
    %v2328 = vadd.s32 %v2327, %v2325
    %v2329 = vand.u32 %v2144, 65535
    %v2330 = vshra.s32 %v2144, 16
    %v2331 = vcvt.s32.f32 %v2329
    %v2332 = vcvt.s32.f32 %v2330
    %2333 = vmin.xlane.f32.xlu0 %v2332
    %v2334 = vpop.xlane.xlu0 %2333
    %vm2335 = vcmp.eq.f32.partialorder %v2332, %v2334
    %v2336 = vsel %vm2335, %v2331, inf
    %2337 = vmin.xlane.f32.xlu0 %v2336
    %v2338 = vpop.xlane.xlu0 %2337
    %v2339 = vcvt.f32.s32 %v2338
    %v2340 = vcvt.f32.s32 %v2334
    %v2341 = vshll.u32 %v2340, 16
    %v2342 = vadd.s32 %v2341, %v2339
    %v2343 = vand.u32 %v2145, 65535
    %v2344 = vshra.s32 %v2145, 16
    %v2345 = vcvt.s32.f32 %v2343
    %v2346 = vcvt.s32.f32 %v2344
    %2347 = vmin.xlane.f32.xlu0 %v2346
    %v2348 = vpop.xlane.xlu0 %2347
    %vm2349 = vcmp.eq.f32.partialorder %v2346, %v2348
    %v2350 = vsel %vm2349, %v2345, inf
    %2351 = vmin.xlane.f32.xlu0 %v2350
    %v2352 = vpop.xlane.xlu0 %2351
    %v2353 = vcvt.f32.s32 %v2352
    %v2354 = vcvt.f32.s32 %v2348
    %v2355 = vshll.u32 %v2354, 16
    %v2356 = vadd.s32 %v2355, %v2353
    %v2357 = vand.u32 %v2146, 65535
    %v2358 = vshra.s32 %v2146, 16
    %v2359 = vcvt.s32.f32 %v2357
    %v2360 = vcvt.s32.f32 %v2358
    %2361 = vmin.xlane.f32.xlu0 %v2360
    %v2362 = vpop.xlane.xlu0 %2361
    %vm2363 = vcmp.eq.f32.partialorder %v2360, %v2362
    %v2364 = vsel %vm2363, %v2359, inf
    %2365 = vmin.xlane.f32.xlu0 %v2364
    %v2366 = vpop.xlane.xlu0 %2365
    %v2367 = vcvt.f32.s32 %v2366
    %v2368 = vcvt.f32.s32 %v2362
    %v2369 = vshll.u32 %v2368, 16
    %v2370 = vadd.s32 %v2369, %v2367
    %vm2371 = vcmp.eq.s32.totalorder %v351, 3
    %v2372 = vsel %vm2371, %v2160, %v1859
    %v2373 = vsel %vm2371, %v2174, %v1860
    %v2374 = vsel %vm2371, %v2188, %v1861
    %v2375 = vsel %vm2371, %v2202, %v1862
    %v2376 = vsel %vm2371, %v2216, %v1863
    %v2377 = vsel %vm2371, %v2230, %v1864
    %v2378 = vsel %vm2371, %v2244, %v1865
    %v2379 = vsel %vm2371, %v2258, %v1866
    %v2380 = vsel %vm2371, %v2272, %v1867
    %v2381 = vsel %vm2371, %v2286, %v1868
    %v2382 = vsel %vm2371, %v2300, %v1869
    %v2383 = vsel %vm2371, %v2314, %v1870
    %v2384 = vsel %vm2371, %v2328, %v1871
    %v2385 = vsel %vm2371, %v2342, %v1872
    %v2386 = vsel %vm2371, %v2356, %v1873
    %v2387 = vsel %vm2371, %v2370, %v1874
    %v2388 = vsel %vm2115, 2147483648, %v1875
    %v2389 = vsel %vm2116, 2147483648, %v1876
    %v2390 = vsel %vm2117, 2147483648, %v1877
    %v2391 = vsel %vm2118, 2147483648, %v1878
    %v2392 = vsel %vm2119, 2147483648, %v1879
    %v2393 = vsel %vm2120, 2147483648, %v1880
    %v2394 = vsel %vm2121, 2147483648, %v1881
    %v2395 = vsel %vm2122, 2147483648, %v1882
    %v2396 = vsel %vm2123, 2147483648, %v1883
    %v2397 = vsel %vm2124, 2147483648, %v1884
    %v2398 = vsel %vm2125, 2147483648, %v1885
    %v2399 = vsel %vm2126, 2147483648, %v1886
    %v2400 = vsel %vm2127, 2147483648, %v1887
    %v2401 = vsel %vm2128, 2147483648, %v1888
    %v2402 = vsel %vm2129, 2147483648, %v1889
    %v2403 = vsel %vm2130, 2147483648, %v1890
    %v2404 = vand.u32 %v2388, 65535
    %v2405 = vshra.s32 %v2388, 16
    %v2406 = vcvt.s32.f32 %v2404
    %v2407 = vcvt.s32.f32 %v2405
    %2408 = vmax.xlane.f32.xlu0 %v2407
    %v2409 = vpop.xlane.xlu0 %2408
    %vm2410 = vcmp.eq.f32.partialorder %v2407, %v2409
    %v2411 = vsel %vm2410, %v2406, -inf
    %2412 = vmax.xlane.f32.xlu0 %v2411
    %v2413 = vpop.xlane.xlu0 %2412
    %v2414 = vcvt.f32.s32 %v2413
    %v2415 = vcvt.f32.s32 %v2409
    %v2416 = vshll.u32 %v2415, 16
    %v2417 = vadd.s32 %v2416, %v2414
    %v2418 = vand.u32 %v2389, 65535
    %v2419 = vshra.s32 %v2389, 16
    %v2420 = vcvt.s32.f32 %v2418
    %v2421 = vcvt.s32.f32 %v2419
    %2422 = vmax.xlane.f32.xlu0 %v2421
    %v2423 = vpop.xlane.xlu0 %2422
    %vm2424 = vcmp.eq.f32.partialorder %v2421, %v2423
    %v2425 = vsel %vm2424, %v2420, -inf
    %2426 = vmax.xlane.f32.xlu0 %v2425
    %v2427 = vpop.xlane.xlu0 %2426
    %v2428 = vcvt.f32.s32 %v2427
    %v2429 = vcvt.f32.s32 %v2423
    %v2430 = vshll.u32 %v2429, 16
    %v2431 = vadd.s32 %v2430, %v2428
    %v2432 = vand.u32 %v2390, 65535
    %v2433 = vshra.s32 %v2390, 16
    %v2434 = vcvt.s32.f32 %v2432
    %v2435 = vcvt.s32.f32 %v2433
    %2436 = vmax.xlane.f32.xlu0 %v2435
    %v2437 = vpop.xlane.xlu0 %2436
    %vm2438 = vcmp.eq.f32.partialorder %v2435, %v2437
    %v2439 = vsel %vm2438, %v2434, -inf
    %2440 = vmax.xlane.f32.xlu0 %v2439
    %v2441 = vpop.xlane.xlu0 %2440
    %v2442 = vcvt.f32.s32 %v2441
    %v2443 = vcvt.f32.s32 %v2437
    %v2444 = vshll.u32 %v2443, 16
    %v2445 = vadd.s32 %v2444, %v2442
    %v2446 = vand.u32 %v2391, 65535
    %v2447 = vshra.s32 %v2391, 16
    %v2448 = vcvt.s32.f32 %v2446
    %v2449 = vcvt.s32.f32 %v2447
    %2450 = vmax.xlane.f32.xlu0 %v2449
    %v2451 = vpop.xlane.xlu0 %2450
    %vm2452 = vcmp.eq.f32.partialorder %v2449, %v2451
    %v2453 = vsel %vm2452, %v2448, -inf
    %2454 = vmax.xlane.f32.xlu0 %v2453
    %v2455 = vpop.xlane.xlu0 %2454
    %v2456 = vcvt.f32.s32 %v2455
    %v2457 = vcvt.f32.s32 %v2451
    %v2458 = vshll.u32 %v2457, 16
    %v2459 = vadd.s32 %v2458, %v2456
    %v2460 = vand.u32 %v2392, 65535
    %v2461 = vshra.s32 %v2392, 16
    %v2462 = vcvt.s32.f32 %v2460
    %v2463 = vcvt.s32.f32 %v2461
    %2464 = vmax.xlane.f32.xlu0 %v2463
    %v2465 = vpop.xlane.xlu0 %2464
    %vm2466 = vcmp.eq.f32.partialorder %v2463, %v2465
    %v2467 = vsel %vm2466, %v2462, -inf
    %2468 = vmax.xlane.f32.xlu0 %v2467
    %v2469 = vpop.xlane.xlu0 %2468
    %v2470 = vcvt.f32.s32 %v2469
    %v2471 = vcvt.f32.s32 %v2465
    %v2472 = vshll.u32 %v2471, 16
    %v2473 = vadd.s32 %v2472, %v2470
    %v2474 = vand.u32 %v2393, 65535
    %v2475 = vshra.s32 %v2393, 16
    %v2476 = vcvt.s32.f32 %v2474
    %v2477 = vcvt.s32.f32 %v2475
    %2478 = vmax.xlane.f32.xlu0 %v2477
    %v2479 = vpop.xlane.xlu0 %2478
    %vm2480 = vcmp.eq.f32.partialorder %v2477, %v2479
    %v2481 = vsel %vm2480, %v2476, -inf
    %2482 = vmax.xlane.f32.xlu0 %v2481
    %v2483 = vpop.xlane.xlu0 %2482
    %v2484 = vcvt.f32.s32 %v2483
    %v2485 = vcvt.f32.s32 %v2479
    %v2486 = vshll.u32 %v2485, 16
    %v2487 = vadd.s32 %v2486, %v2484
    %v2488 = vand.u32 %v2394, 65535
    %v2489 = vshra.s32 %v2394, 16
    %v2490 = vcvt.s32.f32 %v2488
    %v2491 = vcvt.s32.f32 %v2489
    %2492 = vmax.xlane.f32.xlu0 %v2491
    %v2493 = vpop.xlane.xlu0 %2492
    %vm2494 = vcmp.eq.f32.partialorder %v2491, %v2493
    %v2495 = vsel %vm2494, %v2490, -inf
    %2496 = vmax.xlane.f32.xlu0 %v2495
    %v2497 = vpop.xlane.xlu0 %2496
    %v2498 = vcvt.f32.s32 %v2497
    %v2499 = vcvt.f32.s32 %v2493
    %v2500 = vshll.u32 %v2499, 16
    %v2501 = vadd.s32 %v2500, %v2498
    %v2502 = vand.u32 %v2395, 65535
    %v2503 = vshra.s32 %v2395, 16
    %v2504 = vcvt.s32.f32 %v2502
    %v2505 = vcvt.s32.f32 %v2503
    %2506 = vmax.xlane.f32.xlu0 %v2505
    %v2507 = vpop.xlane.xlu0 %2506
    %vm2508 = vcmp.eq.f32.partialorder %v2505, %v2507
    %v2509 = vsel %vm2508, %v2504, -inf
    %2510 = vmax.xlane.f32.xlu0 %v2509
    %v2511 = vpop.xlane.xlu0 %2510
    %v2512 = vcvt.f32.s32 %v2511
    %v2513 = vcvt.f32.s32 %v2507
    %v2514 = vshll.u32 %v2513, 16
    %v2515 = vadd.s32 %v2514, %v2512
    %v2516 = vand.u32 %v2396, 65535
    %v2517 = vshra.s32 %v2396, 16
    %v2518 = vcvt.s32.f32 %v2516
    %v2519 = vcvt.s32.f32 %v2517
    %2520 = vmax.xlane.f32.xlu0 %v2519
    %v2521 = vpop.xlane.xlu0 %2520
    %vm2522 = vcmp.eq.f32.partialorder %v2519, %v2521
    %v2523 = vsel %vm2522, %v2518, -inf
    %2524 = vmax.xlane.f32.xlu0 %v2523
    %v2525 = vpop.xlane.xlu0 %2524
    %v2526 = vcvt.f32.s32 %v2525
    %v2527 = vcvt.f32.s32 %v2521
    %v2528 = vshll.u32 %v2527, 16
    %v2529 = vadd.s32 %v2528, %v2526
    %v2530 = vand.u32 %v2397, 65535
    %v2531 = vshra.s32 %v2397, 16
    %v2532 = vcvt.s32.f32 %v2530
    %v2533 = vcvt.s32.f32 %v2531
    %2534 = vmax.xlane.f32.xlu0 %v2533
    %v2535 = vpop.xlane.xlu0 %2534
    %vm2536 = vcmp.eq.f32.partialorder %v2533, %v2535
    %v2537 = vsel %vm2536, %v2532, -inf
    %2538 = vmax.xlane.f32.xlu0 %v2537
    %v2539 = vpop.xlane.xlu0 %2538
    %v2540 = vcvt.f32.s32 %v2539
    %v2541 = vcvt.f32.s32 %v2535
    %v2542 = vshll.u32 %v2541, 16
    %v2543 = vadd.s32 %v2542, %v2540
    %v2544 = vand.u32 %v2398, 65535
    %v2545 = vshra.s32 %v2398, 16
    %v2546 = vcvt.s32.f32 %v2544
    %v2547 = vcvt.s32.f32 %v2545
    %2548 = vmax.xlane.f32.xlu0 %v2547
    %v2549 = vpop.xlane.xlu0 %2548
    %vm2550 = vcmp.eq.f32.partialorder %v2547, %v2549
    %v2551 = vsel %vm2550, %v2546, -inf
    %2552 = vmax.xlane.f32.xlu0 %v2551
    %v2553 = vpop.xlane.xlu0 %2552
    %v2554 = vcvt.f32.s32 %v2553
    %v2555 = vcvt.f32.s32 %v2549
    %v2556 = vshll.u32 %v2555, 16
    %v2557 = vadd.s32 %v2556, %v2554
    %v2558 = vand.u32 %v2399, 65535
    %v2559 = vshra.s32 %v2399, 16
    %v2560 = vcvt.s32.f32 %v2558
    %v2561 = vcvt.s32.f32 %v2559
    %2562 = vmax.xlane.f32.xlu0 %v2561
    %v2563 = vpop.xlane.xlu0 %2562
    %vm2564 = vcmp.eq.f32.partialorder %v2561, %v2563
    %v2565 = vsel %vm2564, %v2560, -inf
    %2566 = vmax.xlane.f32.xlu0 %v2565
    %v2567 = vpop.xlane.xlu0 %2566
    %v2568 = vcvt.f32.s32 %v2567
    %v2569 = vcvt.f32.s32 %v2563
    %v2570 = vshll.u32 %v2569, 16
    %v2571 = vadd.s32 %v2570, %v2568
    %v2572 = vand.u32 %v2400, 65535
    %v2573 = vshra.s32 %v2400, 16
    %v2574 = vcvt.s32.f32 %v2572
    %v2575 = vcvt.s32.f32 %v2573
    %2576 = vmax.xlane.f32.xlu0 %v2575
    %v2577 = vpop.xlane.xlu0 %2576
    %vm2578 = vcmp.eq.f32.partialorder %v2575, %v2577
    %v2579 = vsel %vm2578, %v2574, -inf
    %2580 = vmax.xlane.f32.xlu0 %v2579
    %v2581 = vpop.xlane.xlu0 %2580
    %v2582 = vcvt.f32.s32 %v2581
    %v2583 = vcvt.f32.s32 %v2577
    %v2584 = vshll.u32 %v2583, 16
    %v2585 = vadd.s32 %v2584, %v2582
    %v2586 = vand.u32 %v2401, 65535
    %v2587 = vshra.s32 %v2401, 16
    %v2588 = vcvt.s32.f32 %v2586
    %v2589 = vcvt.s32.f32 %v2587
    %2590 = vmax.xlane.f32.xlu0 %v2589
    %v2591 = vpop.xlane.xlu0 %2590
    %vm2592 = vcmp.eq.f32.partialorder %v2589, %v2591
    %v2593 = vsel %vm2592, %v2588, -inf
    %2594 = vmax.xlane.f32.xlu0 %v2593
    %v2595 = vpop.xlane.xlu0 %2594
    %v2596 = vcvt.f32.s32 %v2595
    %v2597 = vcvt.f32.s32 %v2591
    %v2598 = vshll.u32 %v2597, 16
    %v2599 = vadd.s32 %v2598, %v2596
    %v2600 = vand.u32 %v2402, 65535
    %v2601 = vshra.s32 %v2402, 16
    %v2602 = vcvt.s32.f32 %v2600
    %v2603 = vcvt.s32.f32 %v2601
    %2604 = vmax.xlane.f32.xlu0 %v2603
    %v2605 = vpop.xlane.xlu0 %2604
    %vm2606 = vcmp.eq.f32.partialorder %v2603, %v2605
    %v2607 = vsel %vm2606, %v2602, -inf
    %2608 = vmax.xlane.f32.xlu0 %v2607
    %v2609 = vpop.xlane.xlu0 %2608
    %v2610 = vcvt.f32.s32 %v2609
    %v2611 = vcvt.f32.s32 %v2605
    %v2612 = vshll.u32 %v2611, 16
    %v2613 = vadd.s32 %v2612, %v2610
    %v2614 = vand.u32 %v2403, 65535
    %v2615 = vshra.s32 %v2403, 16
    %v2616 = vcvt.s32.f32 %v2614
    %v2617 = vcvt.s32.f32 %v2615
    %2618 = vmax.xlane.f32.xlu0 %v2617
    %v2619 = vpop.xlane.xlu0 %2618
    %vm2620 = vcmp.eq.f32.partialorder %v2617, %v2619
    %v2621 = vsel %vm2620, %v2616, -inf
    %2622 = vmax.xlane.f32.xlu0 %v2621
    %v2623 = vpop.xlane.xlu0 %2622
    %v2624 = vcvt.f32.s32 %v2623
    %v2625 = vcvt.f32.s32 %v2619
    %v2626 = vshll.u32 %v2625, 16
    %v2627 = vadd.s32 %v2626, %v2624
    %vm2628 = vcmp.eq.s32.totalorder %v2388, %v2417
    %vm2629 = vcmp.eq.s32.totalorder %v2389, %v2431
    %vm2630 = vcmp.eq.s32.totalorder %v2390, %v2445
    %vm2631 = vcmp.eq.s32.totalorder %v2391, %v2459
    %vm2632 = vcmp.eq.s32.totalorder %v2392, %v2473
    %vm2633 = vcmp.eq.s32.totalorder %v2393, %v2487
    %vm2634 = vcmp.eq.s32.totalorder %v2394, %v2501
    %vm2635 = vcmp.eq.s32.totalorder %v2395, %v2515
    %vm2636 = vcmp.eq.s32.totalorder %v2396, %v2529
    %vm2637 = vcmp.eq.s32.totalorder %v2397, %v2543
    %vm2638 = vcmp.eq.s32.totalorder %v2398, %v2557
    %vm2639 = vcmp.eq.s32.totalorder %v2399, %v2571
    %vm2640 = vcmp.eq.s32.totalorder %v2400, %v2585
    %vm2641 = vcmp.eq.s32.totalorder %v2401, %v2599
    %vm2642 = vcmp.eq.s32.totalorder %v2402, %v2613
    %vm2643 = vcmp.eq.s32.totalorder %v2403, %v2627
    %v2644 = vsel %vm2628, %v351, 128
    %v2645 = vsel %vm2629, %v351, 128
    %v2646 = vsel %vm2630, %v351, 128
    %v2647 = vsel %vm2631, %v351, 128
    %v2648 = vsel %vm2632, %v351, 128
    %v2649 = vsel %vm2633, %v351, 128
    %v2650 = vsel %vm2634, %v351, 128
    %v2651 = vsel %vm2635, %v351, 128
    %v2652 = vsel %vm2636, %v351, 128
    %v2653 = vsel %vm2637, %v351, 128
    %v2654 = vsel %vm2638, %v351, 128
    %v2655 = vsel %vm2639, %v351, 128
    %v2656 = vsel %vm2640, %v351, 128
    %v2657 = vsel %vm2641, %v351, 128
    %v2658 = vsel %vm2642, %v351, 128
    %v2659 = vsel %vm2643, %v351, 128
    %v2660 = vand.u32 %v2644, 65535
    %v2661 = vshra.s32 %v2644, 16
    %v2662 = vcvt.s32.f32 %v2660
    %v2663 = vcvt.s32.f32 %v2661
    %2664 = vmin.xlane.f32.xlu0 %v2663
    %v2665 = vpop.xlane.xlu0 %2664
    %vm2666 = vcmp.eq.f32.partialorder %v2663, %v2665
    %v2667 = vsel %vm2666, %v2662, inf
    %2668 = vmin.xlane.f32.xlu0 %v2667
    %v2669 = vpop.xlane.xlu0 %2668
    %v2670 = vcvt.f32.s32 %v2669
    %v2671 = vcvt.f32.s32 %v2665
    %v2672 = vshll.u32 %v2671, 16
    %v2673 = vadd.s32 %v2672, %v2670
    %v2674 = vand.u32 %v2645, 65535
    %v2675 = vshra.s32 %v2645, 16
    %v2676 = vcvt.s32.f32 %v2674
    %v2677 = vcvt.s32.f32 %v2675
    %2678 = vmin.xlane.f32.xlu0 %v2677
    %v2679 = vpop.xlane.xlu0 %2678
    %vm2680 = vcmp.eq.f32.partialorder %v2677, %v2679
    %v2681 = vsel %vm2680, %v2676, inf
    %2682 = vmin.xlane.f32.xlu0 %v2681
    %v2683 = vpop.xlane.xlu0 %2682
    %v2684 = vcvt.f32.s32 %v2683
    %v2685 = vcvt.f32.s32 %v2679
    %v2686 = vshll.u32 %v2685, 16
    %v2687 = vadd.s32 %v2686, %v2684
    %v2688 = vand.u32 %v2646, 65535
    %v2689 = vshra.s32 %v2646, 16
    %v2690 = vcvt.s32.f32 %v2688
    %v2691 = vcvt.s32.f32 %v2689
    %2692 = vmin.xlane.f32.xlu0 %v2691
    %v2693 = vpop.xlane.xlu0 %2692
    %vm2694 = vcmp.eq.f32.partialorder %v2691, %v2693
    %v2695 = vsel %vm2694, %v2690, inf
    %2696 = vmin.xlane.f32.xlu0 %v2695
    %v2697 = vpop.xlane.xlu0 %2696
    %v2698 = vcvt.f32.s32 %v2697
    %v2699 = vcvt.f32.s32 %v2693
    %v2700 = vshll.u32 %v2699, 16
    %v2701 = vadd.s32 %v2700, %v2698
    %v2702 = vand.u32 %v2647, 65535
    %v2703 = vshra.s32 %v2647, 16
    %v2704 = vcvt.s32.f32 %v2702
    %v2705 = vcvt.s32.f32 %v2703
    %2706 = vmin.xlane.f32.xlu0 %v2705
    %v2707 = vpop.xlane.xlu0 %2706
    %vm2708 = vcmp.eq.f32.partialorder %v2705, %v2707
    %v2709 = vsel %vm2708, %v2704, inf
    %2710 = vmin.xlane.f32.xlu0 %v2709
    %v2711 = vpop.xlane.xlu0 %2710
    %v2712 = vcvt.f32.s32 %v2711
    %v2713 = vcvt.f32.s32 %v2707
    %v2714 = vshll.u32 %v2713, 16
    %v2715 = vadd.s32 %v2714, %v2712
    %v2716 = vand.u32 %v2648, 65535
    %v2717 = vshra.s32 %v2648, 16
    %v2718 = vcvt.s32.f32 %v2716
    %v2719 = vcvt.s32.f32 %v2717
    %2720 = vmin.xlane.f32.xlu0 %v2719
    %v2721 = vpop.xlane.xlu0 %2720
    %vm2722 = vcmp.eq.f32.partialorder %v2719, %v2721
    %v2723 = vsel %vm2722, %v2718, inf
    %2724 = vmin.xlane.f32.xlu0 %v2723
    %v2725 = vpop.xlane.xlu0 %2724
    %v2726 = vcvt.f32.s32 %v2725
    %v2727 = vcvt.f32.s32 %v2721
    %v2728 = vshll.u32 %v2727, 16
    %v2729 = vadd.s32 %v2728, %v2726
    %v2730 = vand.u32 %v2649, 65535
    %v2731 = vshra.s32 %v2649, 16
    %v2732 = vcvt.s32.f32 %v2730
    %v2733 = vcvt.s32.f32 %v2731
    %2734 = vmin.xlane.f32.xlu0 %v2733
    %v2735 = vpop.xlane.xlu0 %2734
    %vm2736 = vcmp.eq.f32.partialorder %v2733, %v2735
    %v2737 = vsel %vm2736, %v2732, inf
    %2738 = vmin.xlane.f32.xlu0 %v2737
    %v2739 = vpop.xlane.xlu0 %2738
    %v2740 = vcvt.f32.s32 %v2739
    %v2741 = vcvt.f32.s32 %v2735
    %v2742 = vshll.u32 %v2741, 16
    %v2743 = vadd.s32 %v2742, %v2740
    %v2744 = vand.u32 %v2650, 65535
    %v2745 = vshra.s32 %v2650, 16
    %v2746 = vcvt.s32.f32 %v2744
    %v2747 = vcvt.s32.f32 %v2745
    %2748 = vmin.xlane.f32.xlu0 %v2747
    %v2749 = vpop.xlane.xlu0 %2748
    %vm2750 = vcmp.eq.f32.partialorder %v2747, %v2749
    %v2751 = vsel %vm2750, %v2746, inf
    %2752 = vmin.xlane.f32.xlu0 %v2751
    %v2753 = vpop.xlane.xlu0 %2752
    %v2754 = vcvt.f32.s32 %v2753
    %v2755 = vcvt.f32.s32 %v2749
    %v2756 = vshll.u32 %v2755, 16
    %v2757 = vadd.s32 %v2756, %v2754
    %v2758 = vand.u32 %v2651, 65535
    %v2759 = vshra.s32 %v2651, 16
    %v2760 = vcvt.s32.f32 %v2758
    %v2761 = vcvt.s32.f32 %v2759
    %2762 = vmin.xlane.f32.xlu0 %v2761
    %v2763 = vpop.xlane.xlu0 %2762
    %vm2764 = vcmp.eq.f32.partialorder %v2761, %v2763
    %v2765 = vsel %vm2764, %v2760, inf
    %2766 = vmin.xlane.f32.xlu0 %v2765
    %v2767 = vpop.xlane.xlu0 %2766
    %v2768 = vcvt.f32.s32 %v2767
    %v2769 = vcvt.f32.s32 %v2763
    %v2770 = vshll.u32 %v2769, 16
    %v2771 = vadd.s32 %v2770, %v2768
    %v2772 = vand.u32 %v2652, 65535
    %v2773 = vshra.s32 %v2652, 16
    %v2774 = vcvt.s32.f32 %v2772
    %v2775 = vcvt.s32.f32 %v2773
    %2776 = vmin.xlane.f32.xlu0 %v2775
    %v2777 = vpop.xlane.xlu0 %2776
    %vm2778 = vcmp.eq.f32.partialorder %v2775, %v2777
    %v2779 = vsel %vm2778, %v2774, inf
    %2780 = vmin.xlane.f32.xlu0 %v2779
    %v2781 = vpop.xlane.xlu0 %2780
    %v2782 = vcvt.f32.s32 %v2781
    %v2783 = vcvt.f32.s32 %v2777
    %v2784 = vshll.u32 %v2783, 16
    %v2785 = vadd.s32 %v2784, %v2782
    %v2786 = vand.u32 %v2653, 65535
    %v2787 = vshra.s32 %v2653, 16
    %v2788 = vcvt.s32.f32 %v2786
    %v2789 = vcvt.s32.f32 %v2787
    %2790 = vmin.xlane.f32.xlu0 %v2789
    %v2791 = vpop.xlane.xlu0 %2790
    %vm2792 = vcmp.eq.f32.partialorder %v2789, %v2791
    %v2793 = vsel %vm2792, %v2788, inf
    %2794 = vmin.xlane.f32.xlu0 %v2793
    %v2795 = vpop.xlane.xlu0 %2794
    %v2796 = vcvt.f32.s32 %v2795
    %v2797 = vcvt.f32.s32 %v2791
    %v2798 = vshll.u32 %v2797, 16
    %v2799 = vadd.s32 %v2798, %v2796
    %v2800 = vand.u32 %v2654, 65535
    %v2801 = vshra.s32 %v2654, 16
    %v2802 = vcvt.s32.f32 %v2800
    %v2803 = vcvt.s32.f32 %v2801
    %2804 = vmin.xlane.f32.xlu0 %v2803
    %v2805 = vpop.xlane.xlu0 %2804
    %vm2806 = vcmp.eq.f32.partialorder %v2803, %v2805
    %v2807 = vsel %vm2806, %v2802, inf
    %2808 = vmin.xlane.f32.xlu0 %v2807
    %v2809 = vpop.xlane.xlu0 %2808
    %v2810 = vcvt.f32.s32 %v2809
    %v2811 = vcvt.f32.s32 %v2805
    %v2812 = vshll.u32 %v2811, 16
    %v2813 = vadd.s32 %v2812, %v2810
    %v2814 = vand.u32 %v2655, 65535
    %v2815 = vshra.s32 %v2655, 16
    %v2816 = vcvt.s32.f32 %v2814
    %v2817 = vcvt.s32.f32 %v2815
    %2818 = vmin.xlane.f32.xlu0 %v2817
    %v2819 = vpop.xlane.xlu0 %2818
    %vm2820 = vcmp.eq.f32.partialorder %v2817, %v2819
    %v2821 = vsel %vm2820, %v2816, inf
    %2822 = vmin.xlane.f32.xlu0 %v2821
    %v2823 = vpop.xlane.xlu0 %2822
    %v2824 = vcvt.f32.s32 %v2823
    %v2825 = vcvt.f32.s32 %v2819
    %v2826 = vshll.u32 %v2825, 16
    %v2827 = vadd.s32 %v2826, %v2824
    %v2828 = vand.u32 %v2656, 65535
    %v2829 = vshra.s32 %v2656, 16
    %v2830 = vcvt.s32.f32 %v2828
    %v2831 = vcvt.s32.f32 %v2829
    %2832 = vmin.xlane.f32.xlu0 %v2831
    %v2833 = vpop.xlane.xlu0 %2832
    %vm2834 = vcmp.eq.f32.partialorder %v2831, %v2833
    %v2835 = vsel %vm2834, %v2830, inf
    %2836 = vmin.xlane.f32.xlu0 %v2835
    %v2837 = vpop.xlane.xlu0 %2836
    %v2838 = vcvt.f32.s32 %v2837
    %v2839 = vcvt.f32.s32 %v2833
    %v2840 = vshll.u32 %v2839, 16
    %v2841 = vadd.s32 %v2840, %v2838
    %v2842 = vand.u32 %v2657, 65535
    %v2843 = vshra.s32 %v2657, 16
    %v2844 = vcvt.s32.f32 %v2842
    %v2845 = vcvt.s32.f32 %v2843
    %2846 = vmin.xlane.f32.xlu0 %v2845
    %v2847 = vpop.xlane.xlu0 %2846
    %vm2848 = vcmp.eq.f32.partialorder %v2845, %v2847
    %v2849 = vsel %vm2848, %v2844, inf
    %2850 = vmin.xlane.f32.xlu0 %v2849
    %v2851 = vpop.xlane.xlu0 %2850
    %v2852 = vcvt.f32.s32 %v2851
    %v2853 = vcvt.f32.s32 %v2847
    %v2854 = vshll.u32 %v2853, 16
    %v2855 = vadd.s32 %v2854, %v2852
    %v2856 = vand.u32 %v2658, 65535
    %v2857 = vshra.s32 %v2658, 16
    %v2858 = vcvt.s32.f32 %v2856
    %v2859 = vcvt.s32.f32 %v2857
    %2860 = vmin.xlane.f32.xlu0 %v2859
    %v2861 = vpop.xlane.xlu0 %2860
    %vm2862 = vcmp.eq.f32.partialorder %v2859, %v2861
    %v2863 = vsel %vm2862, %v2858, inf
    %2864 = vmin.xlane.f32.xlu0 %v2863
    %v2865 = vpop.xlane.xlu0 %2864
    %v2866 = vcvt.f32.s32 %v2865
    %v2867 = vcvt.f32.s32 %v2861
    %v2868 = vshll.u32 %v2867, 16
    %v2869 = vadd.s32 %v2868, %v2866
    %v2870 = vand.u32 %v2659, 65535
    %v2871 = vshra.s32 %v2659, 16
    %v2872 = vcvt.s32.f32 %v2870
    %v2873 = vcvt.s32.f32 %v2871
    %2874 = vmin.xlane.f32.xlu0 %v2873
    %v2875 = vpop.xlane.xlu0 %2874
    %vm2876 = vcmp.eq.f32.partialorder %v2873, %v2875
    %v2877 = vsel %vm2876, %v2872, inf
    %2878 = vmin.xlane.f32.xlu0 %v2877
    %v2879 = vpop.xlane.xlu0 %2878
    %v2880 = vcvt.f32.s32 %v2879
    %v2881 = vcvt.f32.s32 %v2875
    %v2882 = vshll.u32 %v2881, 16
    %v2883 = vadd.s32 %v2882, %v2880
    %vm2884 = vcmp.eq.s32.totalorder %v351, 4
    %v2885 = vsel %vm2884, %v2673, %v2372
    %v2886 = vsel %vm2884, %v2687, %v2373
    %v2887 = vsel %vm2884, %v2701, %v2374
    %v2888 = vsel %vm2884, %v2715, %v2375
    %v2889 = vsel %vm2884, %v2729, %v2376
    %v2890 = vsel %vm2884, %v2743, %v2377
    %v2891 = vsel %vm2884, %v2757, %v2378
    %v2892 = vsel %vm2884, %v2771, %v2379
    %v2893 = vsel %vm2884, %v2785, %v2380
    %v2894 = vsel %vm2884, %v2799, %v2381
    %v2895 = vsel %vm2884, %v2813, %v2382
    %v2896 = vsel %vm2884, %v2827, %v2383
    %v2897 = vsel %vm2884, %v2841, %v2384
    %v2898 = vsel %vm2884, %v2855, %v2385
    %v2899 = vsel %vm2884, %v2869, %v2386
    %v2900 = vsel %vm2884, %v2883, %v2387
    %v2901 = vsel %vm2628, 2147483648, %v2388
    %v2902 = vsel %vm2629, 2147483648, %v2389
    %v2903 = vsel %vm2630, 2147483648, %v2390
    %v2904 = vsel %vm2631, 2147483648, %v2391
    %v2905 = vsel %vm2632, 2147483648, %v2392
    %v2906 = vsel %vm2633, 2147483648, %v2393
    %v2907 = vsel %vm2634, 2147483648, %v2394
    %v2908 = vsel %vm2635, 2147483648, %v2395
    %v2909 = vsel %vm2636, 2147483648, %v2396
    %v2910 = vsel %vm2637, 2147483648, %v2397
    %v2911 = vsel %vm2638, 2147483648, %v2398
    %v2912 = vsel %vm2639, 2147483648, %v2399
    %v2913 = vsel %vm2640, 2147483648, %v2400
    %v2914 = vsel %vm2641, 2147483648, %v2401
    %v2915 = vsel %vm2642, 2147483648, %v2402
    %v2916 = vsel %vm2643, 2147483648, %v2403
    %v2917 = vand.u32 %v2901, 65535
    %v2918 = vshra.s32 %v2901, 16
    %v2919 = vcvt.s32.f32 %v2917
    %v2920 = vcvt.s32.f32 %v2918
    %2921 = vmax.xlane.f32.xlu0 %v2920
    %v2922 = vpop.xlane.xlu0 %2921
    %vm2923 = vcmp.eq.f32.partialorder %v2920, %v2922
    %v2924 = vsel %vm2923, %v2919, -inf
    %2925 = vmax.xlane.f32.xlu0 %v2924
    %v2926 = vpop.xlane.xlu0 %2925
    %v2927 = vcvt.f32.s32 %v2926
    %v2928 = vcvt.f32.s32 %v2922
    %v2929 = vshll.u32 %v2928, 16
    %v2930 = vadd.s32 %v2929, %v2927
    %v2931 = vand.u32 %v2902, 65535
    %v2932 = vshra.s32 %v2902, 16
    %v2933 = vcvt.s32.f32 %v2931
    %v2934 = vcvt.s32.f32 %v2932
    %2935 = vmax.xlane.f32.xlu0 %v2934
    %v2936 = vpop.xlane.xlu0 %2935
    %vm2937 = vcmp.eq.f32.partialorder %v2934, %v2936
    %v2938 = vsel %vm2937, %v2933, -inf
    %2939 = vmax.xlane.f32.xlu0 %v2938
    %v2940 = vpop.xlane.xlu0 %2939
    %v2941 = vcvt.f32.s32 %v2940
    %v2942 = vcvt.f32.s32 %v2936
    %v2943 = vshll.u32 %v2942, 16
    %v2944 = vadd.s32 %v2943, %v2941
    %v2945 = vand.u32 %v2903, 65535
    %v2946 = vshra.s32 %v2903, 16
    %v2947 = vcvt.s32.f32 %v2945
    %v2948 = vcvt.s32.f32 %v2946
    %2949 = vmax.xlane.f32.xlu0 %v2948
    %v2950 = vpop.xlane.xlu0 %2949
    %vm2951 = vcmp.eq.f32.partialorder %v2948, %v2950
    %v2952 = vsel %vm2951, %v2947, -inf
    %2953 = vmax.xlane.f32.xlu0 %v2952
    %v2954 = vpop.xlane.xlu0 %2953
    %v2955 = vcvt.f32.s32 %v2954
    %v2956 = vcvt.f32.s32 %v2950
    %v2957 = vshll.u32 %v2956, 16
    %v2958 = vadd.s32 %v2957, %v2955
    %v2959 = vand.u32 %v2904, 65535
    %v2960 = vshra.s32 %v2904, 16
    %v2961 = vcvt.s32.f32 %v2959
    %v2962 = vcvt.s32.f32 %v2960
    %2963 = vmax.xlane.f32.xlu0 %v2962
    %v2964 = vpop.xlane.xlu0 %2963
    %vm2965 = vcmp.eq.f32.partialorder %v2962, %v2964
    %v2966 = vsel %vm2965, %v2961, -inf
    %2967 = vmax.xlane.f32.xlu0 %v2966
    %v2968 = vpop.xlane.xlu0 %2967
    %v2969 = vcvt.f32.s32 %v2968
    %v2970 = vcvt.f32.s32 %v2964
    %v2971 = vshll.u32 %v2970, 16
    %v2972 = vadd.s32 %v2971, %v2969
    %v2973 = vand.u32 %v2905, 65535
    %v2974 = vshra.s32 %v2905, 16
    %v2975 = vcvt.s32.f32 %v2973
    %v2976 = vcvt.s32.f32 %v2974
    %2977 = vmax.xlane.f32.xlu0 %v2976
    %v2978 = vpop.xlane.xlu0 %2977
    %vm2979 = vcmp.eq.f32.partialorder %v2976, %v2978
    %v2980 = vsel %vm2979, %v2975, -inf
    %2981 = vmax.xlane.f32.xlu0 %v2980
    %v2982 = vpop.xlane.xlu0 %2981
    %v2983 = vcvt.f32.s32 %v2982
    %v2984 = vcvt.f32.s32 %v2978
    %v2985 = vshll.u32 %v2984, 16
    %v2986 = vadd.s32 %v2985, %v2983
    %v2987 = vand.u32 %v2906, 65535
    %v2988 = vshra.s32 %v2906, 16
    %v2989 = vcvt.s32.f32 %v2987
    %v2990 = vcvt.s32.f32 %v2988
    %2991 = vmax.xlane.f32.xlu0 %v2990
    %v2992 = vpop.xlane.xlu0 %2991
    %vm2993 = vcmp.eq.f32.partialorder %v2990, %v2992
    %v2994 = vsel %vm2993, %v2989, -inf
    %2995 = vmax.xlane.f32.xlu0 %v2994
    %v2996 = vpop.xlane.xlu0 %2995
    %v2997 = vcvt.f32.s32 %v2996
    %v2998 = vcvt.f32.s32 %v2992
    %v2999 = vshll.u32 %v2998, 16
    %v3000 = vadd.s32 %v2999, %v2997
    %v3001 = vand.u32 %v2907, 65535
    %v3002 = vshra.s32 %v2907, 16
    %v3003 = vcvt.s32.f32 %v3001
    %v3004 = vcvt.s32.f32 %v3002
    %3005 = vmax.xlane.f32.xlu0 %v3004
    %v3006 = vpop.xlane.xlu0 %3005
    %vm3007 = vcmp.eq.f32.partialorder %v3004, %v3006
    %v3008 = vsel %vm3007, %v3003, -inf
    %3009 = vmax.xlane.f32.xlu0 %v3008
    %v3010 = vpop.xlane.xlu0 %3009
    %v3011 = vcvt.f32.s32 %v3010
    %v3012 = vcvt.f32.s32 %v3006
    %v3013 = vshll.u32 %v3012, 16
    %v3014 = vadd.s32 %v3013, %v3011
    %v3015 = vand.u32 %v2908, 65535
    %v3016 = vshra.s32 %v2908, 16
    %v3017 = vcvt.s32.f32 %v3015
    %v3018 = vcvt.s32.f32 %v3016
    %3019 = vmax.xlane.f32.xlu0 %v3018
    %v3020 = vpop.xlane.xlu0 %3019
    %vm3021 = vcmp.eq.f32.partialorder %v3018, %v3020
    %v3022 = vsel %vm3021, %v3017, -inf
    %3023 = vmax.xlane.f32.xlu0 %v3022
    %v3024 = vpop.xlane.xlu0 %3023
    %v3025 = vcvt.f32.s32 %v3024
    %v3026 = vcvt.f32.s32 %v3020
    %v3027 = vshll.u32 %v3026, 16
    %v3028 = vadd.s32 %v3027, %v3025
    %v3029 = vand.u32 %v2909, 65535
    %v3030 = vshra.s32 %v2909, 16
    %v3031 = vcvt.s32.f32 %v3029
    %v3032 = vcvt.s32.f32 %v3030
    %3033 = vmax.xlane.f32.xlu0 %v3032
    %v3034 = vpop.xlane.xlu0 %3033
    %vm3035 = vcmp.eq.f32.partialorder %v3032, %v3034
    %v3036 = vsel %vm3035, %v3031, -inf
    %3037 = vmax.xlane.f32.xlu0 %v3036
    %v3038 = vpop.xlane.xlu0 %3037
    %v3039 = vcvt.f32.s32 %v3038
    %v3040 = vcvt.f32.s32 %v3034
    %v3041 = vshll.u32 %v3040, 16
    %v3042 = vadd.s32 %v3041, %v3039
    %v3043 = vand.u32 %v2910, 65535
    %v3044 = vshra.s32 %v2910, 16
    %v3045 = vcvt.s32.f32 %v3043
    %v3046 = vcvt.s32.f32 %v3044
    %3047 = vmax.xlane.f32.xlu0 %v3046
    %v3048 = vpop.xlane.xlu0 %3047
    %vm3049 = vcmp.eq.f32.partialorder %v3046, %v3048
    %v3050 = vsel %vm3049, %v3045, -inf
    %3051 = vmax.xlane.f32.xlu0 %v3050
    %v3052 = vpop.xlane.xlu0 %3051
    %v3053 = vcvt.f32.s32 %v3052
    %v3054 = vcvt.f32.s32 %v3048
    %v3055 = vshll.u32 %v3054, 16
    %v3056 = vadd.s32 %v3055, %v3053
    %v3057 = vand.u32 %v2911, 65535
    %v3058 = vshra.s32 %v2911, 16
    %v3059 = vcvt.s32.f32 %v3057
    %v3060 = vcvt.s32.f32 %v3058
    %3061 = vmax.xlane.f32.xlu0 %v3060
    %v3062 = vpop.xlane.xlu0 %3061
    %vm3063 = vcmp.eq.f32.partialorder %v3060, %v3062
    %v3064 = vsel %vm3063, %v3059, -inf
    %3065 = vmax.xlane.f32.xlu0 %v3064
    %v3066 = vpop.xlane.xlu0 %3065
    %v3067 = vcvt.f32.s32 %v3066
    %v3068 = vcvt.f32.s32 %v3062
    %v3069 = vshll.u32 %v3068, 16
    %v3070 = vadd.s32 %v3069, %v3067
    %v3071 = vand.u32 %v2912, 65535
    %v3072 = vshra.s32 %v2912, 16
    %v3073 = vcvt.s32.f32 %v3071
    %v3074 = vcvt.s32.f32 %v3072
    %3075 = vmax.xlane.f32.xlu0 %v3074
    %v3076 = vpop.xlane.xlu0 %3075
    %vm3077 = vcmp.eq.f32.partialorder %v3074, %v3076
    %v3078 = vsel %vm3077, %v3073, -inf
    %3079 = vmax.xlane.f32.xlu0 %v3078
    %v3080 = vpop.xlane.xlu0 %3079
    %v3081 = vcvt.f32.s32 %v3080
    %v3082 = vcvt.f32.s32 %v3076
    %v3083 = vshll.u32 %v3082, 16
    %v3084 = vadd.s32 %v3083, %v3081
    %v3085 = vand.u32 %v2913, 65535
    %v3086 = vshra.s32 %v2913, 16
    %v3087 = vcvt.s32.f32 %v3085
    %v3088 = vcvt.s32.f32 %v3086
    %3089 = vmax.xlane.f32.xlu0 %v3088
    %v3090 = vpop.xlane.xlu0 %3089
    %vm3091 = vcmp.eq.f32.partialorder %v3088, %v3090
    %v3092 = vsel %vm3091, %v3087, -inf
    %3093 = vmax.xlane.f32.xlu0 %v3092
    %v3094 = vpop.xlane.xlu0 %3093
    %v3095 = vcvt.f32.s32 %v3094
    %v3096 = vcvt.f32.s32 %v3090
    %v3097 = vshll.u32 %v3096, 16
    %v3098 = vadd.s32 %v3097, %v3095
    %v3099 = vand.u32 %v2914, 65535
    %v3100 = vshra.s32 %v2914, 16
    %v3101 = vcvt.s32.f32 %v3099
    %v3102 = vcvt.s32.f32 %v3100
    %3103 = vmax.xlane.f32.xlu0 %v3102
    %v3104 = vpop.xlane.xlu0 %3103
    %vm3105 = vcmp.eq.f32.partialorder %v3102, %v3104
    %v3106 = vsel %vm3105, %v3101, -inf
    %3107 = vmax.xlane.f32.xlu0 %v3106
    %v3108 = vpop.xlane.xlu0 %3107
    %v3109 = vcvt.f32.s32 %v3108
    %v3110 = vcvt.f32.s32 %v3104
    %v3111 = vshll.u32 %v3110, 16
    %v3112 = vadd.s32 %v3111, %v3109
    %v3113 = vand.u32 %v2915, 65535
    %v3114 = vshra.s32 %v2915, 16
    %v3115 = vcvt.s32.f32 %v3113
    %v3116 = vcvt.s32.f32 %v3114
    %3117 = vmax.xlane.f32.xlu0 %v3116
    %v3118 = vpop.xlane.xlu0 %3117
    %vm3119 = vcmp.eq.f32.partialorder %v3116, %v3118
    %v3120 = vsel %vm3119, %v3115, -inf
    %3121 = vmax.xlane.f32.xlu0 %v3120
    %v3122 = vpop.xlane.xlu0 %3121
    %v3123 = vcvt.f32.s32 %v3122
    %v3124 = vcvt.f32.s32 %v3118
    %v3125 = vshll.u32 %v3124, 16
    %v3126 = vadd.s32 %v3125, %v3123
    %v3127 = vand.u32 %v2916, 65535
    %v3128 = vshra.s32 %v2916, 16
    %v3129 = vcvt.s32.f32 %v3127
    %v3130 = vcvt.s32.f32 %v3128
    %3131 = vmax.xlane.f32.xlu0 %v3130
    %v3132 = vpop.xlane.xlu0 %3131
    %vm3133 = vcmp.eq.f32.partialorder %v3130, %v3132
    %v3134 = vsel %vm3133, %v3129, -inf
    %3135 = vmax.xlane.f32.xlu0 %v3134
    %v3136 = vpop.xlane.xlu0 %3135
    %v3137 = vcvt.f32.s32 %v3136
    %v3138 = vcvt.f32.s32 %v3132
    %v3139 = vshll.u32 %v3138, 16
    %v3140 = vadd.s32 %v3139, %v3137
    %vm3141 = vcmp.eq.s32.totalorder %v2901, %v2930
    %vm3142 = vcmp.eq.s32.totalorder %v2902, %v2944
    %vm3143 = vcmp.eq.s32.totalorder %v2903, %v2958
    %vm3144 = vcmp.eq.s32.totalorder %v2904, %v2972
    %vm3145 = vcmp.eq.s32.totalorder %v2905, %v2986
    %vm3146 = vcmp.eq.s32.totalorder %v2906, %v3000
    %vm3147 = vcmp.eq.s32.totalorder %v2907, %v3014
    %vm3148 = vcmp.eq.s32.totalorder %v2908, %v3028
    %vm3149 = vcmp.eq.s32.totalorder %v2909, %v3042
    %vm3150 = vcmp.eq.s32.totalorder %v2910, %v3056
    %vm3151 = vcmp.eq.s32.totalorder %v2911, %v3070
    %vm3152 = vcmp.eq.s32.totalorder %v2912, %v3084
    %vm3153 = vcmp.eq.s32.totalorder %v2913, %v3098
    %vm3154 = vcmp.eq.s32.totalorder %v2914, %v3112
    %vm3155 = vcmp.eq.s32.totalorder %v2915, %v3126
    %vm3156 = vcmp.eq.s32.totalorder %v2916, %v3140
    %v3157 = vsel %vm3141, %v351, 128
    %v3158 = vsel %vm3142, %v351, 128
    %v3159 = vsel %vm3143, %v351, 128
    %v3160 = vsel %vm3144, %v351, 128
    %v3161 = vsel %vm3145, %v351, 128
    %v3162 = vsel %vm3146, %v351, 128
    %v3163 = vsel %vm3147, %v351, 128
    %v3164 = vsel %vm3148, %v351, 128
    %v3165 = vsel %vm3149, %v351, 128
    %v3166 = vsel %vm3150, %v351, 128
    %v3167 = vsel %vm3151, %v351, 128
    %v3168 = vsel %vm3152, %v351, 128
    %v3169 = vsel %vm3153, %v351, 128
    %v3170 = vsel %vm3154, %v351, 128
    %v3171 = vsel %vm3155, %v351, 128
    %v3172 = vsel %vm3156, %v351, 128
    %v3173 = vand.u32 %v3157, 65535
    %v3174 = vshra.s32 %v3157, 16
    %v3175 = vcvt.s32.f32 %v3173
    %v3176 = vcvt.s32.f32 %v3174
    %3177 = vmin.xlane.f32.xlu0 %v3176
    %v3178 = vpop.xlane.xlu0 %3177
    %vm3179 = vcmp.eq.f32.partialorder %v3176, %v3178
    %v3180 = vsel %vm3179, %v3175, inf
    %3181 = vmin.xlane.f32.xlu0 %v3180
    %v3182 = vpop.xlane.xlu0 %3181
    %v3183 = vcvt.f32.s32 %v3182
    %v3184 = vcvt.f32.s32 %v3178
    %v3185 = vshll.u32 %v3184, 16
    %v3186 = vadd.s32 %v3185, %v3183
    %v3187 = vand.u32 %v3158, 65535
    %v3188 = vshra.s32 %v3158, 16
    %v3189 = vcvt.s32.f32 %v3187
    %v3190 = vcvt.s32.f32 %v3188
    %3191 = vmin.xlane.f32.xlu0 %v3190
    %v3192 = vpop.xlane.xlu0 %3191
    %vm3193 = vcmp.eq.f32.partialorder %v3190, %v3192
    %v3194 = vsel %vm3193, %v3189, inf
    %3195 = vmin.xlane.f32.xlu0 %v3194
    %v3196 = vpop.xlane.xlu0 %3195
    %v3197 = vcvt.f32.s32 %v3196
    %v3198 = vcvt.f32.s32 %v3192
    %v3199 = vshll.u32 %v3198, 16
    %v3200 = vadd.s32 %v3199, %v3197
    %v3201 = vand.u32 %v3159, 65535
    %v3202 = vshra.s32 %v3159, 16
    %v3203 = vcvt.s32.f32 %v3201
    %v3204 = vcvt.s32.f32 %v3202
    %3205 = vmin.xlane.f32.xlu0 %v3204
    %v3206 = vpop.xlane.xlu0 %3205
    %vm3207 = vcmp.eq.f32.partialorder %v3204, %v3206
    %v3208 = vsel %vm3207, %v3203, inf
    %3209 = vmin.xlane.f32.xlu0 %v3208
    %v3210 = vpop.xlane.xlu0 %3209
    %v3211 = vcvt.f32.s32 %v3210
    %v3212 = vcvt.f32.s32 %v3206
    %v3213 = vshll.u32 %v3212, 16
    %v3214 = vadd.s32 %v3213, %v3211
    %v3215 = vand.u32 %v3160, 65535
    %v3216 = vshra.s32 %v3160, 16
    %v3217 = vcvt.s32.f32 %v3215
    %v3218 = vcvt.s32.f32 %v3216
    %3219 = vmin.xlane.f32.xlu0 %v3218
    %v3220 = vpop.xlane.xlu0 %3219
    %vm3221 = vcmp.eq.f32.partialorder %v3218, %v3220
    %v3222 = vsel %vm3221, %v3217, inf
    %3223 = vmin.xlane.f32.xlu0 %v3222
    %v3224 = vpop.xlane.xlu0 %3223
    %v3225 = vcvt.f32.s32 %v3224
    %v3226 = vcvt.f32.s32 %v3220
    %v3227 = vshll.u32 %v3226, 16
    %v3228 = vadd.s32 %v3227, %v3225
    %v3229 = vand.u32 %v3161, 65535
    %v3230 = vshra.s32 %v3161, 16
    %v3231 = vcvt.s32.f32 %v3229
    %v3232 = vcvt.s32.f32 %v3230
    %3233 = vmin.xlane.f32.xlu0 %v3232
    %v3234 = vpop.xlane.xlu0 %3233
    %vm3235 = vcmp.eq.f32.partialorder %v3232, %v3234
    %v3236 = vsel %vm3235, %v3231, inf
    %3237 = vmin.xlane.f32.xlu0 %v3236
    %v3238 = vpop.xlane.xlu0 %3237
    %v3239 = vcvt.f32.s32 %v3238
    %v3240 = vcvt.f32.s32 %v3234
    %v3241 = vshll.u32 %v3240, 16
    %v3242 = vadd.s32 %v3241, %v3239
    %v3243 = vand.u32 %v3162, 65535
    %v3244 = vshra.s32 %v3162, 16
    %v3245 = vcvt.s32.f32 %v3243
    %v3246 = vcvt.s32.f32 %v3244
    %3247 = vmin.xlane.f32.xlu0 %v3246
    %v3248 = vpop.xlane.xlu0 %3247
    %vm3249 = vcmp.eq.f32.partialorder %v3246, %v3248
    %v3250 = vsel %vm3249, %v3245, inf
    %3251 = vmin.xlane.f32.xlu0 %v3250
    %v3252 = vpop.xlane.xlu0 %3251
    %v3253 = vcvt.f32.s32 %v3252
    %v3254 = vcvt.f32.s32 %v3248
    %v3255 = vshll.u32 %v3254, 16
    %v3256 = vadd.s32 %v3255, %v3253
    %v3257 = vand.u32 %v3163, 65535
    %v3258 = vshra.s32 %v3163, 16
    %v3259 = vcvt.s32.f32 %v3257
    %v3260 = vcvt.s32.f32 %v3258
    %3261 = vmin.xlane.f32.xlu0 %v3260
    %v3262 = vpop.xlane.xlu0 %3261
    %vm3263 = vcmp.eq.f32.partialorder %v3260, %v3262
    %v3264 = vsel %vm3263, %v3259, inf
    %3265 = vmin.xlane.f32.xlu0 %v3264
    %v3266 = vpop.xlane.xlu0 %3265
    %v3267 = vcvt.f32.s32 %v3266
    %v3268 = vcvt.f32.s32 %v3262
    %v3269 = vshll.u32 %v3268, 16
    %v3270 = vadd.s32 %v3269, %v3267
    %v3271 = vand.u32 %v3164, 65535
    %v3272 = vshra.s32 %v3164, 16
    %v3273 = vcvt.s32.f32 %v3271
    %v3274 = vcvt.s32.f32 %v3272
    %3275 = vmin.xlane.f32.xlu0 %v3274
    %v3276 = vpop.xlane.xlu0 %3275
    %vm3277 = vcmp.eq.f32.partialorder %v3274, %v3276
    %v3278 = vsel %vm3277, %v3273, inf
    %3279 = vmin.xlane.f32.xlu0 %v3278
    %v3280 = vpop.xlane.xlu0 %3279
    %v3281 = vcvt.f32.s32 %v3280
    %v3282 = vcvt.f32.s32 %v3276
    %v3283 = vshll.u32 %v3282, 16
    %v3284 = vadd.s32 %v3283, %v3281
    %v3285 = vand.u32 %v3165, 65535
    %v3286 = vshra.s32 %v3165, 16
    %v3287 = vcvt.s32.f32 %v3285
    %v3288 = vcvt.s32.f32 %v3286
    %3289 = vmin.xlane.f32.xlu0 %v3288
    %v3290 = vpop.xlane.xlu0 %3289
    %vm3291 = vcmp.eq.f32.partialorder %v3288, %v3290
    %v3292 = vsel %vm3291, %v3287, inf
    %3293 = vmin.xlane.f32.xlu0 %v3292
    %v3294 = vpop.xlane.xlu0 %3293
    %v3295 = vcvt.f32.s32 %v3294
    %v3296 = vcvt.f32.s32 %v3290
    %v3297 = vshll.u32 %v3296, 16
    %v3298 = vadd.s32 %v3297, %v3295
    %v3299 = vand.u32 %v3166, 65535
    %v3300 = vshra.s32 %v3166, 16
    %v3301 = vcvt.s32.f32 %v3299
    %v3302 = vcvt.s32.f32 %v3300
    %3303 = vmin.xlane.f32.xlu0 %v3302
    %v3304 = vpop.xlane.xlu0 %3303
    %vm3305 = vcmp.eq.f32.partialorder %v3302, %v3304
    %v3306 = vsel %vm3305, %v3301, inf
    %3307 = vmin.xlane.f32.xlu0 %v3306
    %v3308 = vpop.xlane.xlu0 %3307
    %v3309 = vcvt.f32.s32 %v3308
    %v3310 = vcvt.f32.s32 %v3304
    %v3311 = vshll.u32 %v3310, 16
    %v3312 = vadd.s32 %v3311, %v3309
    %v3313 = vand.u32 %v3167, 65535
    %v3314 = vshra.s32 %v3167, 16
    %v3315 = vcvt.s32.f32 %v3313
    %v3316 = vcvt.s32.f32 %v3314
    %3317 = vmin.xlane.f32.xlu0 %v3316
    %v3318 = vpop.xlane.xlu0 %3317
    %vm3319 = vcmp.eq.f32.partialorder %v3316, %v3318
    %v3320 = vsel %vm3319, %v3315, inf
    %3321 = vmin.xlane.f32.xlu0 %v3320
    %v3322 = vpop.xlane.xlu0 %3321
    %v3323 = vcvt.f32.s32 %v3322
    %v3324 = vcvt.f32.s32 %v3318
    %v3325 = vshll.u32 %v3324, 16
    %v3326 = vadd.s32 %v3325, %v3323
    %v3327 = vand.u32 %v3168, 65535
    %v3328 = vshra.s32 %v3168, 16
    %v3329 = vcvt.s32.f32 %v3327
    %v3330 = vcvt.s32.f32 %v3328
    %3331 = vmin.xlane.f32.xlu0 %v3330
    %v3332 = vpop.xlane.xlu0 %3331
    %vm3333 = vcmp.eq.f32.partialorder %v3330, %v3332
    %v3334 = vsel %vm3333, %v3329, inf
    %3335 = vmin.xlane.f32.xlu0 %v3334
    %v3336 = vpop.xlane.xlu0 %3335
    %v3337 = vcvt.f32.s32 %v3336
    %v3338 = vcvt.f32.s32 %v3332
    %v3339 = vshll.u32 %v3338, 16
    %v3340 = vadd.s32 %v3339, %v3337
    %v3341 = vand.u32 %v3169, 65535
    %v3342 = vshra.s32 %v3169, 16
    %v3343 = vcvt.s32.f32 %v3341
    %v3344 = vcvt.s32.f32 %v3342
    %3345 = vmin.xlane.f32.xlu0 %v3344
    %v3346 = vpop.xlane.xlu0 %3345
    %vm3347 = vcmp.eq.f32.partialorder %v3344, %v3346
    %v3348 = vsel %vm3347, %v3343, inf
    %3349 = vmin.xlane.f32.xlu0 %v3348
    %v3350 = vpop.xlane.xlu0 %3349
    %v3351 = vcvt.f32.s32 %v3350
    %v3352 = vcvt.f32.s32 %v3346
    %v3353 = vshll.u32 %v3352, 16
    %v3354 = vadd.s32 %v3353, %v3351
    %v3355 = vand.u32 %v3170, 65535
    %v3356 = vshra.s32 %v3170, 16
    %v3357 = vcvt.s32.f32 %v3355
    %v3358 = vcvt.s32.f32 %v3356
    %3359 = vmin.xlane.f32.xlu0 %v3358
    %v3360 = vpop.xlane.xlu0 %3359
    %vm3361 = vcmp.eq.f32.partialorder %v3358, %v3360
    %v3362 = vsel %vm3361, %v3357, inf
    %3363 = vmin.xlane.f32.xlu0 %v3362
    %v3364 = vpop.xlane.xlu0 %3363
    %v3365 = vcvt.f32.s32 %v3364
    %v3366 = vcvt.f32.s32 %v3360
    %v3367 = vshll.u32 %v3366, 16
    %v3368 = vadd.s32 %v3367, %v3365
    %v3369 = vand.u32 %v3171, 65535
    %v3370 = vshra.s32 %v3171, 16
    %v3371 = vcvt.s32.f32 %v3369
    %v3372 = vcvt.s32.f32 %v3370
    %3373 = vmin.xlane.f32.xlu0 %v3372
    %v3374 = vpop.xlane.xlu0 %3373
    %vm3375 = vcmp.eq.f32.partialorder %v3372, %v3374
    %v3376 = vsel %vm3375, %v3371, inf
    %3377 = vmin.xlane.f32.xlu0 %v3376
    %v3378 = vpop.xlane.xlu0 %3377
    %v3379 = vcvt.f32.s32 %v3378
    %v3380 = vcvt.f32.s32 %v3374
    %v3381 = vshll.u32 %v3380, 16
    %v3382 = vadd.s32 %v3381, %v3379
    %v3383 = vand.u32 %v3172, 65535
    %v3384 = vshra.s32 %v3172, 16
    %v3385 = vcvt.s32.f32 %v3383
    %v3386 = vcvt.s32.f32 %v3384
    %3387 = vmin.xlane.f32.xlu0 %v3386
    %v3388 = vpop.xlane.xlu0 %3387
    %vm3389 = vcmp.eq.f32.partialorder %v3386, %v3388
    %v3390 = vsel %vm3389, %v3385, inf
    %3391 = vmin.xlane.f32.xlu0 %v3390
    %v3392 = vpop.xlane.xlu0 %3391
    %v3393 = vcvt.f32.s32 %v3392
    %v3394 = vcvt.f32.s32 %v3388
    %v3395 = vshll.u32 %v3394, 16
    %v3396 = vadd.s32 %v3395, %v3393
    %vm3397 = vcmp.eq.s32.totalorder %v351, 5
    %v3398 = vsel %vm3397, %v3186, %v2885
    %v3399 = vsel %vm3397, %v3200, %v2886
    %v3400 = vsel %vm3397, %v3214, %v2887
    %v3401 = vsel %vm3397, %v3228, %v2888
    %v3402 = vsel %vm3397, %v3242, %v2889
    %v3403 = vsel %vm3397, %v3256, %v2890
    %v3404 = vsel %vm3397, %v3270, %v2891
    %v3405 = vsel %vm3397, %v3284, %v2892
    %v3406 = vsel %vm3397, %v3298, %v2893
    %v3407 = vsel %vm3397, %v3312, %v2894
    %v3408 = vsel %vm3397, %v3326, %v2895
    %v3409 = vsel %vm3397, %v3340, %v2896
    %v3410 = vsel %vm3397, %v3354, %v2897
    %v3411 = vsel %vm3397, %v3368, %v2898
    %v3412 = vsel %vm3397, %v3382, %v2899
    %v3413 = vsel %vm3397, %v3396, %v2900
    %v3414 = vsel %vm3141, 2147483648, %v2901
    %v3415 = vsel %vm3142, 2147483648, %v2902
    %v3416 = vsel %vm3143, 2147483648, %v2903
    %v3417 = vsel %vm3144, 2147483648, %v2904
    %v3418 = vsel %vm3145, 2147483648, %v2905
    %v3419 = vsel %vm3146, 2147483648, %v2906
    %v3420 = vsel %vm3147, 2147483648, %v2907
    %v3421 = vsel %vm3148, 2147483648, %v2908
    %v3422 = vsel %vm3149, 2147483648, %v2909
    %v3423 = vsel %vm3150, 2147483648, %v2910
    %v3424 = vsel %vm3151, 2147483648, %v2911
    %v3425 = vsel %vm3152, 2147483648, %v2912
    %v3426 = vsel %vm3153, 2147483648, %v2913
    %v3427 = vsel %vm3154, 2147483648, %v2914
    %v3428 = vsel %vm3155, 2147483648, %v2915
    %v3429 = vsel %vm3156, 2147483648, %v2916
    %v3430 = vand.u32 %v3414, 65535
    %v3431 = vshra.s32 %v3414, 16
    %v3432 = vcvt.s32.f32 %v3430
    %v3433 = vcvt.s32.f32 %v3431
    %3434 = vmax.xlane.f32.xlu0 %v3433
    %v3435 = vpop.xlane.xlu0 %3434
    %vm3436 = vcmp.eq.f32.partialorder %v3433, %v3435
    %v3437 = vsel %vm3436, %v3432, -inf
    %3438 = vmax.xlane.f32.xlu0 %v3437
    %v3439 = vpop.xlane.xlu0 %3438
    %v3440 = vcvt.f32.s32 %v3439
    %v3441 = vcvt.f32.s32 %v3435
    %v3442 = vshll.u32 %v3441, 16
    %v3443 = vadd.s32 %v3442, %v3440
    %v3444 = vand.u32 %v3415, 65535
    %v3445 = vshra.s32 %v3415, 16
    %v3446 = vcvt.s32.f32 %v3444
    %v3447 = vcvt.s32.f32 %v3445
    %3448 = vmax.xlane.f32.xlu0 %v3447
    %v3449 = vpop.xlane.xlu0 %3448
    %vm3450 = vcmp.eq.f32.partialorder %v3447, %v3449
    %v3451 = vsel %vm3450, %v3446, -inf
    %3452 = vmax.xlane.f32.xlu0 %v3451
    %v3453 = vpop.xlane.xlu0 %3452
    %v3454 = vcvt.f32.s32 %v3453
    %v3455 = vcvt.f32.s32 %v3449
    %v3456 = vshll.u32 %v3455, 16
    %v3457 = vadd.s32 %v3456, %v3454
    %v3458 = vand.u32 %v3416, 65535
    %v3459 = vshra.s32 %v3416, 16
    %v3460 = vcvt.s32.f32 %v3458
    %v3461 = vcvt.s32.f32 %v3459
    %3462 = vmax.xlane.f32.xlu0 %v3461
    %v3463 = vpop.xlane.xlu0 %3462
    %vm3464 = vcmp.eq.f32.partialorder %v3461, %v3463
    %v3465 = vsel %vm3464, %v3460, -inf
    %3466 = vmax.xlane.f32.xlu0 %v3465
    %v3467 = vpop.xlane.xlu0 %3466
    %v3468 = vcvt.f32.s32 %v3467
    %v3469 = vcvt.f32.s32 %v3463
    %v3470 = vshll.u32 %v3469, 16
    %v3471 = vadd.s32 %v3470, %v3468
    %v3472 = vand.u32 %v3417, 65535
    %v3473 = vshra.s32 %v3417, 16
    %v3474 = vcvt.s32.f32 %v3472
    %v3475 = vcvt.s32.f32 %v3473
    %3476 = vmax.xlane.f32.xlu0 %v3475
    %v3477 = vpop.xlane.xlu0 %3476
    %vm3478 = vcmp.eq.f32.partialorder %v3475, %v3477
    %v3479 = vsel %vm3478, %v3474, -inf
    %3480 = vmax.xlane.f32.xlu0 %v3479
    %v3481 = vpop.xlane.xlu0 %3480
    %v3482 = vcvt.f32.s32 %v3481
    %v3483 = vcvt.f32.s32 %v3477
    %v3484 = vshll.u32 %v3483, 16
    %v3485 = vadd.s32 %v3484, %v3482
    %v3486 = vand.u32 %v3418, 65535
    %v3487 = vshra.s32 %v3418, 16
    %v3488 = vcvt.s32.f32 %v3486
    %v3489 = vcvt.s32.f32 %v3487
    %3490 = vmax.xlane.f32.xlu0 %v3489
    %v3491 = vpop.xlane.xlu0 %3490
    %vm3492 = vcmp.eq.f32.partialorder %v3489, %v3491
    %v3493 = vsel %vm3492, %v3488, -inf
    %3494 = vmax.xlane.f32.xlu0 %v3493
    %v3495 = vpop.xlane.xlu0 %3494
    %v3496 = vcvt.f32.s32 %v3495
    %v3497 = vcvt.f32.s32 %v3491
    %v3498 = vshll.u32 %v3497, 16
    %v3499 = vadd.s32 %v3498, %v3496
    %v3500 = vand.u32 %v3419, 65535
    %v3501 = vshra.s32 %v3419, 16
    %v3502 = vcvt.s32.f32 %v3500
    %v3503 = vcvt.s32.f32 %v3501
    %3504 = vmax.xlane.f32.xlu0 %v3503
    %v3505 = vpop.xlane.xlu0 %3504
    %vm3506 = vcmp.eq.f32.partialorder %v3503, %v3505
    %v3507 = vsel %vm3506, %v3502, -inf
    %3508 = vmax.xlane.f32.xlu0 %v3507
    %v3509 = vpop.xlane.xlu0 %3508
    %v3510 = vcvt.f32.s32 %v3509
    %v3511 = vcvt.f32.s32 %v3505
    %v3512 = vshll.u32 %v3511, 16
    %v3513 = vadd.s32 %v3512, %v3510
    %v3514 = vand.u32 %v3420, 65535
    %v3515 = vshra.s32 %v3420, 16
    %v3516 = vcvt.s32.f32 %v3514
    %v3517 = vcvt.s32.f32 %v3515
    %3518 = vmax.xlane.f32.xlu0 %v3517
    %v3519 = vpop.xlane.xlu0 %3518
    %vm3520 = vcmp.eq.f32.partialorder %v3517, %v3519
    %v3521 = vsel %vm3520, %v3516, -inf
    %3522 = vmax.xlane.f32.xlu0 %v3521
    %v3523 = vpop.xlane.xlu0 %3522
    %v3524 = vcvt.f32.s32 %v3523
    %v3525 = vcvt.f32.s32 %v3519
    %v3526 = vshll.u32 %v3525, 16
    %v3527 = vadd.s32 %v3526, %v3524
    %v3528 = vand.u32 %v3421, 65535
    %v3529 = vshra.s32 %v3421, 16
    %v3530 = vcvt.s32.f32 %v3528
    %v3531 = vcvt.s32.f32 %v3529
    %3532 = vmax.xlane.f32.xlu0 %v3531
    %v3533 = vpop.xlane.xlu0 %3532
    %vm3534 = vcmp.eq.f32.partialorder %v3531, %v3533
    %v3535 = vsel %vm3534, %v3530, -inf
    %3536 = vmax.xlane.f32.xlu0 %v3535
    %v3537 = vpop.xlane.xlu0 %3536
    %v3538 = vcvt.f32.s32 %v3537
    %v3539 = vcvt.f32.s32 %v3533
    %v3540 = vshll.u32 %v3539, 16
    %v3541 = vadd.s32 %v3540, %v3538
    %v3542 = vand.u32 %v3422, 65535
    %v3543 = vshra.s32 %v3422, 16
    %v3544 = vcvt.s32.f32 %v3542
    %v3545 = vcvt.s32.f32 %v3543
    %3546 = vmax.xlane.f32.xlu0 %v3545
    %v3547 = vpop.xlane.xlu0 %3546
    %vm3548 = vcmp.eq.f32.partialorder %v3545, %v3547
    %v3549 = vsel %vm3548, %v3544, -inf
    %3550 = vmax.xlane.f32.xlu0 %v3549
    %v3551 = vpop.xlane.xlu0 %3550
    %v3552 = vcvt.f32.s32 %v3551
    %v3553 = vcvt.f32.s32 %v3547
    %v3554 = vshll.u32 %v3553, 16
    %v3555 = vadd.s32 %v3554, %v3552
    %v3556 = vand.u32 %v3423, 65535
    %v3557 = vshra.s32 %v3423, 16
    %v3558 = vcvt.s32.f32 %v3556
    %v3559 = vcvt.s32.f32 %v3557
    %3560 = vmax.xlane.f32.xlu0 %v3559
    %v3561 = vpop.xlane.xlu0 %3560
    %vm3562 = vcmp.eq.f32.partialorder %v3559, %v3561
    %v3563 = vsel %vm3562, %v3558, -inf
    %3564 = vmax.xlane.f32.xlu0 %v3563
    %v3565 = vpop.xlane.xlu0 %3564
    %v3566 = vcvt.f32.s32 %v3565
    %v3567 = vcvt.f32.s32 %v3561
    %v3568 = vshll.u32 %v3567, 16
    %v3569 = vadd.s32 %v3568, %v3566
    %v3570 = vand.u32 %v3424, 65535
    %v3571 = vshra.s32 %v3424, 16
    %v3572 = vcvt.s32.f32 %v3570
    %v3573 = vcvt.s32.f32 %v3571
    %3574 = vmax.xlane.f32.xlu0 %v3573
    %v3575 = vpop.xlane.xlu0 %3574
    %vm3576 = vcmp.eq.f32.partialorder %v3573, %v3575
    %v3577 = vsel %vm3576, %v3572, -inf
    %3578 = vmax.xlane.f32.xlu0 %v3577
    %v3579 = vpop.xlane.xlu0 %3578
    %v3580 = vcvt.f32.s32 %v3579
    %v3581 = vcvt.f32.s32 %v3575
    %v3582 = vshll.u32 %v3581, 16
    %v3583 = vadd.s32 %v3582, %v3580
    %v3584 = vand.u32 %v3425, 65535
    %v3585 = vshra.s32 %v3425, 16
    %v3586 = vcvt.s32.f32 %v3584
    %v3587 = vcvt.s32.f32 %v3585
    %3588 = vmax.xlane.f32.xlu0 %v3587
    %v3589 = vpop.xlane.xlu0 %3588
    %vm3590 = vcmp.eq.f32.partialorder %v3587, %v3589
    %v3591 = vsel %vm3590, %v3586, -inf
    %3592 = vmax.xlane.f32.xlu0 %v3591
    %v3593 = vpop.xlane.xlu0 %3592
    %v3594 = vcvt.f32.s32 %v3593
    %v3595 = vcvt.f32.s32 %v3589
    %v3596 = vshll.u32 %v3595, 16
    %v3597 = vadd.s32 %v3596, %v3594
    %v3598 = vand.u32 %v3426, 65535
    %v3599 = vshra.s32 %v3426, 16
    %v3600 = vcvt.s32.f32 %v3598
    %v3601 = vcvt.s32.f32 %v3599
    %3602 = vmax.xlane.f32.xlu0 %v3601
    %v3603 = vpop.xlane.xlu0 %3602
    %vm3604 = vcmp.eq.f32.partialorder %v3601, %v3603
    %v3605 = vsel %vm3604, %v3600, -inf
    %3606 = vmax.xlane.f32.xlu0 %v3605
    %v3607 = vpop.xlane.xlu0 %3606
    %v3608 = vcvt.f32.s32 %v3607
    %v3609 = vcvt.f32.s32 %v3603
    %v3610 = vshll.u32 %v3609, 16
    %v3611 = vadd.s32 %v3610, %v3608
    %v3612 = vand.u32 %v3427, 65535
    %v3613 = vshra.s32 %v3427, 16
    %v3614 = vcvt.s32.f32 %v3612
    %v3615 = vcvt.s32.f32 %v3613
    %3616 = vmax.xlane.f32.xlu0 %v3615
    %v3617 = vpop.xlane.xlu0 %3616
    %vm3618 = vcmp.eq.f32.partialorder %v3615, %v3617
    %v3619 = vsel %vm3618, %v3614, -inf
    %3620 = vmax.xlane.f32.xlu0 %v3619
    %v3621 = vpop.xlane.xlu0 %3620
    %v3622 = vcvt.f32.s32 %v3621
    %v3623 = vcvt.f32.s32 %v3617
    %v3624 = vshll.u32 %v3623, 16
    %v3625 = vadd.s32 %v3624, %v3622
    %v3626 = vand.u32 %v3428, 65535
    %v3627 = vshra.s32 %v3428, 16
    %v3628 = vcvt.s32.f32 %v3626
    %v3629 = vcvt.s32.f32 %v3627
    %3630 = vmax.xlane.f32.xlu0 %v3629
    %v3631 = vpop.xlane.xlu0 %3630
    %vm3632 = vcmp.eq.f32.partialorder %v3629, %v3631
    %v3633 = vsel %vm3632, %v3628, -inf
    %3634 = vmax.xlane.f32.xlu0 %v3633
    %v3635 = vpop.xlane.xlu0 %3634
    %v3636 = vcvt.f32.s32 %v3635
    %v3637 = vcvt.f32.s32 %v3631
    %v3638 = vshll.u32 %v3637, 16
    %v3639 = vadd.s32 %v3638, %v3636
    %v3640 = vand.u32 %v3429, 65535
    %v3641 = vshra.s32 %v3429, 16
    %v3642 = vcvt.s32.f32 %v3640
    %v3643 = vcvt.s32.f32 %v3641
    %3644 = vmax.xlane.f32.xlu0 %v3643
    %v3645 = vpop.xlane.xlu0 %3644
    %vm3646 = vcmp.eq.f32.partialorder %v3643, %v3645
    %v3647 = vsel %vm3646, %v3642, -inf
    %3648 = vmax.xlane.f32.xlu0 %v3647
    %v3649 = vpop.xlane.xlu0 %3648
    %v3650 = vcvt.f32.s32 %v3649
    %v3651 = vcvt.f32.s32 %v3645
    %v3652 = vshll.u32 %v3651, 16
    %v3653 = vadd.s32 %v3652, %v3650
    %vm3654 = vcmp.eq.s32.totalorder %v3414, %v3443
    %vm3655 = vcmp.eq.s32.totalorder %v3415, %v3457
    %vm3656 = vcmp.eq.s32.totalorder %v3416, %v3471
    %vm3657 = vcmp.eq.s32.totalorder %v3417, %v3485
    %vm3658 = vcmp.eq.s32.totalorder %v3418, %v3499
    %vm3659 = vcmp.eq.s32.totalorder %v3419, %v3513
    %vm3660 = vcmp.eq.s32.totalorder %v3420, %v3527
    %vm3661 = vcmp.eq.s32.totalorder %v3421, %v3541
    %vm3662 = vcmp.eq.s32.totalorder %v3422, %v3555
    %vm3663 = vcmp.eq.s32.totalorder %v3423, %v3569
    %vm3664 = vcmp.eq.s32.totalorder %v3424, %v3583
    %vm3665 = vcmp.eq.s32.totalorder %v3425, %v3597
    %vm3666 = vcmp.eq.s32.totalorder %v3426, %v3611
    %vm3667 = vcmp.eq.s32.totalorder %v3427, %v3625
    %vm3668 = vcmp.eq.s32.totalorder %v3428, %v3639
    %vm3669 = vcmp.eq.s32.totalorder %v3429, %v3653
    %v3670 = vsel %vm3654, %v351, 128
    %v3671 = vsel %vm3655, %v351, 128
    %v3672 = vsel %vm3656, %v351, 128
    %v3673 = vsel %vm3657, %v351, 128
    %v3674 = vsel %vm3658, %v351, 128
    %v3675 = vsel %vm3659, %v351, 128
    %v3676 = vsel %vm3660, %v351, 128
    %v3677 = vsel %vm3661, %v351, 128
    %v3678 = vsel %vm3662, %v351, 128
    %v3679 = vsel %vm3663, %v351, 128
    %v3680 = vsel %vm3664, %v351, 128
    %v3681 = vsel %vm3665, %v351, 128
    %v3682 = vsel %vm3666, %v351, 128
    %v3683 = vsel %vm3667, %v351, 128
    %v3684 = vsel %vm3668, %v351, 128
    %v3685 = vsel %vm3669, %v351, 128
    %v3686 = vand.u32 %v3670, 65535
    %v3687 = vshra.s32 %v3670, 16
    %v3688 = vcvt.s32.f32 %v3686
    %v3689 = vcvt.s32.f32 %v3687
    %3690 = vmin.xlane.f32.xlu0 %v3689
    %v3691 = vpop.xlane.xlu0 %3690
    %vm3692 = vcmp.eq.f32.partialorder %v3689, %v3691
    %v3693 = vsel %vm3692, %v3688, inf
    %3694 = vmin.xlane.f32.xlu0 %v3693
    %v3695 = vpop.xlane.xlu0 %3694
    %v3696 = vcvt.f32.s32 %v3695
    %v3697 = vcvt.f32.s32 %v3691
    %v3698 = vshll.u32 %v3697, 16
    %v3699 = vadd.s32 %v3698, %v3696
    %v3700 = vand.u32 %v3671, 65535
    %v3701 = vshra.s32 %v3671, 16
    %v3702 = vcvt.s32.f32 %v3700
    %v3703 = vcvt.s32.f32 %v3701
    %3704 = vmin.xlane.f32.xlu0 %v3703
    %v3705 = vpop.xlane.xlu0 %3704
    %vm3706 = vcmp.eq.f32.partialorder %v3703, %v3705
    %v3707 = vsel %vm3706, %v3702, inf
    %3708 = vmin.xlane.f32.xlu0 %v3707
    %v3709 = vpop.xlane.xlu0 %3708
    %v3710 = vcvt.f32.s32 %v3709
    %v3711 = vcvt.f32.s32 %v3705
    %v3712 = vshll.u32 %v3711, 16
    %v3713 = vadd.s32 %v3712, %v3710
    %v3714 = vand.u32 %v3672, 65535
    %v3715 = vshra.s32 %v3672, 16
    %v3716 = vcvt.s32.f32 %v3714
    %v3717 = vcvt.s32.f32 %v3715
    %3718 = vmin.xlane.f32.xlu0 %v3717
    %v3719 = vpop.xlane.xlu0 %3718
    %vm3720 = vcmp.eq.f32.partialorder %v3717, %v3719
    %v3721 = vsel %vm3720, %v3716, inf
    %3722 = vmin.xlane.f32.xlu0 %v3721
    %v3723 = vpop.xlane.xlu0 %3722
    %v3724 = vcvt.f32.s32 %v3723
    %v3725 = vcvt.f32.s32 %v3719
    %v3726 = vshll.u32 %v3725, 16
    %v3727 = vadd.s32 %v3726, %v3724
    %v3728 = vand.u32 %v3673, 65535
    %v3729 = vshra.s32 %v3673, 16
    %v3730 = vcvt.s32.f32 %v3728
    %v3731 = vcvt.s32.f32 %v3729
    %3732 = vmin.xlane.f32.xlu0 %v3731
    %v3733 = vpop.xlane.xlu0 %3732
    %vm3734 = vcmp.eq.f32.partialorder %v3731, %v3733
    %v3735 = vsel %vm3734, %v3730, inf
    %3736 = vmin.xlane.f32.xlu0 %v3735
    %v3737 = vpop.xlane.xlu0 %3736
    %v3738 = vcvt.f32.s32 %v3737
    %v3739 = vcvt.f32.s32 %v3733
    %v3740 = vshll.u32 %v3739, 16
    %v3741 = vadd.s32 %v3740, %v3738
    %v3742 = vand.u32 %v3674, 65535
    %v3743 = vshra.s32 %v3674, 16
    %v3744 = vcvt.s32.f32 %v3742
    %v3745 = vcvt.s32.f32 %v3743
    %3746 = vmin.xlane.f32.xlu0 %v3745
    %v3747 = vpop.xlane.xlu0 %3746
    %vm3748 = vcmp.eq.f32.partialorder %v3745, %v3747
    %v3749 = vsel %vm3748, %v3744, inf
    %3750 = vmin.xlane.f32.xlu0 %v3749
    %v3751 = vpop.xlane.xlu0 %3750
    %v3752 = vcvt.f32.s32 %v3751
    %v3753 = vcvt.f32.s32 %v3747
    %v3754 = vshll.u32 %v3753, 16
    %v3755 = vadd.s32 %v3754, %v3752
    %v3756 = vand.u32 %v3675, 65535
    %v3757 = vshra.s32 %v3675, 16
    %v3758 = vcvt.s32.f32 %v3756
    %v3759 = vcvt.s32.f32 %v3757
    %3760 = vmin.xlane.f32.xlu0 %v3759
    %v3761 = vpop.xlane.xlu0 %3760
    %vm3762 = vcmp.eq.f32.partialorder %v3759, %v3761
    %v3763 = vsel %vm3762, %v3758, inf
    %3764 = vmin.xlane.f32.xlu0 %v3763
    %v3765 = vpop.xlane.xlu0 %3764
    %v3766 = vcvt.f32.s32 %v3765
    %v3767 = vcvt.f32.s32 %v3761
    %v3768 = vshll.u32 %v3767, 16
    %v3769 = vadd.s32 %v3768, %v3766
    %v3770 = vand.u32 %v3676, 65535
    %v3771 = vshra.s32 %v3676, 16
    %v3772 = vcvt.s32.f32 %v3770
    %v3773 = vcvt.s32.f32 %v3771
    %3774 = vmin.xlane.f32.xlu0 %v3773
    %v3775 = vpop.xlane.xlu0 %3774
    %vm3776 = vcmp.eq.f32.partialorder %v3773, %v3775
    %v3777 = vsel %vm3776, %v3772, inf
    %3778 = vmin.xlane.f32.xlu0 %v3777
    %v3779 = vpop.xlane.xlu0 %3778
    %v3780 = vcvt.f32.s32 %v3779
    %v3781 = vcvt.f32.s32 %v3775
    %v3782 = vshll.u32 %v3781, 16
    %v3783 = vadd.s32 %v3782, %v3780
    %v3784 = vand.u32 %v3677, 65535
    %v3785 = vshra.s32 %v3677, 16
    %v3786 = vcvt.s32.f32 %v3784
    %v3787 = vcvt.s32.f32 %v3785
    %3788 = vmin.xlane.f32.xlu0 %v3787
    %v3789 = vpop.xlane.xlu0 %3788
    %vm3790 = vcmp.eq.f32.partialorder %v3787, %v3789
    %v3791 = vsel %vm3790, %v3786, inf
    %3792 = vmin.xlane.f32.xlu0 %v3791
    %v3793 = vpop.xlane.xlu0 %3792
    %v3794 = vcvt.f32.s32 %v3793
    %v3795 = vcvt.f32.s32 %v3789
    %v3796 = vshll.u32 %v3795, 16
    %v3797 = vadd.s32 %v3796, %v3794
    %v3798 = vand.u32 %v3678, 65535
    %v3799 = vshra.s32 %v3678, 16
    %v3800 = vcvt.s32.f32 %v3798
    %v3801 = vcvt.s32.f32 %v3799
    %3802 = vmin.xlane.f32.xlu0 %v3801
    %v3803 = vpop.xlane.xlu0 %3802
    %vm3804 = vcmp.eq.f32.partialorder %v3801, %v3803
    %v3805 = vsel %vm3804, %v3800, inf
    %3806 = vmin.xlane.f32.xlu0 %v3805
    %v3807 = vpop.xlane.xlu0 %3806
    %v3808 = vcvt.f32.s32 %v3807
    %v3809 = vcvt.f32.s32 %v3803
    %v3810 = vshll.u32 %v3809, 16
    %v3811 = vadd.s32 %v3810, %v3808
    %v3812 = vand.u32 %v3679, 65535
    %v3813 = vshra.s32 %v3679, 16
    %v3814 = vcvt.s32.f32 %v3812
    %v3815 = vcvt.s32.f32 %v3813
    %3816 = vmin.xlane.f32.xlu0 %v3815
    %v3817 = vpop.xlane.xlu0 %3816
    %vm3818 = vcmp.eq.f32.partialorder %v3815, %v3817
    %v3819 = vsel %vm3818, %v3814, inf
    %3820 = vmin.xlane.f32.xlu0 %v3819
    %v3821 = vpop.xlane.xlu0 %3820
    %v3822 = vcvt.f32.s32 %v3821
    %v3823 = vcvt.f32.s32 %v3817
    %v3824 = vshll.u32 %v3823, 16
    %v3825 = vadd.s32 %v3824, %v3822
    %v3826 = vand.u32 %v3680, 65535
    %v3827 = vshra.s32 %v3680, 16
    %v3828 = vcvt.s32.f32 %v3826
    %v3829 = vcvt.s32.f32 %v3827
    %3830 = vmin.xlane.f32.xlu0 %v3829
    %v3831 = vpop.xlane.xlu0 %3830
    %vm3832 = vcmp.eq.f32.partialorder %v3829, %v3831
    %v3833 = vsel %vm3832, %v3828, inf
    %3834 = vmin.xlane.f32.xlu0 %v3833
    %v3835 = vpop.xlane.xlu0 %3834
    %v3836 = vcvt.f32.s32 %v3835
    %v3837 = vcvt.f32.s32 %v3831
    %v3838 = vshll.u32 %v3837, 16
    %v3839 = vadd.s32 %v3838, %v3836
    %v3840 = vand.u32 %v3681, 65535
    %v3841 = vshra.s32 %v3681, 16
    %v3842 = vcvt.s32.f32 %v3840
    %v3843 = vcvt.s32.f32 %v3841
    %3844 = vmin.xlane.f32.xlu0 %v3843
    %v3845 = vpop.xlane.xlu0 %3844
    %vm3846 = vcmp.eq.f32.partialorder %v3843, %v3845
    %v3847 = vsel %vm3846, %v3842, inf
    %3848 = vmin.xlane.f32.xlu0 %v3847
    %v3849 = vpop.xlane.xlu0 %3848
    %v3850 = vcvt.f32.s32 %v3849
    %v3851 = vcvt.f32.s32 %v3845
    %v3852 = vshll.u32 %v3851, 16
    %v3853 = vadd.s32 %v3852, %v3850
    %v3854 = vand.u32 %v3682, 65535
    %v3855 = vshra.s32 %v3682, 16
    %v3856 = vcvt.s32.f32 %v3854
    %v3857 = vcvt.s32.f32 %v3855
    %3858 = vmin.xlane.f32.xlu0 %v3857
    %v3859 = vpop.xlane.xlu0 %3858
    %vm3860 = vcmp.eq.f32.partialorder %v3857, %v3859
    %v3861 = vsel %vm3860, %v3856, inf
    %3862 = vmin.xlane.f32.xlu0 %v3861
    %v3863 = vpop.xlane.xlu0 %3862
    %v3864 = vcvt.f32.s32 %v3863
    %v3865 = vcvt.f32.s32 %v3859
    %v3866 = vshll.u32 %v3865, 16
    %v3867 = vadd.s32 %v3866, %v3864
    %v3868 = vand.u32 %v3683, 65535
    %v3869 = vshra.s32 %v3683, 16
    %v3870 = vcvt.s32.f32 %v3868
    %v3871 = vcvt.s32.f32 %v3869
    %3872 = vmin.xlane.f32.xlu0 %v3871
    %v3873 = vpop.xlane.xlu0 %3872
    %vm3874 = vcmp.eq.f32.partialorder %v3871, %v3873
    %v3875 = vsel %vm3874, %v3870, inf
    %3876 = vmin.xlane.f32.xlu0 %v3875
    %v3877 = vpop.xlane.xlu0 %3876
    %v3878 = vcvt.f32.s32 %v3877
    %v3879 = vcvt.f32.s32 %v3873
    %v3880 = vshll.u32 %v3879, 16
    %v3881 = vadd.s32 %v3880, %v3878
    %v3882 = vand.u32 %v3684, 65535
    %v3883 = vshra.s32 %v3684, 16
    %v3884 = vcvt.s32.f32 %v3882
    %v3885 = vcvt.s32.f32 %v3883
    %3886 = vmin.xlane.f32.xlu0 %v3885
    %v3887 = vpop.xlane.xlu0 %3886
    %vm3888 = vcmp.eq.f32.partialorder %v3885, %v3887
    %v3889 = vsel %vm3888, %v3884, inf
    %3890 = vmin.xlane.f32.xlu0 %v3889
    %v3891 = vpop.xlane.xlu0 %3890
    %v3892 = vcvt.f32.s32 %v3891
    %v3893 = vcvt.f32.s32 %v3887
    %v3894 = vshll.u32 %v3893, 16
    %v3895 = vadd.s32 %v3894, %v3892
    %v3896 = vand.u32 %v3685, 65535
    %v3897 = vshra.s32 %v3685, 16
    %v3898 = vcvt.s32.f32 %v3896
    %v3899 = vcvt.s32.f32 %v3897
    %3900 = vmin.xlane.f32.xlu0 %v3899
    %v3901 = vpop.xlane.xlu0 %3900
    %vm3902 = vcmp.eq.f32.partialorder %v3899, %v3901
    %v3903 = vsel %vm3902, %v3898, inf
    %3904 = vmin.xlane.f32.xlu0 %v3903
    %v3905 = vpop.xlane.xlu0 %3904
    %v3906 = vcvt.f32.s32 %v3905
    %v3907 = vcvt.f32.s32 %v3901
    %v3908 = vshll.u32 %v3907, 16
    %v3909 = vadd.s32 %v3908, %v3906
    %vm3910 = vcmp.eq.s32.totalorder %v351, 6
    %v3911 = vsel %vm3910, %v3699, %v3398
    %v3912 = vsel %vm3910, %v3713, %v3399
    %v3913 = vsel %vm3910, %v3727, %v3400
    %v3914 = vsel %vm3910, %v3741, %v3401
    %v3915 = vsel %vm3910, %v3755, %v3402
    %v3916 = vsel %vm3910, %v3769, %v3403
    %v3917 = vsel %vm3910, %v3783, %v3404
    %v3918 = vsel %vm3910, %v3797, %v3405
    %v3919 = vsel %vm3910, %v3811, %v3406
    %v3920 = vsel %vm3910, %v3825, %v3407
    %v3921 = vsel %vm3910, %v3839, %v3408
    %v3922 = vsel %vm3910, %v3853, %v3409
    %v3923 = vsel %vm3910, %v3867, %v3410
    %v3924 = vsel %vm3910, %v3881, %v3411
    %v3925 = vsel %vm3910, %v3895, %v3412
    %v3926 = vsel %vm3910, %v3909, %v3413
    %v3927 = vsel %vm3654, 2147483648, %v3414
    %v3928 = vsel %vm3655, 2147483648, %v3415
    %v3929 = vsel %vm3656, 2147483648, %v3416
    %v3930 = vsel %vm3657, 2147483648, %v3417
    %v3931 = vsel %vm3658, 2147483648, %v3418
    %v3932 = vsel %vm3659, 2147483648, %v3419
    %v3933 = vsel %vm3660, 2147483648, %v3420
    %v3934 = vsel %vm3661, 2147483648, %v3421
    %v3935 = vsel %vm3662, 2147483648, %v3422
    %v3936 = vsel %vm3663, 2147483648, %v3423
    %v3937 = vsel %vm3664, 2147483648, %v3424
    %v3938 = vsel %vm3665, 2147483648, %v3425
    %v3939 = vsel %vm3666, 2147483648, %v3426
    %v3940 = vsel %vm3667, 2147483648, %v3427
    %v3941 = vsel %vm3668, 2147483648, %v3428
    %v3942 = vsel %vm3669, 2147483648, %v3429
    %v3943 = vand.u32 %v3927, 65535
    %v3944 = vshra.s32 %v3927, 16
    %v3945 = vcvt.s32.f32 %v3943
    %v3946 = vcvt.s32.f32 %v3944
    %3947 = vmax.xlane.f32.xlu0 %v3946
    %v3948 = vpop.xlane.xlu0 %3947
    %vm3949 = vcmp.eq.f32.partialorder %v3946, %v3948
    %v3950 = vsel %vm3949, %v3945, -inf
    %3951 = vmax.xlane.f32.xlu0 %v3950
    %v3952 = vpop.xlane.xlu0 %3951
    %v3953 = vcvt.f32.s32 %v3952
    %v3954 = vcvt.f32.s32 %v3948
    %v3955 = vshll.u32 %v3954, 16
    %v3956 = vadd.s32 %v3955, %v3953
    %v3957 = vand.u32 %v3928, 65535
    %v3958 = vshra.s32 %v3928, 16
    %v3959 = vcvt.s32.f32 %v3957
    %v3960 = vcvt.s32.f32 %v3958
    %3961 = vmax.xlane.f32.xlu0 %v3960
    %v3962 = vpop.xlane.xlu0 %3961
    %vm3963 = vcmp.eq.f32.partialorder %v3960, %v3962
    %v3964 = vsel %vm3963, %v3959, -inf
    %3965 = vmax.xlane.f32.xlu0 %v3964
    %v3966 = vpop.xlane.xlu0 %3965
    %v3967 = vcvt.f32.s32 %v3966
    %v3968 = vcvt.f32.s32 %v3962
    %v3969 = vshll.u32 %v3968, 16
    %v3970 = vadd.s32 %v3969, %v3967
    %v3971 = vand.u32 %v3929, 65535
    %v3972 = vshra.s32 %v3929, 16
    %v3973 = vcvt.s32.f32 %v3971
    %v3974 = vcvt.s32.f32 %v3972
    %3975 = vmax.xlane.f32.xlu0 %v3974
    %v3976 = vpop.xlane.xlu0 %3975
    %vm3977 = vcmp.eq.f32.partialorder %v3974, %v3976
    %v3978 = vsel %vm3977, %v3973, -inf
    %3979 = vmax.xlane.f32.xlu0 %v3978
    %v3980 = vpop.xlane.xlu0 %3979
    %v3981 = vcvt.f32.s32 %v3980
    %v3982 = vcvt.f32.s32 %v3976
    %v3983 = vshll.u32 %v3982, 16
    %v3984 = vadd.s32 %v3983, %v3981
    %v3985 = vand.u32 %v3930, 65535
    %v3986 = vshra.s32 %v3930, 16
    %v3987 = vcvt.s32.f32 %v3985
    %v3988 = vcvt.s32.f32 %v3986
    %3989 = vmax.xlane.f32.xlu0 %v3988
    %v3990 = vpop.xlane.xlu0 %3989
    %vm3991 = vcmp.eq.f32.partialorder %v3988, %v3990
    %v3992 = vsel %vm3991, %v3987, -inf
    %3993 = vmax.xlane.f32.xlu0 %v3992
    %v3994 = vpop.xlane.xlu0 %3993
    %v3995 = vcvt.f32.s32 %v3994
    %v3996 = vcvt.f32.s32 %v3990
    %v3997 = vshll.u32 %v3996, 16
    %v3998 = vadd.s32 %v3997, %v3995
    %v3999 = vand.u32 %v3931, 65535
    %v4000 = vshra.s32 %v3931, 16
    %v4001 = vcvt.s32.f32 %v3999
    %v4002 = vcvt.s32.f32 %v4000
    %4003 = vmax.xlane.f32.xlu0 %v4002
    %v4004 = vpop.xlane.xlu0 %4003
    %vm4005 = vcmp.eq.f32.partialorder %v4002, %v4004
    %v4006 = vsel %vm4005, %v4001, -inf
    %4007 = vmax.xlane.f32.xlu0 %v4006
    %v4008 = vpop.xlane.xlu0 %4007
    %v4009 = vcvt.f32.s32 %v4008
    %v4010 = vcvt.f32.s32 %v4004
    %v4011 = vshll.u32 %v4010, 16
    %v4012 = vadd.s32 %v4011, %v4009
    %v4013 = vand.u32 %v3932, 65535
    %v4014 = vshra.s32 %v3932, 16
    %v4015 = vcvt.s32.f32 %v4013
    %v4016 = vcvt.s32.f32 %v4014
    %4017 = vmax.xlane.f32.xlu0 %v4016
    %v4018 = vpop.xlane.xlu0 %4017
    %vm4019 = vcmp.eq.f32.partialorder %v4016, %v4018
    %v4020 = vsel %vm4019, %v4015, -inf
    %4021 = vmax.xlane.f32.xlu0 %v4020
    %v4022 = vpop.xlane.xlu0 %4021
    %v4023 = vcvt.f32.s32 %v4022
    %v4024 = vcvt.f32.s32 %v4018
    %v4025 = vshll.u32 %v4024, 16
    %v4026 = vadd.s32 %v4025, %v4023
    %v4027 = vand.u32 %v3933, 65535
    %v4028 = vshra.s32 %v3933, 16
    %v4029 = vcvt.s32.f32 %v4027
    %v4030 = vcvt.s32.f32 %v4028
    %4031 = vmax.xlane.f32.xlu0 %v4030
    %v4032 = vpop.xlane.xlu0 %4031
    %vm4033 = vcmp.eq.f32.partialorder %v4030, %v4032
    %v4034 = vsel %vm4033, %v4029, -inf
    %4035 = vmax.xlane.f32.xlu0 %v4034
    %v4036 = vpop.xlane.xlu0 %4035
    %v4037 = vcvt.f32.s32 %v4036
    %v4038 = vcvt.f32.s32 %v4032
    %v4039 = vshll.u32 %v4038, 16
    %v4040 = vadd.s32 %v4039, %v4037
    %v4041 = vand.u32 %v3934, 65535
    %v4042 = vshra.s32 %v3934, 16
    %v4043 = vcvt.s32.f32 %v4041
    %v4044 = vcvt.s32.f32 %v4042
    %4045 = vmax.xlane.f32.xlu0 %v4044
    %v4046 = vpop.xlane.xlu0 %4045
    %vm4047 = vcmp.eq.f32.partialorder %v4044, %v4046
    %v4048 = vsel %vm4047, %v4043, -inf
    %4049 = vmax.xlane.f32.xlu0 %v4048
    %v4050 = vpop.xlane.xlu0 %4049
    %v4051 = vcvt.f32.s32 %v4050
    %v4052 = vcvt.f32.s32 %v4046
    %v4053 = vshll.u32 %v4052, 16
    %v4054 = vadd.s32 %v4053, %v4051
    %v4055 = vand.u32 %v3935, 65535
    %v4056 = vshra.s32 %v3935, 16
    %v4057 = vcvt.s32.f32 %v4055
    %v4058 = vcvt.s32.f32 %v4056
    %4059 = vmax.xlane.f32.xlu0 %v4058
    %v4060 = vpop.xlane.xlu0 %4059
    %vm4061 = vcmp.eq.f32.partialorder %v4058, %v4060
    %v4062 = vsel %vm4061, %v4057, -inf
    %4063 = vmax.xlane.f32.xlu0 %v4062
    %v4064 = vpop.xlane.xlu0 %4063
    %v4065 = vcvt.f32.s32 %v4064
    %v4066 = vcvt.f32.s32 %v4060
    %v4067 = vshll.u32 %v4066, 16
    %v4068 = vadd.s32 %v4067, %v4065
    %v4069 = vand.u32 %v3936, 65535
    %v4070 = vshra.s32 %v3936, 16
    %v4071 = vcvt.s32.f32 %v4069
    %v4072 = vcvt.s32.f32 %v4070
    %4073 = vmax.xlane.f32.xlu0 %v4072
    %v4074 = vpop.xlane.xlu0 %4073
    %vm4075 = vcmp.eq.f32.partialorder %v4072, %v4074
    %v4076 = vsel %vm4075, %v4071, -inf
    %4077 = vmax.xlane.f32.xlu0 %v4076
    %v4078 = vpop.xlane.xlu0 %4077
    %v4079 = vcvt.f32.s32 %v4078
    %v4080 = vcvt.f32.s32 %v4074
    %v4081 = vshll.u32 %v4080, 16
    %v4082 = vadd.s32 %v4081, %v4079
    %v4083 = vand.u32 %v3937, 65535
    %v4084 = vshra.s32 %v3937, 16
    %v4085 = vcvt.s32.f32 %v4083
    %v4086 = vcvt.s32.f32 %v4084
    %4087 = vmax.xlane.f32.xlu0 %v4086
    %v4088 = vpop.xlane.xlu0 %4087
    %vm4089 = vcmp.eq.f32.partialorder %v4086, %v4088
    %v4090 = vsel %vm4089, %v4085, -inf
    %4091 = vmax.xlane.f32.xlu0 %v4090
    %v4092 = vpop.xlane.xlu0 %4091
    %v4093 = vcvt.f32.s32 %v4092
    %v4094 = vcvt.f32.s32 %v4088
    %v4095 = vshll.u32 %v4094, 16
    %v4096 = vadd.s32 %v4095, %v4093
    %v4097 = vand.u32 %v3938, 65535
    %v4098 = vshra.s32 %v3938, 16
    %v4099 = vcvt.s32.f32 %v4097
    %v4100 = vcvt.s32.f32 %v4098
    %4101 = vmax.xlane.f32.xlu0 %v4100
    %v4102 = vpop.xlane.xlu0 %4101
    %vm4103 = vcmp.eq.f32.partialorder %v4100, %v4102
    %v4104 = vsel %vm4103, %v4099, -inf
    %4105 = vmax.xlane.f32.xlu0 %v4104
    %v4106 = vpop.xlane.xlu0 %4105
    %v4107 = vcvt.f32.s32 %v4106
    %v4108 = vcvt.f32.s32 %v4102
    %v4109 = vshll.u32 %v4108, 16
    %v4110 = vadd.s32 %v4109, %v4107
    %v4111 = vand.u32 %v3939, 65535
    %v4112 = vshra.s32 %v3939, 16
    %v4113 = vcvt.s32.f32 %v4111
    %v4114 = vcvt.s32.f32 %v4112
    %4115 = vmax.xlane.f32.xlu0 %v4114
    %v4116 = vpop.xlane.xlu0 %4115
    %vm4117 = vcmp.eq.f32.partialorder %v4114, %v4116
    %v4118 = vsel %vm4117, %v4113, -inf
    %4119 = vmax.xlane.f32.xlu0 %v4118
    %v4120 = vpop.xlane.xlu0 %4119
    %v4121 = vcvt.f32.s32 %v4120
    %v4122 = vcvt.f32.s32 %v4116
    %v4123 = vshll.u32 %v4122, 16
    %v4124 = vadd.s32 %v4123, %v4121
    %v4125 = vand.u32 %v3940, 65535
    %v4126 = vshra.s32 %v3940, 16
    %v4127 = vcvt.s32.f32 %v4125
    %v4128 = vcvt.s32.f32 %v4126
    %4129 = vmax.xlane.f32.xlu0 %v4128
    %v4130 = vpop.xlane.xlu0 %4129
    %vm4131 = vcmp.eq.f32.partialorder %v4128, %v4130
    %v4132 = vsel %vm4131, %v4127, -inf
    %4133 = vmax.xlane.f32.xlu0 %v4132
    %v4134 = vpop.xlane.xlu0 %4133
    %v4135 = vcvt.f32.s32 %v4134
    %v4136 = vcvt.f32.s32 %v4130
    %v4137 = vshll.u32 %v4136, 16
    %v4138 = vadd.s32 %v4137, %v4135
    %v4139 = vand.u32 %v3941, 65535
    %v4140 = vshra.s32 %v3941, 16
    %v4141 = vcvt.s32.f32 %v4139
    %v4142 = vcvt.s32.f32 %v4140
    %4143 = vmax.xlane.f32.xlu0 %v4142
    %v4144 = vpop.xlane.xlu0 %4143
    %vm4145 = vcmp.eq.f32.partialorder %v4142, %v4144
    %v4146 = vsel %vm4145, %v4141, -inf
    %4147 = vmax.xlane.f32.xlu0 %v4146
    %v4148 = vpop.xlane.xlu0 %4147
    %v4149 = vcvt.f32.s32 %v4148
    %v4150 = vcvt.f32.s32 %v4144
    %v4151 = vshll.u32 %v4150, 16
    %v4152 = vadd.s32 %v4151, %v4149
    %v4153 = vand.u32 %v3942, 65535
    %v4154 = vshra.s32 %v3942, 16
    %v4155 = vcvt.s32.f32 %v4153
    %v4156 = vcvt.s32.f32 %v4154
    %4157 = vmax.xlane.f32.xlu0 %v4156
    %v4158 = vpop.xlane.xlu0 %4157
    %vm4159 = vcmp.eq.f32.partialorder %v4156, %v4158
    %v4160 = vsel %vm4159, %v4155, -inf
    %4161 = vmax.xlane.f32.xlu0 %v4160
    %v4162 = vpop.xlane.xlu0 %4161
    %v4163 = vcvt.f32.s32 %v4162
    %v4164 = vcvt.f32.s32 %v4158
    %v4165 = vshll.u32 %v4164, 16
    %v4166 = vadd.s32 %v4165, %v4163
    %vm4167 = vcmp.eq.s32.totalorder %v3927, %v3956
    %vm4168 = vcmp.eq.s32.totalorder %v3928, %v3970
    %vm4169 = vcmp.eq.s32.totalorder %v3929, %v3984
    %vm4170 = vcmp.eq.s32.totalorder %v3930, %v3998
    %vm4171 = vcmp.eq.s32.totalorder %v3931, %v4012
    %vm4172 = vcmp.eq.s32.totalorder %v3932, %v4026
    %vm4173 = vcmp.eq.s32.totalorder %v3933, %v4040
    %vm4174 = vcmp.eq.s32.totalorder %v3934, %v4054
    %vm4175 = vcmp.eq.s32.totalorder %v3935, %v4068
    %vm4176 = vcmp.eq.s32.totalorder %v3936, %v4082
    %vm4177 = vcmp.eq.s32.totalorder %v3937, %v4096
    %vm4178 = vcmp.eq.s32.totalorder %v3938, %v4110
    %vm4179 = vcmp.eq.s32.totalorder %v3939, %v4124
    %vm4180 = vcmp.eq.s32.totalorder %v3940, %v4138
    %vm4181 = vcmp.eq.s32.totalorder %v3941, %v4152
    %vm4182 = vcmp.eq.s32.totalorder %v3942, %v4166
    %v4183 = vsel %vm4167, %v351, 128
    %v4184 = vsel %vm4168, %v351, 128
    %v4185 = vsel %vm4169, %v351, 128
    %v4186 = vsel %vm4170, %v351, 128
    %v4187 = vsel %vm4171, %v351, 128
    %v4188 = vsel %vm4172, %v351, 128
    %v4189 = vsel %vm4173, %v351, 128
    %v4190 = vsel %vm4174, %v351, 128
    %v4191 = vsel %vm4175, %v351, 128
    %v4192 = vsel %vm4176, %v351, 128
    %v4193 = vsel %vm4177, %v351, 128
    %v4194 = vsel %vm4178, %v351, 128
    %v4195 = vsel %vm4179, %v351, 128
    %v4196 = vsel %vm4180, %v351, 128
    %v4197 = vsel %vm4181, %v351, 128
    %v4198 = vsel %vm4182, %v351, 128
    %v4199 = vand.u32 %v4183, 65535
    %v4200 = vshra.s32 %v4183, 16
    %v4201 = vcvt.s32.f32 %v4199
    %v4202 = vcvt.s32.f32 %v4200
    %4203 = vmin.xlane.f32.xlu0 %v4202
    %v4204 = vpop.xlane.xlu0 %4203
    %vm4205 = vcmp.eq.f32.partialorder %v4202, %v4204
    %v4206 = vsel %vm4205, %v4201, inf
    %4207 = vmin.xlane.f32.xlu0 %v4206
    %v4208 = vpop.xlane.xlu0 %4207
    %v4209 = vcvt.f32.s32 %v4208
    %v4210 = vcvt.f32.s32 %v4204
    %v4211 = vshll.u32 %v4210, 16
    %v4212 = vadd.s32 %v4211, %v4209
    %v4213 = vand.u32 %v4184, 65535
    %v4214 = vshra.s32 %v4184, 16
    %v4215 = vcvt.s32.f32 %v4213
    %v4216 = vcvt.s32.f32 %v4214
    %4217 = vmin.xlane.f32.xlu0 %v4216
    %v4218 = vpop.xlane.xlu0 %4217
    %vm4219 = vcmp.eq.f32.partialorder %v4216, %v4218
    %v4220 = vsel %vm4219, %v4215, inf
    %4221 = vmin.xlane.f32.xlu0 %v4220
    %v4222 = vpop.xlane.xlu0 %4221
    %v4223 = vcvt.f32.s32 %v4222
    %v4224 = vcvt.f32.s32 %v4218
    %v4225 = vshll.u32 %v4224, 16
    %v4226 = vadd.s32 %v4225, %v4223
    %v4227 = vand.u32 %v4185, 65535
    %v4228 = vshra.s32 %v4185, 16
    %v4229 = vcvt.s32.f32 %v4227
    %v4230 = vcvt.s32.f32 %v4228
    %4231 = vmin.xlane.f32.xlu0 %v4230
    %v4232 = vpop.xlane.xlu0 %4231
    %vm4233 = vcmp.eq.f32.partialorder %v4230, %v4232
    %v4234 = vsel %vm4233, %v4229, inf
    %4235 = vmin.xlane.f32.xlu0 %v4234
    %v4236 = vpop.xlane.xlu0 %4235
    %v4237 = vcvt.f32.s32 %v4236
    %v4238 = vcvt.f32.s32 %v4232
    %v4239 = vshll.u32 %v4238, 16
    %v4240 = vadd.s32 %v4239, %v4237
    %v4241 = vand.u32 %v4186, 65535
    %v4242 = vshra.s32 %v4186, 16
    %v4243 = vcvt.s32.f32 %v4241
    %v4244 = vcvt.s32.f32 %v4242
    %4245 = vmin.xlane.f32.xlu0 %v4244
    %v4246 = vpop.xlane.xlu0 %4245
    %vm4247 = vcmp.eq.f32.partialorder %v4244, %v4246
    %v4248 = vsel %vm4247, %v4243, inf
    %4249 = vmin.xlane.f32.xlu0 %v4248
    %v4250 = vpop.xlane.xlu0 %4249
    %v4251 = vcvt.f32.s32 %v4250
    %v4252 = vcvt.f32.s32 %v4246
    %v4253 = vshll.u32 %v4252, 16
    %v4254 = vadd.s32 %v4253, %v4251
    %v4255 = vand.u32 %v4187, 65535
    %v4256 = vshra.s32 %v4187, 16
    %v4257 = vcvt.s32.f32 %v4255
    %v4258 = vcvt.s32.f32 %v4256
    %4259 = vmin.xlane.f32.xlu0 %v4258
    %v4260 = vpop.xlane.xlu0 %4259
    %vm4261 = vcmp.eq.f32.partialorder %v4258, %v4260
    %v4262 = vsel %vm4261, %v4257, inf
    %4263 = vmin.xlane.f32.xlu0 %v4262
    %v4264 = vpop.xlane.xlu0 %4263
    %v4265 = vcvt.f32.s32 %v4264
    %v4266 = vcvt.f32.s32 %v4260
    %v4267 = vshll.u32 %v4266, 16
    %v4268 = vadd.s32 %v4267, %v4265
    %v4269 = vand.u32 %v4188, 65535
    %v4270 = vshra.s32 %v4188, 16
    %v4271 = vcvt.s32.f32 %v4269
    %v4272 = vcvt.s32.f32 %v4270
    %4273 = vmin.xlane.f32.xlu0 %v4272
    %v4274 = vpop.xlane.xlu0 %4273
    %vm4275 = vcmp.eq.f32.partialorder %v4272, %v4274
    %v4276 = vsel %vm4275, %v4271, inf
    %4277 = vmin.xlane.f32.xlu0 %v4276
    %v4278 = vpop.xlane.xlu0 %4277
    %v4279 = vcvt.f32.s32 %v4278
    %v4280 = vcvt.f32.s32 %v4274
    %v4281 = vshll.u32 %v4280, 16
    %v4282 = vadd.s32 %v4281, %v4279
    %v4283 = vand.u32 %v4189, 65535
    %v4284 = vshra.s32 %v4189, 16
    %v4285 = vcvt.s32.f32 %v4283
    %v4286 = vcvt.s32.f32 %v4284
    %4287 = vmin.xlane.f32.xlu0 %v4286
    %v4288 = vpop.xlane.xlu0 %4287
    %vm4289 = vcmp.eq.f32.partialorder %v4286, %v4288
    %v4290 = vsel %vm4289, %v4285, inf
    %4291 = vmin.xlane.f32.xlu0 %v4290
    %v4292 = vpop.xlane.xlu0 %4291
    %v4293 = vcvt.f32.s32 %v4292
    %v4294 = vcvt.f32.s32 %v4288
    %v4295 = vshll.u32 %v4294, 16
    %v4296 = vadd.s32 %v4295, %v4293
    %v4297 = vand.u32 %v4190, 65535
    %v4298 = vshra.s32 %v4190, 16
    %v4299 = vcvt.s32.f32 %v4297
    %v4300 = vcvt.s32.f32 %v4298
    %4301 = vmin.xlane.f32.xlu0 %v4300
    %v4302 = vpop.xlane.xlu0 %4301
    %vm4303 = vcmp.eq.f32.partialorder %v4300, %v4302
    %v4304 = vsel %vm4303, %v4299, inf
    %4305 = vmin.xlane.f32.xlu0 %v4304
    %v4306 = vpop.xlane.xlu0 %4305
    %v4307 = vcvt.f32.s32 %v4306
    %v4308 = vcvt.f32.s32 %v4302
    %v4309 = vshll.u32 %v4308, 16
    %v4310 = vadd.s32 %v4309, %v4307
    %v4311 = vand.u32 %v4191, 65535
    %v4312 = vshra.s32 %v4191, 16
    %v4313 = vcvt.s32.f32 %v4311
    %v4314 = vcvt.s32.f32 %v4312
    %4315 = vmin.xlane.f32.xlu0 %v4314
    %v4316 = vpop.xlane.xlu0 %4315
    %vm4317 = vcmp.eq.f32.partialorder %v4314, %v4316
    %v4318 = vsel %vm4317, %v4313, inf
    %4319 = vmin.xlane.f32.xlu0 %v4318
    %v4320 = vpop.xlane.xlu0 %4319
    %v4321 = vcvt.f32.s32 %v4320
    %v4322 = vcvt.f32.s32 %v4316
    %v4323 = vshll.u32 %v4322, 16
    %v4324 = vadd.s32 %v4323, %v4321
    %v4325 = vand.u32 %v4192, 65535
    %v4326 = vshra.s32 %v4192, 16
    %v4327 = vcvt.s32.f32 %v4325
    %v4328 = vcvt.s32.f32 %v4326
    %4329 = vmin.xlane.f32.xlu0 %v4328
    %v4330 = vpop.xlane.xlu0 %4329
    %vm4331 = vcmp.eq.f32.partialorder %v4328, %v4330
    %v4332 = vsel %vm4331, %v4327, inf
    %4333 = vmin.xlane.f32.xlu0 %v4332
    %v4334 = vpop.xlane.xlu0 %4333
    %v4335 = vcvt.f32.s32 %v4334
    %v4336 = vcvt.f32.s32 %v4330
    %v4337 = vshll.u32 %v4336, 16
    %v4338 = vadd.s32 %v4337, %v4335
    %v4339 = vand.u32 %v4193, 65535
    %v4340 = vshra.s32 %v4193, 16
    %v4341 = vcvt.s32.f32 %v4339
    %v4342 = vcvt.s32.f32 %v4340
    %4343 = vmin.xlane.f32.xlu0 %v4342
    %v4344 = vpop.xlane.xlu0 %4343
    %vm4345 = vcmp.eq.f32.partialorder %v4342, %v4344
    %v4346 = vsel %vm4345, %v4341, inf
    %4347 = vmin.xlane.f32.xlu0 %v4346
    %v4348 = vpop.xlane.xlu0 %4347
    %v4349 = vcvt.f32.s32 %v4348
    %v4350 = vcvt.f32.s32 %v4344
    %v4351 = vshll.u32 %v4350, 16
    %v4352 = vadd.s32 %v4351, %v4349
    %v4353 = vand.u32 %v4194, 65535
    %v4354 = vshra.s32 %v4194, 16
    %v4355 = vcvt.s32.f32 %v4353
    %v4356 = vcvt.s32.f32 %v4354
    %4357 = vmin.xlane.f32.xlu0 %v4356
    %v4358 = vpop.xlane.xlu0 %4357
    %vm4359 = vcmp.eq.f32.partialorder %v4356, %v4358
    %v4360 = vsel %vm4359, %v4355, inf
    %4361 = vmin.xlane.f32.xlu0 %v4360
    %v4362 = vpop.xlane.xlu0 %4361
    %v4363 = vcvt.f32.s32 %v4362
    %v4364 = vcvt.f32.s32 %v4358
    %v4365 = vshll.u32 %v4364, 16
    %v4366 = vadd.s32 %v4365, %v4363
    %v4367 = vand.u32 %v4195, 65535
    %v4368 = vshra.s32 %v4195, 16
    %v4369 = vcvt.s32.f32 %v4367
    %v4370 = vcvt.s32.f32 %v4368
    %4371 = vmin.xlane.f32.xlu0 %v4370
    %v4372 = vpop.xlane.xlu0 %4371
    %vm4373 = vcmp.eq.f32.partialorder %v4370, %v4372
    %v4374 = vsel %vm4373, %v4369, inf
    %4375 = vmin.xlane.f32.xlu0 %v4374
    %v4376 = vpop.xlane.xlu0 %4375
    %v4377 = vcvt.f32.s32 %v4376
    %v4378 = vcvt.f32.s32 %v4372
    %v4379 = vshll.u32 %v4378, 16
    %v4380 = vadd.s32 %v4379, %v4377
    %v4381 = vand.u32 %v4196, 65535
    %v4382 = vshra.s32 %v4196, 16
    %v4383 = vcvt.s32.f32 %v4381
    %v4384 = vcvt.s32.f32 %v4382
    %4385 = vmin.xlane.f32.xlu0 %v4384
    %v4386 = vpop.xlane.xlu0 %4385
    %vm4387 = vcmp.eq.f32.partialorder %v4384, %v4386
    %v4388 = vsel %vm4387, %v4383, inf
    %4389 = vmin.xlane.f32.xlu0 %v4388
    %v4390 = vpop.xlane.xlu0 %4389
    %v4391 = vcvt.f32.s32 %v4390
    %v4392 = vcvt.f32.s32 %v4386
    %v4393 = vshll.u32 %v4392, 16
    %v4394 = vadd.s32 %v4393, %v4391
    %v4395 = vand.u32 %v4197, 65535
    %v4396 = vshra.s32 %v4197, 16
    %v4397 = vcvt.s32.f32 %v4395
    %v4398 = vcvt.s32.f32 %v4396
    %4399 = vmin.xlane.f32.xlu0 %v4398
    %v4400 = vpop.xlane.xlu0 %4399
    %vm4401 = vcmp.eq.f32.partialorder %v4398, %v4400
    %v4402 = vsel %vm4401, %v4397, inf
    %4403 = vmin.xlane.f32.xlu0 %v4402
    %v4404 = vpop.xlane.xlu0 %4403
    %v4405 = vcvt.f32.s32 %v4404
    %v4406 = vcvt.f32.s32 %v4400
    %v4407 = vshll.u32 %v4406, 16
    %v4408 = vadd.s32 %v4407, %v4405
    %v4409 = vand.u32 %v4198, 65535
    %v4410 = vshra.s32 %v4198, 16
    %v4411 = vcvt.s32.f32 %v4409
    %v4412 = vcvt.s32.f32 %v4410
    %4413 = vmin.xlane.f32.xlu0 %v4412
    %v4414 = vpop.xlane.xlu0 %4413
    %vm4415 = vcmp.eq.f32.partialorder %v4412, %v4414
    %v4416 = vsel %vm4415, %v4411, inf
    %4417 = vmin.xlane.f32.xlu0 %v4416
    %v4418 = vpop.xlane.xlu0 %4417
    %v4419 = vcvt.f32.s32 %v4418
    %v4420 = vcvt.f32.s32 %v4414
    %v4421 = vshll.u32 %v4420, 16
    %v4422 = vadd.s32 %v4421, %v4419
    %vm4423 = vcmp.eq.s32.totalorder %v351, 7
    %v4424 = vsel %vm4423, %v4212, %v3911
    %v4425 = vsel %vm4423, %v4226, %v3912
    %v4426 = vsel %vm4423, %v4240, %v3913
    %v4427 = vsel %vm4423, %v4254, %v3914
    %v4428 = vsel %vm4423, %v4268, %v3915
    %v4429 = vsel %vm4423, %v4282, %v3916
    %v4430 = vsel %vm4423, %v4296, %v3917
    %v4431 = vsel %vm4423, %v4310, %v3918
    %v4432 = vsel %vm4423, %v4324, %v3919
    %v4433 = vsel %vm4423, %v4338, %v3920
    %v4434 = vsel %vm4423, %v4352, %v3921
    %v4435 = vsel %vm4423, %v4366, %v3922
    %v4436 = vsel %vm4423, %v4380, %v3923
    %v4437 = vsel %vm4423, %v4394, %v3924
    %v4438 = vsel %vm4423, %v4408, %v3925
    %v4439 = vsel %vm4423, %v4422, %v3926
    %v4440 = vsel %vm4167, 2147483648, %v3927
    %v4441 = vsel %vm4168, 2147483648, %v3928
    %v4442 = vsel %vm4169, 2147483648, %v3929
    %v4443 = vsel %vm4170, 2147483648, %v3930
    %v4444 = vsel %vm4171, 2147483648, %v3931
    %v4445 = vsel %vm4172, 2147483648, %v3932
    %v4446 = vsel %vm4173, 2147483648, %v3933
    %v4447 = vsel %vm4174, 2147483648, %v3934
    %v4448 = vsel %vm4175, 2147483648, %v3935
    %v4449 = vsel %vm4176, 2147483648, %v3936
    %v4450 = vsel %vm4177, 2147483648, %v3937
    %v4451 = vsel %vm4178, 2147483648, %v3938
    %v4452 = vsel %vm4179, 2147483648, %v3939
    %v4453 = vsel %vm4180, 2147483648, %v3940
    %v4454 = vsel %vm4181, 2147483648, %v3941
    %v4455 = vsel %vm4182, 2147483648, %v3942
    %v4456 = vand.u32 %v4440, 65535
    %v4457 = vshra.s32 %v4440, 16
    %v4458 = vcvt.s32.f32 %v4456
    %v4459 = vcvt.s32.f32 %v4457
    %4460 = vmax.xlane.f32.xlu0 %v4459
    %v4461 = vpop.xlane.xlu0 %4460
    %vm4462 = vcmp.eq.f32.partialorder %v4459, %v4461
    %v4463 = vsel %vm4462, %v4458, -inf
    %4464 = vmax.xlane.f32.xlu0 %v4463
    %v4465 = vpop.xlane.xlu0 %4464
    %v4466 = vcvt.f32.s32 %v4465
    %v4467 = vcvt.f32.s32 %v4461
    %v4468 = vshll.u32 %v4467, 16
    %v4469 = vadd.s32 %v4468, %v4466
    %v4470 = vand.u32 %v4441, 65535
    %v4471 = vshra.s32 %v4441, 16
    %v4472 = vcvt.s32.f32 %v4470
    %v4473 = vcvt.s32.f32 %v4471
    %4474 = vmax.xlane.f32.xlu0 %v4473
    %v4475 = vpop.xlane.xlu0 %4474
    %vm4476 = vcmp.eq.f32.partialorder %v4473, %v4475
    %v4477 = vsel %vm4476, %v4472, -inf
    %4478 = vmax.xlane.f32.xlu0 %v4477
    %v4479 = vpop.xlane.xlu0 %4478
    %v4480 = vcvt.f32.s32 %v4479
    %v4481 = vcvt.f32.s32 %v4475
    %v4482 = vshll.u32 %v4481, 16
    %v4483 = vadd.s32 %v4482, %v4480
    %v4484 = vand.u32 %v4442, 65535
    %v4485 = vshra.s32 %v4442, 16
    %v4486 = vcvt.s32.f32 %v4484
    %v4487 = vcvt.s32.f32 %v4485
    %4488 = vmax.xlane.f32.xlu0 %v4487
    %v4489 = vpop.xlane.xlu0 %4488
    %vm4490 = vcmp.eq.f32.partialorder %v4487, %v4489
    %v4491 = vsel %vm4490, %v4486, -inf
    %4492 = vmax.xlane.f32.xlu0 %v4491
    %v4493 = vpop.xlane.xlu0 %4492
    %v4494 = vcvt.f32.s32 %v4493
    %v4495 = vcvt.f32.s32 %v4489
    %v4496 = vshll.u32 %v4495, 16
    %v4497 = vadd.s32 %v4496, %v4494
    %v4498 = vand.u32 %v4443, 65535
    %v4499 = vshra.s32 %v4443, 16
    %v4500 = vcvt.s32.f32 %v4498
    %v4501 = vcvt.s32.f32 %v4499
    %4502 = vmax.xlane.f32.xlu0 %v4501
    %v4503 = vpop.xlane.xlu0 %4502
    %vm4504 = vcmp.eq.f32.partialorder %v4501, %v4503
    %v4505 = vsel %vm4504, %v4500, -inf
    %4506 = vmax.xlane.f32.xlu0 %v4505
    %v4507 = vpop.xlane.xlu0 %4506
    %v4508 = vcvt.f32.s32 %v4507
    %v4509 = vcvt.f32.s32 %v4503
    %v4510 = vshll.u32 %v4509, 16
    %v4511 = vadd.s32 %v4510, %v4508
    %v4512 = vand.u32 %v4444, 65535
    %v4513 = vshra.s32 %v4444, 16
    %v4514 = vcvt.s32.f32 %v4512
    %v4515 = vcvt.s32.f32 %v4513
    %4516 = vmax.xlane.f32.xlu0 %v4515
    %v4517 = vpop.xlane.xlu0 %4516
    %vm4518 = vcmp.eq.f32.partialorder %v4515, %v4517
    %v4519 = vsel %vm4518, %v4514, -inf
    %4520 = vmax.xlane.f32.xlu0 %v4519
    %v4521 = vpop.xlane.xlu0 %4520
    %v4522 = vcvt.f32.s32 %v4521
    %v4523 = vcvt.f32.s32 %v4517
    %v4524 = vshll.u32 %v4523, 16
    %v4525 = vadd.s32 %v4524, %v4522
    %v4526 = vand.u32 %v4445, 65535
    %v4527 = vshra.s32 %v4445, 16
    %v4528 = vcvt.s32.f32 %v4526
    %v4529 = vcvt.s32.f32 %v4527
    %4530 = vmax.xlane.f32.xlu0 %v4529
    %v4531 = vpop.xlane.xlu0 %4530
    %vm4532 = vcmp.eq.f32.partialorder %v4529, %v4531
    %v4533 = vsel %vm4532, %v4528, -inf
    %4534 = vmax.xlane.f32.xlu0 %v4533
    %v4535 = vpop.xlane.xlu0 %4534
    %v4536 = vcvt.f32.s32 %v4535
    %v4537 = vcvt.f32.s32 %v4531
    %v4538 = vshll.u32 %v4537, 16
    %v4539 = vadd.s32 %v4538, %v4536
    %v4540 = vand.u32 %v4446, 65535
    %v4541 = vshra.s32 %v4446, 16
    %v4542 = vcvt.s32.f32 %v4540
    %v4543 = vcvt.s32.f32 %v4541
    %4544 = vmax.xlane.f32.xlu0 %v4543
    %v4545 = vpop.xlane.xlu0 %4544
    %vm4546 = vcmp.eq.f32.partialorder %v4543, %v4545
    %v4547 = vsel %vm4546, %v4542, -inf
    %4548 = vmax.xlane.f32.xlu0 %v4547
    %v4549 = vpop.xlane.xlu0 %4548
    %v4550 = vcvt.f32.s32 %v4549
    %v4551 = vcvt.f32.s32 %v4545
    %v4552 = vshll.u32 %v4551, 16
    %v4553 = vadd.s32 %v4552, %v4550
    %v4554 = vand.u32 %v4447, 65535
    %v4555 = vshra.s32 %v4447, 16
    %v4556 = vcvt.s32.f32 %v4554
    %v4557 = vcvt.s32.f32 %v4555
    %4558 = vmax.xlane.f32.xlu0 %v4557
    %v4559 = vpop.xlane.xlu0 %4558
    %vm4560 = vcmp.eq.f32.partialorder %v4557, %v4559
    %v4561 = vsel %vm4560, %v4556, -inf
    %4562 = vmax.xlane.f32.xlu0 %v4561
    %v4563 = vpop.xlane.xlu0 %4562
    %v4564 = vcvt.f32.s32 %v4563
    %v4565 = vcvt.f32.s32 %v4559
    %v4566 = vshll.u32 %v4565, 16
    %v4567 = vadd.s32 %v4566, %v4564
    %v4568 = vand.u32 %v4448, 65535
    %v4569 = vshra.s32 %v4448, 16
    %v4570 = vcvt.s32.f32 %v4568
    %v4571 = vcvt.s32.f32 %v4569
    %4572 = vmax.xlane.f32.xlu0 %v4571
    %v4573 = vpop.xlane.xlu0 %4572
    %vm4574 = vcmp.eq.f32.partialorder %v4571, %v4573
    %v4575 = vsel %vm4574, %v4570, -inf
    %4576 = vmax.xlane.f32.xlu0 %v4575
    %v4577 = vpop.xlane.xlu0 %4576
    %v4578 = vcvt.f32.s32 %v4577
    %v4579 = vcvt.f32.s32 %v4573
    %v4580 = vshll.u32 %v4579, 16
    %v4581 = vadd.s32 %v4580, %v4578
    %v4582 = vand.u32 %v4449, 65535
    %v4583 = vshra.s32 %v4449, 16
    %v4584 = vcvt.s32.f32 %v4582
    %v4585 = vcvt.s32.f32 %v4583
    %4586 = vmax.xlane.f32.xlu0 %v4585
    %v4587 = vpop.xlane.xlu0 %4586
    %vm4588 = vcmp.eq.f32.partialorder %v4585, %v4587
    %v4589 = vsel %vm4588, %v4584, -inf
    %4590 = vmax.xlane.f32.xlu0 %v4589
    %v4591 = vpop.xlane.xlu0 %4590
    %v4592 = vcvt.f32.s32 %v4591
    %v4593 = vcvt.f32.s32 %v4587
    %v4594 = vshll.u32 %v4593, 16
    %v4595 = vadd.s32 %v4594, %v4592
    %v4596 = vand.u32 %v4450, 65535
    %v4597 = vshra.s32 %v4450, 16
    %v4598 = vcvt.s32.f32 %v4596
    %v4599 = vcvt.s32.f32 %v4597
    %4600 = vmax.xlane.f32.xlu0 %v4599
    %v4601 = vpop.xlane.xlu0 %4600
    %vm4602 = vcmp.eq.f32.partialorder %v4599, %v4601
    %v4603 = vsel %vm4602, %v4598, -inf
    %4604 = vmax.xlane.f32.xlu0 %v4603
    %v4605 = vpop.xlane.xlu0 %4604
    %v4606 = vcvt.f32.s32 %v4605
    %v4607 = vcvt.f32.s32 %v4601
    %v4608 = vshll.u32 %v4607, 16
    %v4609 = vadd.s32 %v4608, %v4606
    %v4610 = vand.u32 %v4451, 65535
    %v4611 = vshra.s32 %v4451, 16
    %v4612 = vcvt.s32.f32 %v4610
    %v4613 = vcvt.s32.f32 %v4611
    %4614 = vmax.xlane.f32.xlu0 %v4613
    %v4615 = vpop.xlane.xlu0 %4614
    %vm4616 = vcmp.eq.f32.partialorder %v4613, %v4615
    %v4617 = vsel %vm4616, %v4612, -inf
    %4618 = vmax.xlane.f32.xlu0 %v4617
    %v4619 = vpop.xlane.xlu0 %4618
    %v4620 = vcvt.f32.s32 %v4619
    %v4621 = vcvt.f32.s32 %v4615
    %v4622 = vshll.u32 %v4621, 16
    %v4623 = vadd.s32 %v4622, %v4620
    %v4624 = vand.u32 %v4452, 65535
    %v4625 = vshra.s32 %v4452, 16
    %v4626 = vcvt.s32.f32 %v4624
    %v4627 = vcvt.s32.f32 %v4625
    %4628 = vmax.xlane.f32.xlu0 %v4627
    %v4629 = vpop.xlane.xlu0 %4628
    %vm4630 = vcmp.eq.f32.partialorder %v4627, %v4629
    %v4631 = vsel %vm4630, %v4626, -inf
    %4632 = vmax.xlane.f32.xlu0 %v4631
    %v4633 = vpop.xlane.xlu0 %4632
    %v4634 = vcvt.f32.s32 %v4633
    %v4635 = vcvt.f32.s32 %v4629
    %v4636 = vshll.u32 %v4635, 16
    %v4637 = vadd.s32 %v4636, %v4634
    %v4638 = vand.u32 %v4453, 65535
    %v4639 = vshra.s32 %v4453, 16
    %v4640 = vcvt.s32.f32 %v4638
    %v4641 = vcvt.s32.f32 %v4639
    %4642 = vmax.xlane.f32.xlu0 %v4641
    %v4643 = vpop.xlane.xlu0 %4642
    %vm4644 = vcmp.eq.f32.partialorder %v4641, %v4643
    %v4645 = vsel %vm4644, %v4640, -inf
    %4646 = vmax.xlane.f32.xlu0 %v4645
    %v4647 = vpop.xlane.xlu0 %4646
    %v4648 = vcvt.f32.s32 %v4647
    %v4649 = vcvt.f32.s32 %v4643
    %v4650 = vshll.u32 %v4649, 16
    %v4651 = vadd.s32 %v4650, %v4648
    %v4652 = vand.u32 %v4454, 65535
    %v4653 = vshra.s32 %v4454, 16
    %v4654 = vcvt.s32.f32 %v4652
    %v4655 = vcvt.s32.f32 %v4653
    %4656 = vmax.xlane.f32.xlu0 %v4655
    %v4657 = vpop.xlane.xlu0 %4656
    %vm4658 = vcmp.eq.f32.partialorder %v4655, %v4657
    %v4659 = vsel %vm4658, %v4654, -inf
    %4660 = vmax.xlane.f32.xlu0 %v4659
    %v4661 = vpop.xlane.xlu0 %4660
    %v4662 = vcvt.f32.s32 %v4661
    %v4663 = vcvt.f32.s32 %v4657
    %v4664 = vshll.u32 %v4663, 16
    %v4665 = vadd.s32 %v4664, %v4662
    %v4666 = vand.u32 %v4455, 65535
    %v4667 = vshra.s32 %v4455, 16
    %v4668 = vcvt.s32.f32 %v4666
    %v4669 = vcvt.s32.f32 %v4667
    %4670 = vmax.xlane.f32.xlu0 %v4669
    %v4671 = vpop.xlane.xlu0 %4670
    %vm4672 = vcmp.eq.f32.partialorder %v4669, %v4671
    %v4673 = vsel %vm4672, %v4668, -inf
    %4674 = vmax.xlane.f32.xlu0 %v4673
    %v4675 = vpop.xlane.xlu0 %4674
    %v4676 = vcvt.f32.s32 %v4675
    %v4677 = vcvt.f32.s32 %v4671
    %v4678 = vshll.u32 %v4677, 16
    %v4679 = vadd.s32 %v4678, %v4676
    %vm4680 = vcmp.eq.s32.totalorder %v4440, %v4469
    %vm4681 = vcmp.eq.s32.totalorder %v4441, %v4483
    %vm4682 = vcmp.eq.s32.totalorder %v4442, %v4497
    %vm4683 = vcmp.eq.s32.totalorder %v4443, %v4511
    %vm4684 = vcmp.eq.s32.totalorder %v4444, %v4525
    %vm4685 = vcmp.eq.s32.totalorder %v4445, %v4539
    %vm4686 = vcmp.eq.s32.totalorder %v4446, %v4553
    %vm4687 = vcmp.eq.s32.totalorder %v4447, %v4567
    %vm4688 = vcmp.eq.s32.totalorder %v4448, %v4581
    %vm4689 = vcmp.eq.s32.totalorder %v4449, %v4595
    %vm4690 = vcmp.eq.s32.totalorder %v4450, %v4609
    %vm4691 = vcmp.eq.s32.totalorder %v4451, %v4623
    %vm4692 = vcmp.eq.s32.totalorder %v4452, %v4637
    %vm4693 = vcmp.eq.s32.totalorder %v4453, %v4651
    %vm4694 = vcmp.eq.s32.totalorder %v4454, %v4665
    %vm4695 = vcmp.eq.s32.totalorder %v4455, %v4679
    %v4696 = vsel %vm4680, %v351, 128
    %v4697 = vsel %vm4681, %v351, 128
    %v4698 = vsel %vm4682, %v351, 128
    %v4699 = vsel %vm4683, %v351, 128
    %v4700 = vsel %vm4684, %v351, 128
    %v4701 = vsel %vm4685, %v351, 128
    %v4702 = vsel %vm4686, %v351, 128
    %v4703 = vsel %vm4687, %v351, 128
    %v4704 = vsel %vm4688, %v351, 128
    %v4705 = vsel %vm4689, %v351, 128
    %v4706 = vsel %vm4690, %v351, 128
    %v4707 = vsel %vm4691, %v351, 128
    %v4708 = vsel %vm4692, %v351, 128
    %v4709 = vsel %vm4693, %v351, 128
    %v4710 = vsel %vm4694, %v351, 128
    %v4711 = vsel %vm4695, %v351, 128
    %v4712 = vand.u32 %v4696, 65535
    %v4713 = vshra.s32 %v4696, 16
    %v4714 = vcvt.s32.f32 %v4712
    %v4715 = vcvt.s32.f32 %v4713
    %4716 = vmin.xlane.f32.xlu0 %v4715
    %v4717 = vpop.xlane.xlu0 %4716
    %vm4718 = vcmp.eq.f32.partialorder %v4715, %v4717
    %v4719 = vsel %vm4718, %v4714, inf
    %4720 = vmin.xlane.f32.xlu0 %v4719
    %v4721 = vpop.xlane.xlu0 %4720
    %v4722 = vcvt.f32.s32 %v4721
    %v4723 = vcvt.f32.s32 %v4717
    %v4724 = vshll.u32 %v4723, 16
    %v4725 = vadd.s32 %v4724, %v4722
    %v4726 = vand.u32 %v4697, 65535
    %v4727 = vshra.s32 %v4697, 16
    %v4728 = vcvt.s32.f32 %v4726
    %v4729 = vcvt.s32.f32 %v4727
    %4730 = vmin.xlane.f32.xlu0 %v4729
    %v4731 = vpop.xlane.xlu0 %4730
    %vm4732 = vcmp.eq.f32.partialorder %v4729, %v4731
    %v4733 = vsel %vm4732, %v4728, inf
    %4734 = vmin.xlane.f32.xlu0 %v4733
    %v4735 = vpop.xlane.xlu0 %4734
    %v4736 = vcvt.f32.s32 %v4735
    %v4737 = vcvt.f32.s32 %v4731
    %v4738 = vshll.u32 %v4737, 16
    %v4739 = vadd.s32 %v4738, %v4736
    %v4740 = vand.u32 %v4698, 65535
    %v4741 = vshra.s32 %v4698, 16
    %v4742 = vcvt.s32.f32 %v4740
    %v4743 = vcvt.s32.f32 %v4741
    %4744 = vmin.xlane.f32.xlu0 %v4743
    %v4745 = vpop.xlane.xlu0 %4744
    %vm4746 = vcmp.eq.f32.partialorder %v4743, %v4745
    %v4747 = vsel %vm4746, %v4742, inf
    %4748 = vmin.xlane.f32.xlu0 %v4747
    %v4749 = vpop.xlane.xlu0 %4748
    %v4750 = vcvt.f32.s32 %v4749
    %v4751 = vcvt.f32.s32 %v4745
    %v4752 = vshll.u32 %v4751, 16
    %v4753 = vadd.s32 %v4752, %v4750
    %v4754 = vand.u32 %v4699, 65535
    %v4755 = vshra.s32 %v4699, 16
    %v4756 = vcvt.s32.f32 %v4754
    %v4757 = vcvt.s32.f32 %v4755
    %4758 = vmin.xlane.f32.xlu0 %v4757
    %v4759 = vpop.xlane.xlu0 %4758
    %vm4760 = vcmp.eq.f32.partialorder %v4757, %v4759
    %v4761 = vsel %vm4760, %v4756, inf
    %4762 = vmin.xlane.f32.xlu0 %v4761
    %v4763 = vpop.xlane.xlu0 %4762
    %v4764 = vcvt.f32.s32 %v4763
    %v4765 = vcvt.f32.s32 %v4759
    %v4766 = vshll.u32 %v4765, 16
    %v4767 = vadd.s32 %v4766, %v4764
    %v4768 = vand.u32 %v4700, 65535
    %v4769 = vshra.s32 %v4700, 16
    %v4770 = vcvt.s32.f32 %v4768
    %v4771 = vcvt.s32.f32 %v4769
    %4772 = vmin.xlane.f32.xlu0 %v4771
    %v4773 = vpop.xlane.xlu0 %4772
    %vm4774 = vcmp.eq.f32.partialorder %v4771, %v4773
    %v4775 = vsel %vm4774, %v4770, inf
    %4776 = vmin.xlane.f32.xlu0 %v4775
    %v4777 = vpop.xlane.xlu0 %4776
    %v4778 = vcvt.f32.s32 %v4777
    %v4779 = vcvt.f32.s32 %v4773
    %v4780 = vshll.u32 %v4779, 16
    %v4781 = vadd.s32 %v4780, %v4778
    %v4782 = vand.u32 %v4701, 65535
    %v4783 = vshra.s32 %v4701, 16
    %v4784 = vcvt.s32.f32 %v4782
    %v4785 = vcvt.s32.f32 %v4783
    %4786 = vmin.xlane.f32.xlu0 %v4785
    %v4787 = vpop.xlane.xlu0 %4786
    %vm4788 = vcmp.eq.f32.partialorder %v4785, %v4787
    %v4789 = vsel %vm4788, %v4784, inf
    %4790 = vmin.xlane.f32.xlu0 %v4789
    %v4791 = vpop.xlane.xlu0 %4790
    %v4792 = vcvt.f32.s32 %v4791
    %v4793 = vcvt.f32.s32 %v4787
    %v4794 = vshll.u32 %v4793, 16
    %v4795 = vadd.s32 %v4794, %v4792
    %v4796 = vand.u32 %v4702, 65535
    %v4797 = vshra.s32 %v4702, 16
    %v4798 = vcvt.s32.f32 %v4796
    %v4799 = vcvt.s32.f32 %v4797
    %4800 = vmin.xlane.f32.xlu0 %v4799
    %v4801 = vpop.xlane.xlu0 %4800
    %vm4802 = vcmp.eq.f32.partialorder %v4799, %v4801
    %v4803 = vsel %vm4802, %v4798, inf
    %4804 = vmin.xlane.f32.xlu0 %v4803
    %v4805 = vpop.xlane.xlu0 %4804
    %v4806 = vcvt.f32.s32 %v4805
    %v4807 = vcvt.f32.s32 %v4801
    %v4808 = vshll.u32 %v4807, 16
    %v4809 = vadd.s32 %v4808, %v4806
    %v4810 = vand.u32 %v4703, 65535
    %v4811 = vshra.s32 %v4703, 16
    %v4812 = vcvt.s32.f32 %v4810
    %v4813 = vcvt.s32.f32 %v4811
    %4814 = vmin.xlane.f32.xlu0 %v4813
    %v4815 = vpop.xlane.xlu0 %4814
    %vm4816 = vcmp.eq.f32.partialorder %v4813, %v4815
    %v4817 = vsel %vm4816, %v4812, inf
    %4818 = vmin.xlane.f32.xlu0 %v4817
    %v4819 = vpop.xlane.xlu0 %4818
    %v4820 = vcvt.f32.s32 %v4819
    %v4821 = vcvt.f32.s32 %v4815
    %v4822 = vshll.u32 %v4821, 16
    %v4823 = vadd.s32 %v4822, %v4820
    %v4824 = vand.u32 %v4704, 65535
    %v4825 = vshra.s32 %v4704, 16
    %v4826 = vcvt.s32.f32 %v4824
    %v4827 = vcvt.s32.f32 %v4825
    %4828 = vmin.xlane.f32.xlu0 %v4827
    %v4829 = vpop.xlane.xlu0 %4828
    %vm4830 = vcmp.eq.f32.partialorder %v4827, %v4829
    %v4831 = vsel %vm4830, %v4826, inf
    %4832 = vmin.xlane.f32.xlu0 %v4831
    %v4833 = vpop.xlane.xlu0 %4832
    %v4834 = vcvt.f32.s32 %v4833
    %v4835 = vcvt.f32.s32 %v4829
    %v4836 = vshll.u32 %v4835, 16
    %v4837 = vadd.s32 %v4836, %v4834
    %v4838 = vand.u32 %v4705, 65535
    %v4839 = vshra.s32 %v4705, 16
    %v4840 = vcvt.s32.f32 %v4838
    %v4841 = vcvt.s32.f32 %v4839
    %4842 = vmin.xlane.f32.xlu0 %v4841
    %v4843 = vpop.xlane.xlu0 %4842
    %vm4844 = vcmp.eq.f32.partialorder %v4841, %v4843
    %v4845 = vsel %vm4844, %v4840, inf
    %4846 = vmin.xlane.f32.xlu0 %v4845
    %v4847 = vpop.xlane.xlu0 %4846
    %v4848 = vcvt.f32.s32 %v4847
    %v4849 = vcvt.f32.s32 %v4843
    %v4850 = vshll.u32 %v4849, 16
    %v4851 = vadd.s32 %v4850, %v4848
    %v4852 = vand.u32 %v4706, 65535
    %v4853 = vshra.s32 %v4706, 16
    %v4854 = vcvt.s32.f32 %v4852
    %v4855 = vcvt.s32.f32 %v4853
    %4856 = vmin.xlane.f32.xlu0 %v4855
    %v4857 = vpop.xlane.xlu0 %4856
    %vm4858 = vcmp.eq.f32.partialorder %v4855, %v4857
    %v4859 = vsel %vm4858, %v4854, inf
    %4860 = vmin.xlane.f32.xlu0 %v4859
    %v4861 = vpop.xlane.xlu0 %4860
    %v4862 = vcvt.f32.s32 %v4861
    %v4863 = vcvt.f32.s32 %v4857
    %v4864 = vshll.u32 %v4863, 16
    %v4865 = vadd.s32 %v4864, %v4862
    %v4866 = vand.u32 %v4707, 65535
    %v4867 = vshra.s32 %v4707, 16
    %v4868 = vcvt.s32.f32 %v4866
    %v4869 = vcvt.s32.f32 %v4867
    %4870 = vmin.xlane.f32.xlu0 %v4869
    %v4871 = vpop.xlane.xlu0 %4870
    %vm4872 = vcmp.eq.f32.partialorder %v4869, %v4871
    %v4873 = vsel %vm4872, %v4868, inf
    %4874 = vmin.xlane.f32.xlu0 %v4873
    %v4875 = vpop.xlane.xlu0 %4874
    %v4876 = vcvt.f32.s32 %v4875
    %v4877 = vcvt.f32.s32 %v4871
    %v4878 = vshll.u32 %v4877, 16
    %v4879 = vadd.s32 %v4878, %v4876
    %v4880 = vand.u32 %v4708, 65535
    %v4881 = vshra.s32 %v4708, 16
    %v4882 = vcvt.s32.f32 %v4880
    %v4883 = vcvt.s32.f32 %v4881
    %4884 = vmin.xlane.f32.xlu0 %v4883
    %v4885 = vpop.xlane.xlu0 %4884
    %vm4886 = vcmp.eq.f32.partialorder %v4883, %v4885
    %v4887 = vsel %vm4886, %v4882, inf
    %4888 = vmin.xlane.f32.xlu0 %v4887
    %v4889 = vpop.xlane.xlu0 %4888
    %v4890 = vcvt.f32.s32 %v4889
    %v4891 = vcvt.f32.s32 %v4885
    %v4892 = vshll.u32 %v4891, 16
    %v4893 = vadd.s32 %v4892, %v4890
    %v4894 = vand.u32 %v4709, 65535
    %v4895 = vshra.s32 %v4709, 16
    %v4896 = vcvt.s32.f32 %v4894
    %v4897 = vcvt.s32.f32 %v4895
    %4898 = vmin.xlane.f32.xlu0 %v4897
    %v4899 = vpop.xlane.xlu0 %4898
    %vm4900 = vcmp.eq.f32.partialorder %v4897, %v4899
    %v4901 = vsel %vm4900, %v4896, inf
    %4902 = vmin.xlane.f32.xlu0 %v4901
    %v4903 = vpop.xlane.xlu0 %4902
    %v4904 = vcvt.f32.s32 %v4903
    %v4905 = vcvt.f32.s32 %v4899
    %v4906 = vshll.u32 %v4905, 16
    %v4907 = vadd.s32 %v4906, %v4904
    %v4908 = vand.u32 %v4710, 65535
    %v4909 = vshra.s32 %v4710, 16
    %v4910 = vcvt.s32.f32 %v4908
    %v4911 = vcvt.s32.f32 %v4909
    %4912 = vmin.xlane.f32.xlu0 %v4911
    %v4913 = vpop.xlane.xlu0 %4912
    %vm4914 = vcmp.eq.f32.partialorder %v4911, %v4913
    %v4915 = vsel %vm4914, %v4910, inf
    %4916 = vmin.xlane.f32.xlu0 %v4915
    %v4917 = vpop.xlane.xlu0 %4916
    %v4918 = vcvt.f32.s32 %v4917
    %v4919 = vcvt.f32.s32 %v4913
    %v4920 = vshll.u32 %v4919, 16
    %v4921 = vadd.s32 %v4920, %v4918
    %v4922 = vand.u32 %v4711, 65535
    %v4923 = vshra.s32 %v4711, 16
    %v4924 = vcvt.s32.f32 %v4922
    %v4925 = vcvt.s32.f32 %v4923
    %4926 = vmin.xlane.f32.xlu0 %v4925
    %v4927 = vpop.xlane.xlu0 %4926
    %vm4928 = vcmp.eq.f32.partialorder %v4925, %v4927
    %v4929 = vsel %vm4928, %v4924, inf
    %4930 = vmin.xlane.f32.xlu0 %v4929
    %v4931 = vpop.xlane.xlu0 %4930
    %v4932 = vcvt.f32.s32 %v4931
    %v4933 = vcvt.f32.s32 %v4927
    %v4934 = vshll.u32 %v4933, 16
    %v4935 = vadd.s32 %v4934, %v4932
    %vm4936 = vcmp.eq.s32.totalorder %v351, 8
    %v4937 = vsel %vm4936, %v4725, %v4424
    %v4938 = vsel %vm4936, %v4739, %v4425
    %v4939 = vsel %vm4936, %v4753, %v4426
    %v4940 = vsel %vm4936, %v4767, %v4427
    %v4941 = vsel %vm4936, %v4781, %v4428
    %v4942 = vsel %vm4936, %v4795, %v4429
    %v4943 = vsel %vm4936, %v4809, %v4430
    %v4944 = vsel %vm4936, %v4823, %v4431
    %v4945 = vsel %vm4936, %v4837, %v4432
    %v4946 = vsel %vm4936, %v4851, %v4433
    %v4947 = vsel %vm4936, %v4865, %v4434
    %v4948 = vsel %vm4936, %v4879, %v4435
    %v4949 = vsel %vm4936, %v4893, %v4436
    %v4950 = vsel %vm4936, %v4907, %v4437
    %v4951 = vsel %vm4936, %v4921, %v4438
    %v4952 = vsel %vm4936, %v4935, %v4439
    %v4953 = vsel %vm4680, 2147483648, %v4440
    %v4954 = vsel %vm4681, 2147483648, %v4441
    %v4955 = vsel %vm4682, 2147483648, %v4442
    %v4956 = vsel %vm4683, 2147483648, %v4443
    %v4957 = vsel %vm4684, 2147483648, %v4444
    %v4958 = vsel %vm4685, 2147483648, %v4445
    %v4959 = vsel %vm4686, 2147483648, %v4446
    %v4960 = vsel %vm4687, 2147483648, %v4447
    %v4961 = vsel %vm4688, 2147483648, %v4448
    %v4962 = vsel %vm4689, 2147483648, %v4449
    %v4963 = vsel %vm4690, 2147483648, %v4450
    %v4964 = vsel %vm4691, 2147483648, %v4451
    %v4965 = vsel %vm4692, 2147483648, %v4452
    %v4966 = vsel %vm4693, 2147483648, %v4453
    %v4967 = vsel %vm4694, 2147483648, %v4454
    %v4968 = vsel %vm4695, 2147483648, %v4455
    %v4969 = vand.u32 %v4953, 65535
    %v4970 = vshra.s32 %v4953, 16
    %v4971 = vcvt.s32.f32 %v4969
    %v4972 = vcvt.s32.f32 %v4970
    %4973 = vmax.xlane.f32.xlu0 %v4972
    %v4974 = vpop.xlane.xlu0 %4973
    %vm4975 = vcmp.eq.f32.partialorder %v4972, %v4974
    %v4976 = vsel %vm4975, %v4971, -inf
    %4977 = vmax.xlane.f32.xlu0 %v4976
    %v4978 = vpop.xlane.xlu0 %4977
    %v4979 = vcvt.f32.s32 %v4978
    %v4980 = vcvt.f32.s32 %v4974
    %v4981 = vshll.u32 %v4980, 16
    %v4982 = vadd.s32 %v4981, %v4979
    %v4983 = vand.u32 %v4954, 65535
    %v4984 = vshra.s32 %v4954, 16
    %v4985 = vcvt.s32.f32 %v4983
    %v4986 = vcvt.s32.f32 %v4984
    %4987 = vmax.xlane.f32.xlu0 %v4986
    %v4988 = vpop.xlane.xlu0 %4987
    %vm4989 = vcmp.eq.f32.partialorder %v4986, %v4988
    %v4990 = vsel %vm4989, %v4985, -inf
    %4991 = vmax.xlane.f32.xlu0 %v4990
    %v4992 = vpop.xlane.xlu0 %4991
    %v4993 = vcvt.f32.s32 %v4992
    %v4994 = vcvt.f32.s32 %v4988
    %v4995 = vshll.u32 %v4994, 16
    %v4996 = vadd.s32 %v4995, %v4993
    %v4997 = vand.u32 %v4955, 65535
    %v4998 = vshra.s32 %v4955, 16
    %v4999 = vcvt.s32.f32 %v4997
    %v5000 = vcvt.s32.f32 %v4998
    %5001 = vmax.xlane.f32.xlu0 %v5000
    %v5002 = vpop.xlane.xlu0 %5001
    %vm5003 = vcmp.eq.f32.partialorder %v5000, %v5002
    %v5004 = vsel %vm5003, %v4999, -inf
    %5005 = vmax.xlane.f32.xlu0 %v5004
    %v5006 = vpop.xlane.xlu0 %5005
    %v5007 = vcvt.f32.s32 %v5006
    %v5008 = vcvt.f32.s32 %v5002
    %v5009 = vshll.u32 %v5008, 16
    %v5010 = vadd.s32 %v5009, %v5007
    %v5011 = vand.u32 %v4956, 65535
    %v5012 = vshra.s32 %v4956, 16
    %v5013 = vcvt.s32.f32 %v5011
    %v5014 = vcvt.s32.f32 %v5012
    %5015 = vmax.xlane.f32.xlu0 %v5014
    %v5016 = vpop.xlane.xlu0 %5015
    %vm5017 = vcmp.eq.f32.partialorder %v5014, %v5016
    %v5018 = vsel %vm5017, %v5013, -inf
    %5019 = vmax.xlane.f32.xlu0 %v5018
    %v5020 = vpop.xlane.xlu0 %5019
    %v5021 = vcvt.f32.s32 %v5020
    %v5022 = vcvt.f32.s32 %v5016
    %v5023 = vshll.u32 %v5022, 16
    %v5024 = vadd.s32 %v5023, %v5021
    %v5025 = vand.u32 %v4957, 65535
    %v5026 = vshra.s32 %v4957, 16
    %v5027 = vcvt.s32.f32 %v5025
    %v5028 = vcvt.s32.f32 %v5026
    %5029 = vmax.xlane.f32.xlu0 %v5028
    %v5030 = vpop.xlane.xlu0 %5029
    %vm5031 = vcmp.eq.f32.partialorder %v5028, %v5030
    %v5032 = vsel %vm5031, %v5027, -inf
    %5033 = vmax.xlane.f32.xlu0 %v5032
    %v5034 = vpop.xlane.xlu0 %5033
    %v5035 = vcvt.f32.s32 %v5034
    %v5036 = vcvt.f32.s32 %v5030
    %v5037 = vshll.u32 %v5036, 16
    %v5038 = vadd.s32 %v5037, %v5035
    %v5039 = vand.u32 %v4958, 65535
    %v5040 = vshra.s32 %v4958, 16
    %v5041 = vcvt.s32.f32 %v5039
    %v5042 = vcvt.s32.f32 %v5040
    %5043 = vmax.xlane.f32.xlu0 %v5042
    %v5044 = vpop.xlane.xlu0 %5043
    %vm5045 = vcmp.eq.f32.partialorder %v5042, %v5044
    %v5046 = vsel %vm5045, %v5041, -inf
    %5047 = vmax.xlane.f32.xlu0 %v5046
    %v5048 = vpop.xlane.xlu0 %5047
    %v5049 = vcvt.f32.s32 %v5048
    %v5050 = vcvt.f32.s32 %v5044
    %v5051 = vshll.u32 %v5050, 16
    %v5052 = vadd.s32 %v5051, %v5049
    %v5053 = vand.u32 %v4959, 65535
    %v5054 = vshra.s32 %v4959, 16
    %v5055 = vcvt.s32.f32 %v5053
    %v5056 = vcvt.s32.f32 %v5054
    %5057 = vmax.xlane.f32.xlu0 %v5056
    %v5058 = vpop.xlane.xlu0 %5057
    %vm5059 = vcmp.eq.f32.partialorder %v5056, %v5058
    %v5060 = vsel %vm5059, %v5055, -inf
    %5061 = vmax.xlane.f32.xlu0 %v5060
    %v5062 = vpop.xlane.xlu0 %5061
    %v5063 = vcvt.f32.s32 %v5062
    %v5064 = vcvt.f32.s32 %v5058
    %v5065 = vshll.u32 %v5064, 16
    %v5066 = vadd.s32 %v5065, %v5063
    %v5067 = vand.u32 %v4960, 65535
    %v5068 = vshra.s32 %v4960, 16
    %v5069 = vcvt.s32.f32 %v5067
    %v5070 = vcvt.s32.f32 %v5068
    %5071 = vmax.xlane.f32.xlu0 %v5070
    %v5072 = vpop.xlane.xlu0 %5071
    %vm5073 = vcmp.eq.f32.partialorder %v5070, %v5072
    %v5074 = vsel %vm5073, %v5069, -inf
    %5075 = vmax.xlane.f32.xlu0 %v5074
    %v5076 = vpop.xlane.xlu0 %5075
    %v5077 = vcvt.f32.s32 %v5076
    %v5078 = vcvt.f32.s32 %v5072
    %v5079 = vshll.u32 %v5078, 16
    %v5080 = vadd.s32 %v5079, %v5077
    %v5081 = vand.u32 %v4961, 65535
    %v5082 = vshra.s32 %v4961, 16
    %v5083 = vcvt.s32.f32 %v5081
    %v5084 = vcvt.s32.f32 %v5082
    %5085 = vmax.xlane.f32.xlu0 %v5084
    %v5086 = vpop.xlane.xlu0 %5085
    %vm5087 = vcmp.eq.f32.partialorder %v5084, %v5086
    %v5088 = vsel %vm5087, %v5083, -inf
    %5089 = vmax.xlane.f32.xlu0 %v5088
    %v5090 = vpop.xlane.xlu0 %5089
    %v5091 = vcvt.f32.s32 %v5090
    %v5092 = vcvt.f32.s32 %v5086
    %v5093 = vshll.u32 %v5092, 16
    %v5094 = vadd.s32 %v5093, %v5091
    %v5095 = vand.u32 %v4962, 65535
    %v5096 = vshra.s32 %v4962, 16
    %v5097 = vcvt.s32.f32 %v5095
    %v5098 = vcvt.s32.f32 %v5096
    %5099 = vmax.xlane.f32.xlu0 %v5098
    %v5100 = vpop.xlane.xlu0 %5099
    %vm5101 = vcmp.eq.f32.partialorder %v5098, %v5100
    %v5102 = vsel %vm5101, %v5097, -inf
    %5103 = vmax.xlane.f32.xlu0 %v5102
    %v5104 = vpop.xlane.xlu0 %5103
    %v5105 = vcvt.f32.s32 %v5104
    %v5106 = vcvt.f32.s32 %v5100
    %v5107 = vshll.u32 %v5106, 16
    %v5108 = vadd.s32 %v5107, %v5105
    %v5109 = vand.u32 %v4963, 65535
    %v5110 = vshra.s32 %v4963, 16
    %v5111 = vcvt.s32.f32 %v5109
    %v5112 = vcvt.s32.f32 %v5110
    %5113 = vmax.xlane.f32.xlu0 %v5112
    %v5114 = vpop.xlane.xlu0 %5113
    %vm5115 = vcmp.eq.f32.partialorder %v5112, %v5114
    %v5116 = vsel %vm5115, %v5111, -inf
    %5117 = vmax.xlane.f32.xlu0 %v5116
    %v5118 = vpop.xlane.xlu0 %5117
    %v5119 = vcvt.f32.s32 %v5118
    %v5120 = vcvt.f32.s32 %v5114
    %v5121 = vshll.u32 %v5120, 16
    %v5122 = vadd.s32 %v5121, %v5119
    %v5123 = vand.u32 %v4964, 65535
    %v5124 = vshra.s32 %v4964, 16
    %v5125 = vcvt.s32.f32 %v5123
    %v5126 = vcvt.s32.f32 %v5124
    %5127 = vmax.xlane.f32.xlu0 %v5126
    %v5128 = vpop.xlane.xlu0 %5127
    %vm5129 = vcmp.eq.f32.partialorder %v5126, %v5128
    %v5130 = vsel %vm5129, %v5125, -inf
    %5131 = vmax.xlane.f32.xlu0 %v5130
    %v5132 = vpop.xlane.xlu0 %5131
    %v5133 = vcvt.f32.s32 %v5132
    %v5134 = vcvt.f32.s32 %v5128
    %v5135 = vshll.u32 %v5134, 16
    %v5136 = vadd.s32 %v5135, %v5133
    %v5137 = vand.u32 %v4965, 65535
    %v5138 = vshra.s32 %v4965, 16
    %v5139 = vcvt.s32.f32 %v5137
    %v5140 = vcvt.s32.f32 %v5138
    %5141 = vmax.xlane.f32.xlu0 %v5140
    %v5142 = vpop.xlane.xlu0 %5141
    %vm5143 = vcmp.eq.f32.partialorder %v5140, %v5142
    %v5144 = vsel %vm5143, %v5139, -inf
    %5145 = vmax.xlane.f32.xlu0 %v5144
    %v5146 = vpop.xlane.xlu0 %5145
    %v5147 = vcvt.f32.s32 %v5146
    %v5148 = vcvt.f32.s32 %v5142
    %v5149 = vshll.u32 %v5148, 16
    %v5150 = vadd.s32 %v5149, %v5147
    %v5151 = vand.u32 %v4966, 65535
    %v5152 = vshra.s32 %v4966, 16
    %v5153 = vcvt.s32.f32 %v5151
    %v5154 = vcvt.s32.f32 %v5152
    %5155 = vmax.xlane.f32.xlu0 %v5154
    %v5156 = vpop.xlane.xlu0 %5155
    %vm5157 = vcmp.eq.f32.partialorder %v5154, %v5156
    %v5158 = vsel %vm5157, %v5153, -inf
    %5159 = vmax.xlane.f32.xlu0 %v5158
    %v5160 = vpop.xlane.xlu0 %5159
    %v5161 = vcvt.f32.s32 %v5160
    %v5162 = vcvt.f32.s32 %v5156
    %v5163 = vshll.u32 %v5162, 16
    %v5164 = vadd.s32 %v5163, %v5161
    %v5165 = vand.u32 %v4967, 65535
    %v5166 = vshra.s32 %v4967, 16
    %v5167 = vcvt.s32.f32 %v5165
    %v5168 = vcvt.s32.f32 %v5166
    %5169 = vmax.xlane.f32.xlu0 %v5168
    %v5170 = vpop.xlane.xlu0 %5169
    %vm5171 = vcmp.eq.f32.partialorder %v5168, %v5170
    %v5172 = vsel %vm5171, %v5167, -inf
    %5173 = vmax.xlane.f32.xlu0 %v5172
    %v5174 = vpop.xlane.xlu0 %5173
    %v5175 = vcvt.f32.s32 %v5174
    %v5176 = vcvt.f32.s32 %v5170
    %v5177 = vshll.u32 %v5176, 16
    %v5178 = vadd.s32 %v5177, %v5175
    %v5179 = vand.u32 %v4968, 65535
    %v5180 = vshra.s32 %v4968, 16
    %v5181 = vcvt.s32.f32 %v5179
    %v5182 = vcvt.s32.f32 %v5180
    %5183 = vmax.xlane.f32.xlu0 %v5182
    %v5184 = vpop.xlane.xlu0 %5183
    %vm5185 = vcmp.eq.f32.partialorder %v5182, %v5184
    %v5186 = vsel %vm5185, %v5181, -inf
    %5187 = vmax.xlane.f32.xlu0 %v5186
    %v5188 = vpop.xlane.xlu0 %5187
    %v5189 = vcvt.f32.s32 %v5188
    %v5190 = vcvt.f32.s32 %v5184
    %v5191 = vshll.u32 %v5190, 16
    %v5192 = vadd.s32 %v5191, %v5189
    %vm5193 = vcmp.eq.s32.totalorder %v4953, %v4982
    %vm5194 = vcmp.eq.s32.totalorder %v4954, %v4996
    %vm5195 = vcmp.eq.s32.totalorder %v4955, %v5010
    %vm5196 = vcmp.eq.s32.totalorder %v4956, %v5024
    %vm5197 = vcmp.eq.s32.totalorder %v4957, %v5038
    %vm5198 = vcmp.eq.s32.totalorder %v4958, %v5052
    %vm5199 = vcmp.eq.s32.totalorder %v4959, %v5066
    %vm5200 = vcmp.eq.s32.totalorder %v4960, %v5080
    %vm5201 = vcmp.eq.s32.totalorder %v4961, %v5094
    %vm5202 = vcmp.eq.s32.totalorder %v4962, %v5108
    %vm5203 = vcmp.eq.s32.totalorder %v4963, %v5122
    %vm5204 = vcmp.eq.s32.totalorder %v4964, %v5136
    %vm5205 = vcmp.eq.s32.totalorder %v4965, %v5150
    %vm5206 = vcmp.eq.s32.totalorder %v4966, %v5164
    %vm5207 = vcmp.eq.s32.totalorder %v4967, %v5178
    %vm5208 = vcmp.eq.s32.totalorder %v4968, %v5192
    %v5209 = vsel %vm5193, %v351, 128
    %v5210 = vsel %vm5194, %v351, 128
    %v5211 = vsel %vm5195, %v351, 128
    %v5212 = vsel %vm5196, %v351, 128
    %v5213 = vsel %vm5197, %v351, 128
    %v5214 = vsel %vm5198, %v351, 128
    %v5215 = vsel %vm5199, %v351, 128
    %v5216 = vsel %vm5200, %v351, 128
    %v5217 = vsel %vm5201, %v351, 128
    %v5218 = vsel %vm5202, %v351, 128
    %v5219 = vsel %vm5203, %v351, 128
    %v5220 = vsel %vm5204, %v351, 128
    %v5221 = vsel %vm5205, %v351, 128
    %v5222 = vsel %vm5206, %v351, 128
    %v5223 = vsel %vm5207, %v351, 128
    %v5224 = vsel %vm5208, %v351, 128
    %v5225 = vand.u32 %v5209, 65535
    %v5226 = vshra.s32 %v5209, 16
    %v5227 = vcvt.s32.f32 %v5225
    %v5228 = vcvt.s32.f32 %v5226
    %5229 = vmin.xlane.f32.xlu0 %v5228
    %v5230 = vpop.xlane.xlu0 %5229
    %vm5231 = vcmp.eq.f32.partialorder %v5228, %v5230
    %v5232 = vsel %vm5231, %v5227, inf
    %5233 = vmin.xlane.f32.xlu0 %v5232
    %v5234 = vpop.xlane.xlu0 %5233
    %v5235 = vcvt.f32.s32 %v5234
    %v5236 = vcvt.f32.s32 %v5230
    %v5237 = vshll.u32 %v5236, 16
    %v5238 = vadd.s32 %v5237, %v5235
    %v5239 = vand.u32 %v5210, 65535
    %v5240 = vshra.s32 %v5210, 16
    %v5241 = vcvt.s32.f32 %v5239
    %v5242 = vcvt.s32.f32 %v5240
    %5243 = vmin.xlane.f32.xlu0 %v5242
    %v5244 = vpop.xlane.xlu0 %5243
    %vm5245 = vcmp.eq.f32.partialorder %v5242, %v5244
    %v5246 = vsel %vm5245, %v5241, inf
    %5247 = vmin.xlane.f32.xlu0 %v5246
    %v5248 = vpop.xlane.xlu0 %5247
    %v5249 = vcvt.f32.s32 %v5248
    %v5250 = vcvt.f32.s32 %v5244
    %v5251 = vshll.u32 %v5250, 16
    %v5252 = vadd.s32 %v5251, %v5249
    %v5253 = vand.u32 %v5211, 65535
    %v5254 = vshra.s32 %v5211, 16
    %v5255 = vcvt.s32.f32 %v5253
    %v5256 = vcvt.s32.f32 %v5254
    %5257 = vmin.xlane.f32.xlu0 %v5256
    %v5258 = vpop.xlane.xlu0 %5257
    %vm5259 = vcmp.eq.f32.partialorder %v5256, %v5258
    %v5260 = vsel %vm5259, %v5255, inf
    %5261 = vmin.xlane.f32.xlu0 %v5260
    %v5262 = vpop.xlane.xlu0 %5261
    %v5263 = vcvt.f32.s32 %v5262
    %v5264 = vcvt.f32.s32 %v5258
    %v5265 = vshll.u32 %v5264, 16
    %v5266 = vadd.s32 %v5265, %v5263
    %v5267 = vand.u32 %v5212, 65535
    %v5268 = vshra.s32 %v5212, 16
    %v5269 = vcvt.s32.f32 %v5267
    %v5270 = vcvt.s32.f32 %v5268
    %5271 = vmin.xlane.f32.xlu0 %v5270
    %v5272 = vpop.xlane.xlu0 %5271
    %vm5273 = vcmp.eq.f32.partialorder %v5270, %v5272
    %v5274 = vsel %vm5273, %v5269, inf
    %5275 = vmin.xlane.f32.xlu0 %v5274
    %v5276 = vpop.xlane.xlu0 %5275
    %v5277 = vcvt.f32.s32 %v5276
    %v5278 = vcvt.f32.s32 %v5272
    %v5279 = vshll.u32 %v5278, 16
    %v5280 = vadd.s32 %v5279, %v5277
    %v5281 = vand.u32 %v5213, 65535
    %v5282 = vshra.s32 %v5213, 16
    %v5283 = vcvt.s32.f32 %v5281
    %v5284 = vcvt.s32.f32 %v5282
    %5285 = vmin.xlane.f32.xlu0 %v5284
    %v5286 = vpop.xlane.xlu0 %5285
    %vm5287 = vcmp.eq.f32.partialorder %v5284, %v5286
    %v5288 = vsel %vm5287, %v5283, inf
    %5289 = vmin.xlane.f32.xlu0 %v5288
    %v5290 = vpop.xlane.xlu0 %5289
    %v5291 = vcvt.f32.s32 %v5290
    %v5292 = vcvt.f32.s32 %v5286
    %v5293 = vshll.u32 %v5292, 16
    %v5294 = vadd.s32 %v5293, %v5291
    %v5295 = vand.u32 %v5214, 65535
    %v5296 = vshra.s32 %v5214, 16
    %v5297 = vcvt.s32.f32 %v5295
    %v5298 = vcvt.s32.f32 %v5296
    %5299 = vmin.xlane.f32.xlu0 %v5298
    %v5300 = vpop.xlane.xlu0 %5299
    %vm5301 = vcmp.eq.f32.partialorder %v5298, %v5300
    %v5302 = vsel %vm5301, %v5297, inf
    %5303 = vmin.xlane.f32.xlu0 %v5302
    %v5304 = vpop.xlane.xlu0 %5303
    %v5305 = vcvt.f32.s32 %v5304
    %v5306 = vcvt.f32.s32 %v5300
    %v5307 = vshll.u32 %v5306, 16
    %v5308 = vadd.s32 %v5307, %v5305
    %v5309 = vand.u32 %v5215, 65535
    %v5310 = vshra.s32 %v5215, 16
    %v5311 = vcvt.s32.f32 %v5309
    %v5312 = vcvt.s32.f32 %v5310
    %5313 = vmin.xlane.f32.xlu0 %v5312
    %v5314 = vpop.xlane.xlu0 %5313
    %vm5315 = vcmp.eq.f32.partialorder %v5312, %v5314
    %v5316 = vsel %vm5315, %v5311, inf
    %5317 = vmin.xlane.f32.xlu0 %v5316
    %v5318 = vpop.xlane.xlu0 %5317
    %v5319 = vcvt.f32.s32 %v5318
    %v5320 = vcvt.f32.s32 %v5314
    %v5321 = vshll.u32 %v5320, 16
    %v5322 = vadd.s32 %v5321, %v5319
    %v5323 = vand.u32 %v5216, 65535
    %v5324 = vshra.s32 %v5216, 16
    %v5325 = vcvt.s32.f32 %v5323
    %v5326 = vcvt.s32.f32 %v5324
    %5327 = vmin.xlane.f32.xlu0 %v5326
    %v5328 = vpop.xlane.xlu0 %5327
    %vm5329 = vcmp.eq.f32.partialorder %v5326, %v5328
    %v5330 = vsel %vm5329, %v5325, inf
    %5331 = vmin.xlane.f32.xlu0 %v5330
    %v5332 = vpop.xlane.xlu0 %5331
    %v5333 = vcvt.f32.s32 %v5332
    %v5334 = vcvt.f32.s32 %v5328
    %v5335 = vshll.u32 %v5334, 16
    %v5336 = vadd.s32 %v5335, %v5333
    %v5337 = vand.u32 %v5217, 65535
    %v5338 = vshra.s32 %v5217, 16
    %v5339 = vcvt.s32.f32 %v5337
    %v5340 = vcvt.s32.f32 %v5338
    %5341 = vmin.xlane.f32.xlu0 %v5340
    %v5342 = vpop.xlane.xlu0 %5341
    %vm5343 = vcmp.eq.f32.partialorder %v5340, %v5342
    %v5344 = vsel %vm5343, %v5339, inf
    %5345 = vmin.xlane.f32.xlu0 %v5344
    %v5346 = vpop.xlane.xlu0 %5345
    %v5347 = vcvt.f32.s32 %v5346
    %v5348 = vcvt.f32.s32 %v5342
    %v5349 = vshll.u32 %v5348, 16
    %v5350 = vadd.s32 %v5349, %v5347
    %v5351 = vand.u32 %v5218, 65535
    %v5352 = vshra.s32 %v5218, 16
    %v5353 = vcvt.s32.f32 %v5351
    %v5354 = vcvt.s32.f32 %v5352
    %5355 = vmin.xlane.f32.xlu0 %v5354
    %v5356 = vpop.xlane.xlu0 %5355
    %vm5357 = vcmp.eq.f32.partialorder %v5354, %v5356
    %v5358 = vsel %vm5357, %v5353, inf
    %5359 = vmin.xlane.f32.xlu0 %v5358
    %v5360 = vpop.xlane.xlu0 %5359
    %v5361 = vcvt.f32.s32 %v5360
    %v5362 = vcvt.f32.s32 %v5356
    %v5363 = vshll.u32 %v5362, 16
    %v5364 = vadd.s32 %v5363, %v5361
    %v5365 = vand.u32 %v5219, 65535
    %v5366 = vshra.s32 %v5219, 16
    %v5367 = vcvt.s32.f32 %v5365
    %v5368 = vcvt.s32.f32 %v5366
    %5369 = vmin.xlane.f32.xlu0 %v5368
    %v5370 = vpop.xlane.xlu0 %5369
    %vm5371 = vcmp.eq.f32.partialorder %v5368, %v5370
    %v5372 = vsel %vm5371, %v5367, inf
    %5373 = vmin.xlane.f32.xlu0 %v5372
    %v5374 = vpop.xlane.xlu0 %5373
    %v5375 = vcvt.f32.s32 %v5374
    %v5376 = vcvt.f32.s32 %v5370
    %v5377 = vshll.u32 %v5376, 16
    %v5378 = vadd.s32 %v5377, %v5375
    %v5379 = vand.u32 %v5220, 65535
    %v5380 = vshra.s32 %v5220, 16
    %v5381 = vcvt.s32.f32 %v5379
    %v5382 = vcvt.s32.f32 %v5380
    %5383 = vmin.xlane.f32.xlu0 %v5382
    %v5384 = vpop.xlane.xlu0 %5383
    %vm5385 = vcmp.eq.f32.partialorder %v5382, %v5384
    %v5386 = vsel %vm5385, %v5381, inf
    %5387 = vmin.xlane.f32.xlu0 %v5386
    %v5388 = vpop.xlane.xlu0 %5387
    %v5389 = vcvt.f32.s32 %v5388
    %v5390 = vcvt.f32.s32 %v5384
    %v5391 = vshll.u32 %v5390, 16
    %v5392 = vadd.s32 %v5391, %v5389
    %v5393 = vand.u32 %v5221, 65535
    %v5394 = vshra.s32 %v5221, 16
    %v5395 = vcvt.s32.f32 %v5393
    %v5396 = vcvt.s32.f32 %v5394
    %5397 = vmin.xlane.f32.xlu0 %v5396
    %v5398 = vpop.xlane.xlu0 %5397
    %vm5399 = vcmp.eq.f32.partialorder %v5396, %v5398
    %v5400 = vsel %vm5399, %v5395, inf
    %5401 = vmin.xlane.f32.xlu0 %v5400
    %v5402 = vpop.xlane.xlu0 %5401
    %v5403 = vcvt.f32.s32 %v5402
    %v5404 = vcvt.f32.s32 %v5398
    %v5405 = vshll.u32 %v5404, 16
    %v5406 = vadd.s32 %v5405, %v5403
    %v5407 = vand.u32 %v5222, 65535
    %v5408 = vshra.s32 %v5222, 16
    %v5409 = vcvt.s32.f32 %v5407
    %v5410 = vcvt.s32.f32 %v5408
    %5411 = vmin.xlane.f32.xlu0 %v5410
    %v5412 = vpop.xlane.xlu0 %5411
    %vm5413 = vcmp.eq.f32.partialorder %v5410, %v5412
    %v5414 = vsel %vm5413, %v5409, inf
    %5415 = vmin.xlane.f32.xlu0 %v5414
    %v5416 = vpop.xlane.xlu0 %5415
    %v5417 = vcvt.f32.s32 %v5416
    %v5418 = vcvt.f32.s32 %v5412
    %v5419 = vshll.u32 %v5418, 16
    %v5420 = vadd.s32 %v5419, %v5417
    %v5421 = vand.u32 %v5223, 65535
    %v5422 = vshra.s32 %v5223, 16
    %v5423 = vcvt.s32.f32 %v5421
    %v5424 = vcvt.s32.f32 %v5422
    %5425 = vmin.xlane.f32.xlu0 %v5424
    %v5426 = vpop.xlane.xlu0 %5425
    %vm5427 = vcmp.eq.f32.partialorder %v5424, %v5426
    %v5428 = vsel %vm5427, %v5423, inf
    %5429 = vmin.xlane.f32.xlu0 %v5428
    %v5430 = vpop.xlane.xlu0 %5429
    %v5431 = vcvt.f32.s32 %v5430
    %v5432 = vcvt.f32.s32 %v5426
    %v5433 = vshll.u32 %v5432, 16
    %v5434 = vadd.s32 %v5433, %v5431
    %v5435 = vand.u32 %v5224, 65535
    %v5436 = vshra.s32 %v5224, 16
    %v5437 = vcvt.s32.f32 %v5435
    %v5438 = vcvt.s32.f32 %v5436
    %5439 = vmin.xlane.f32.xlu0 %v5438
    %v5440 = vpop.xlane.xlu0 %5439
    %vm5441 = vcmp.eq.f32.partialorder %v5438, %v5440
    %v5442 = vsel %vm5441, %v5437, inf
    %5443 = vmin.xlane.f32.xlu0 %v5442
    %v5444 = vpop.xlane.xlu0 %5443
    %v5445 = vcvt.f32.s32 %v5444
    %v5446 = vcvt.f32.s32 %v5440
    %v5447 = vshll.u32 %v5446, 16
    %v5448 = vadd.s32 %v5447, %v5445
    %vm5449 = vcmp.eq.s32.totalorder %v351, 9
    %v5450 = vsel %vm5449, %v5238, %v4937
    %v5451 = vsel %vm5449, %v5252, %v4938
    %v5452 = vsel %vm5449, %v5266, %v4939
    %v5453 = vsel %vm5449, %v5280, %v4940
    %v5454 = vsel %vm5449, %v5294, %v4941
    %v5455 = vsel %vm5449, %v5308, %v4942
    %v5456 = vsel %vm5449, %v5322, %v4943
    %v5457 = vsel %vm5449, %v5336, %v4944
    %v5458 = vsel %vm5449, %v5350, %v4945
    %v5459 = vsel %vm5449, %v5364, %v4946
    %v5460 = vsel %vm5449, %v5378, %v4947
    %v5461 = vsel %vm5449, %v5392, %v4948
    %v5462 = vsel %vm5449, %v5406, %v4949
    %v5463 = vsel %vm5449, %v5420, %v4950
    %v5464 = vsel %vm5449, %v5434, %v4951
    %v5465 = vsel %vm5449, %v5448, %v4952
    %v5466 = vsel %vm5193, 2147483648, %v4953
    %v5467 = vsel %vm5194, 2147483648, %v4954
    %v5468 = vsel %vm5195, 2147483648, %v4955
    %v5469 = vsel %vm5196, 2147483648, %v4956
    %v5470 = vsel %vm5197, 2147483648, %v4957
    %v5471 = vsel %vm5198, 2147483648, %v4958
    %v5472 = vsel %vm5199, 2147483648, %v4959
    %v5473 = vsel %vm5200, 2147483648, %v4960
    %v5474 = vsel %vm5201, 2147483648, %v4961
    %v5475 = vsel %vm5202, 2147483648, %v4962
    %v5476 = vsel %vm5203, 2147483648, %v4963
    %v5477 = vsel %vm5204, 2147483648, %v4964
    %v5478 = vsel %vm5205, 2147483648, %v4965
    %v5479 = vsel %vm5206, 2147483648, %v4966
    %v5480 = vsel %vm5207, 2147483648, %v4967
    %v5481 = vsel %vm5208, 2147483648, %v4968
    %v5482 = vand.u32 %v5466, 65535
    %v5483 = vshra.s32 %v5466, 16
    %v5484 = vcvt.s32.f32 %v5482
    %v5485 = vcvt.s32.f32 %v5483
    %5486 = vmax.xlane.f32.xlu0 %v5485
    %v5487 = vpop.xlane.xlu0 %5486
    %vm5488 = vcmp.eq.f32.partialorder %v5485, %v5487
    %v5489 = vsel %vm5488, %v5484, -inf
    %5490 = vmax.xlane.f32.xlu0 %v5489
    %v5491 = vpop.xlane.xlu0 %5490
    %v5492 = vcvt.f32.s32 %v5491
    %v5493 = vcvt.f32.s32 %v5487
    %v5494 = vshll.u32 %v5493, 16
    %v5495 = vadd.s32 %v5494, %v5492
    %v5496 = vand.u32 %v5467, 65535
    %v5497 = vshra.s32 %v5467, 16
    %v5498 = vcvt.s32.f32 %v5496
    %v5499 = vcvt.s32.f32 %v5497
    %5500 = vmax.xlane.f32.xlu0 %v5499
    %v5501 = vpop.xlane.xlu0 %5500
    %vm5502 = vcmp.eq.f32.partialorder %v5499, %v5501
    %v5503 = vsel %vm5502, %v5498, -inf
    %5504 = vmax.xlane.f32.xlu0 %v5503
    %v5505 = vpop.xlane.xlu0 %5504
    %v5506 = vcvt.f32.s32 %v5505
    %v5507 = vcvt.f32.s32 %v5501
    %v5508 = vshll.u32 %v5507, 16
    %v5509 = vadd.s32 %v5508, %v5506
    %v5510 = vand.u32 %v5468, 65535
    %v5511 = vshra.s32 %v5468, 16
    %v5512 = vcvt.s32.f32 %v5510
    %v5513 = vcvt.s32.f32 %v5511
    %5514 = vmax.xlane.f32.xlu0 %v5513
    %v5515 = vpop.xlane.xlu0 %5514
    %vm5516 = vcmp.eq.f32.partialorder %v5513, %v5515
    %v5517 = vsel %vm5516, %v5512, -inf
    %5518 = vmax.xlane.f32.xlu0 %v5517
    %v5519 = vpop.xlane.xlu0 %5518
    %v5520 = vcvt.f32.s32 %v5519
    %v5521 = vcvt.f32.s32 %v5515
    %v5522 = vshll.u32 %v5521, 16
    %v5523 = vadd.s32 %v5522, %v5520
    %v5524 = vand.u32 %v5469, 65535
    %v5525 = vshra.s32 %v5469, 16
    %v5526 = vcvt.s32.f32 %v5524
    %v5527 = vcvt.s32.f32 %v5525
    %5528 = vmax.xlane.f32.xlu0 %v5527
    %v5529 = vpop.xlane.xlu0 %5528
    %vm5530 = vcmp.eq.f32.partialorder %v5527, %v5529
    %v5531 = vsel %vm5530, %v5526, -inf
    %5532 = vmax.xlane.f32.xlu0 %v5531
    %v5533 = vpop.xlane.xlu0 %5532
    %v5534 = vcvt.f32.s32 %v5533
    %v5535 = vcvt.f32.s32 %v5529
    %v5536 = vshll.u32 %v5535, 16
    %v5537 = vadd.s32 %v5536, %v5534
    %v5538 = vand.u32 %v5470, 65535
    %v5539 = vshra.s32 %v5470, 16
    %v5540 = vcvt.s32.f32 %v5538
    %v5541 = vcvt.s32.f32 %v5539
    %5542 = vmax.xlane.f32.xlu0 %v5541
    %v5543 = vpop.xlane.xlu0 %5542
    %vm5544 = vcmp.eq.f32.partialorder %v5541, %v5543
    %v5545 = vsel %vm5544, %v5540, -inf
    %5546 = vmax.xlane.f32.xlu0 %v5545
    %v5547 = vpop.xlane.xlu0 %5546
    %v5548 = vcvt.f32.s32 %v5547
    %v5549 = vcvt.f32.s32 %v5543
    %v5550 = vshll.u32 %v5549, 16
    %v5551 = vadd.s32 %v5550, %v5548
    %v5552 = vand.u32 %v5471, 65535
    %v5553 = vshra.s32 %v5471, 16
    %v5554 = vcvt.s32.f32 %v5552
    %v5555 = vcvt.s32.f32 %v5553
    %5556 = vmax.xlane.f32.xlu0 %v5555
    %v5557 = vpop.xlane.xlu0 %5556
    %vm5558 = vcmp.eq.f32.partialorder %v5555, %v5557
    %v5559 = vsel %vm5558, %v5554, -inf
    %5560 = vmax.xlane.f32.xlu0 %v5559
    %v5561 = vpop.xlane.xlu0 %5560
    %v5562 = vcvt.f32.s32 %v5561
    %v5563 = vcvt.f32.s32 %v5557
    %v5564 = vshll.u32 %v5563, 16
    %v5565 = vadd.s32 %v5564, %v5562
    %v5566 = vand.u32 %v5472, 65535
    %v5567 = vshra.s32 %v5472, 16
    %v5568 = vcvt.s32.f32 %v5566
    %v5569 = vcvt.s32.f32 %v5567
    %5570 = vmax.xlane.f32.xlu0 %v5569
    %v5571 = vpop.xlane.xlu0 %5570
    %vm5572 = vcmp.eq.f32.partialorder %v5569, %v5571
    %v5573 = vsel %vm5572, %v5568, -inf
    %5574 = vmax.xlane.f32.xlu0 %v5573
    %v5575 = vpop.xlane.xlu0 %5574
    %v5576 = vcvt.f32.s32 %v5575
    %v5577 = vcvt.f32.s32 %v5571
    %v5578 = vshll.u32 %v5577, 16
    %v5579 = vadd.s32 %v5578, %v5576
    %v5580 = vand.u32 %v5473, 65535
    %v5581 = vshra.s32 %v5473, 16
    %v5582 = vcvt.s32.f32 %v5580
    %v5583 = vcvt.s32.f32 %v5581
    %5584 = vmax.xlane.f32.xlu0 %v5583
    %v5585 = vpop.xlane.xlu0 %5584
    %vm5586 = vcmp.eq.f32.partialorder %v5583, %v5585
    %v5587 = vsel %vm5586, %v5582, -inf
    %5588 = vmax.xlane.f32.xlu0 %v5587
    %v5589 = vpop.xlane.xlu0 %5588
    %v5590 = vcvt.f32.s32 %v5589
    %v5591 = vcvt.f32.s32 %v5585
    %v5592 = vshll.u32 %v5591, 16
    %v5593 = vadd.s32 %v5592, %v5590
    %v5594 = vand.u32 %v5474, 65535
    %v5595 = vshra.s32 %v5474, 16
    %v5596 = vcvt.s32.f32 %v5594
    %v5597 = vcvt.s32.f32 %v5595
    %5598 = vmax.xlane.f32.xlu0 %v5597
    %v5599 = vpop.xlane.xlu0 %5598
    %vm5600 = vcmp.eq.f32.partialorder %v5597, %v5599
    %v5601 = vsel %vm5600, %v5596, -inf
    %5602 = vmax.xlane.f32.xlu0 %v5601
    %v5603 = vpop.xlane.xlu0 %5602
    %v5604 = vcvt.f32.s32 %v5603
    %v5605 = vcvt.f32.s32 %v5599
    %v5606 = vshll.u32 %v5605, 16
    %v5607 = vadd.s32 %v5606, %v5604
    %v5608 = vand.u32 %v5475, 65535
    %v5609 = vshra.s32 %v5475, 16
    %v5610 = vcvt.s32.f32 %v5608
    %v5611 = vcvt.s32.f32 %v5609
    %5612 = vmax.xlane.f32.xlu0 %v5611
    %v5613 = vpop.xlane.xlu0 %5612
    %vm5614 = vcmp.eq.f32.partialorder %v5611, %v5613
    %v5615 = vsel %vm5614, %v5610, -inf
    %5616 = vmax.xlane.f32.xlu0 %v5615
    %v5617 = vpop.xlane.xlu0 %5616
    %v5618 = vcvt.f32.s32 %v5617
    %v5619 = vcvt.f32.s32 %v5613
    %v5620 = vshll.u32 %v5619, 16
    %v5621 = vadd.s32 %v5620, %v5618
    %v5622 = vand.u32 %v5476, 65535
    %v5623 = vshra.s32 %v5476, 16
    %v5624 = vcvt.s32.f32 %v5622
    %v5625 = vcvt.s32.f32 %v5623
    %5626 = vmax.xlane.f32.xlu0 %v5625
    %v5627 = vpop.xlane.xlu0 %5626
    %vm5628 = vcmp.eq.f32.partialorder %v5625, %v5627
    %v5629 = vsel %vm5628, %v5624, -inf
    %5630 = vmax.xlane.f32.xlu0 %v5629
    %v5631 = vpop.xlane.xlu0 %5630
    %v5632 = vcvt.f32.s32 %v5631
    %v5633 = vcvt.f32.s32 %v5627
    %v5634 = vshll.u32 %v5633, 16
    %v5635 = vadd.s32 %v5634, %v5632
    %v5636 = vand.u32 %v5477, 65535
    %v5637 = vshra.s32 %v5477, 16
    %v5638 = vcvt.s32.f32 %v5636
    %v5639 = vcvt.s32.f32 %v5637
    %5640 = vmax.xlane.f32.xlu0 %v5639
    %v5641 = vpop.xlane.xlu0 %5640
    %vm5642 = vcmp.eq.f32.partialorder %v5639, %v5641
    %v5643 = vsel %vm5642, %v5638, -inf
    %5644 = vmax.xlane.f32.xlu0 %v5643
    %v5645 = vpop.xlane.xlu0 %5644
    %v5646 = vcvt.f32.s32 %v5645
    %v5647 = vcvt.f32.s32 %v5641
    %v5648 = vshll.u32 %v5647, 16
    %v5649 = vadd.s32 %v5648, %v5646
    %v5650 = vand.u32 %v5478, 65535
    %v5651 = vshra.s32 %v5478, 16
    %v5652 = vcvt.s32.f32 %v5650
    %v5653 = vcvt.s32.f32 %v5651
    %5654 = vmax.xlane.f32.xlu0 %v5653
    %v5655 = vpop.xlane.xlu0 %5654
    %vm5656 = vcmp.eq.f32.partialorder %v5653, %v5655
    %v5657 = vsel %vm5656, %v5652, -inf
    %5658 = vmax.xlane.f32.xlu0 %v5657
    %v5659 = vpop.xlane.xlu0 %5658
    %v5660 = vcvt.f32.s32 %v5659
    %v5661 = vcvt.f32.s32 %v5655
    %v5662 = vshll.u32 %v5661, 16
    %v5663 = vadd.s32 %v5662, %v5660
    %v5664 = vand.u32 %v5479, 65535
    %v5665 = vshra.s32 %v5479, 16
    %v5666 = vcvt.s32.f32 %v5664
    %v5667 = vcvt.s32.f32 %v5665
    %5668 = vmax.xlane.f32.xlu0 %v5667
    %v5669 = vpop.xlane.xlu0 %5668
    %vm5670 = vcmp.eq.f32.partialorder %v5667, %v5669
    %v5671 = vsel %vm5670, %v5666, -inf
    %5672 = vmax.xlane.f32.xlu0 %v5671
    %v5673 = vpop.xlane.xlu0 %5672
    %v5674 = vcvt.f32.s32 %v5673
    %v5675 = vcvt.f32.s32 %v5669
    %v5676 = vshll.u32 %v5675, 16
    %v5677 = vadd.s32 %v5676, %v5674
    %v5678 = vand.u32 %v5480, 65535
    %v5679 = vshra.s32 %v5480, 16
    %v5680 = vcvt.s32.f32 %v5678
    %v5681 = vcvt.s32.f32 %v5679
    %5682 = vmax.xlane.f32.xlu0 %v5681
    %v5683 = vpop.xlane.xlu0 %5682
    %vm5684 = vcmp.eq.f32.partialorder %v5681, %v5683
    %v5685 = vsel %vm5684, %v5680, -inf
    %5686 = vmax.xlane.f32.xlu0 %v5685
    %v5687 = vpop.xlane.xlu0 %5686
    %v5688 = vcvt.f32.s32 %v5687
    %v5689 = vcvt.f32.s32 %v5683
    %v5690 = vshll.u32 %v5689, 16
    %v5691 = vadd.s32 %v5690, %v5688
    %v5692 = vand.u32 %v5481, 65535
    %v5693 = vshra.s32 %v5481, 16
    %v5694 = vcvt.s32.f32 %v5692
    %v5695 = vcvt.s32.f32 %v5693
    %5696 = vmax.xlane.f32.xlu0 %v5695
    %v5697 = vpop.xlane.xlu0 %5696
    %vm5698 = vcmp.eq.f32.partialorder %v5695, %v5697
    %v5699 = vsel %vm5698, %v5694, -inf
    %5700 = vmax.xlane.f32.xlu0 %v5699
    %v5701 = vpop.xlane.xlu0 %5700
    %v5702 = vcvt.f32.s32 %v5701
    %v5703 = vcvt.f32.s32 %v5697
    %v5704 = vshll.u32 %v5703, 16
    %v5705 = vadd.s32 %v5704, %v5702
    %vm5706 = vcmp.eq.s32.totalorder %v5466, %v5495
    %vm5707 = vcmp.eq.s32.totalorder %v5467, %v5509
    %vm5708 = vcmp.eq.s32.totalorder %v5468, %v5523
    %vm5709 = vcmp.eq.s32.totalorder %v5469, %v5537
    %vm5710 = vcmp.eq.s32.totalorder %v5470, %v5551
    %vm5711 = vcmp.eq.s32.totalorder %v5471, %v5565
    %vm5712 = vcmp.eq.s32.totalorder %v5472, %v5579
    %vm5713 = vcmp.eq.s32.totalorder %v5473, %v5593
    %vm5714 = vcmp.eq.s32.totalorder %v5474, %v5607
    %vm5715 = vcmp.eq.s32.totalorder %v5475, %v5621
    %vm5716 = vcmp.eq.s32.totalorder %v5476, %v5635
    %vm5717 = vcmp.eq.s32.totalorder %v5477, %v5649
    %vm5718 = vcmp.eq.s32.totalorder %v5478, %v5663
    %vm5719 = vcmp.eq.s32.totalorder %v5479, %v5677
    %vm5720 = vcmp.eq.s32.totalorder %v5480, %v5691
    %vm5721 = vcmp.eq.s32.totalorder %v5481, %v5705
    %v5722 = vsel %vm5706, %v351, 128
    %v5723 = vsel %vm5707, %v351, 128
    %v5724 = vsel %vm5708, %v351, 128
    %v5725 = vsel %vm5709, %v351, 128
    %v5726 = vsel %vm5710, %v351, 128
    %v5727 = vsel %vm5711, %v351, 128
    %v5728 = vsel %vm5712, %v351, 128
    %v5729 = vsel %vm5713, %v351, 128
    %v5730 = vsel %vm5714, %v351, 128
    %v5731 = vsel %vm5715, %v351, 128
    %v5732 = vsel %vm5716, %v351, 128
    %v5733 = vsel %vm5717, %v351, 128
    %v5734 = vsel %vm5718, %v351, 128
    %v5735 = vsel %vm5719, %v351, 128
    %v5736 = vsel %vm5720, %v351, 128
    %v5737 = vsel %vm5721, %v351, 128
    %v5738 = vand.u32 %v5722, 65535
    %v5739 = vshra.s32 %v5722, 16
    %v5740 = vcvt.s32.f32 %v5738
    %v5741 = vcvt.s32.f32 %v5739
    %5742 = vmin.xlane.f32.xlu0 %v5741
    %v5743 = vpop.xlane.xlu0 %5742
    %vm5744 = vcmp.eq.f32.partialorder %v5741, %v5743
    %v5745 = vsel %vm5744, %v5740, inf
    %5746 = vmin.xlane.f32.xlu0 %v5745
    %v5747 = vpop.xlane.xlu0 %5746
    %v5748 = vcvt.f32.s32 %v5747
    %v5749 = vcvt.f32.s32 %v5743
    %v5750 = vshll.u32 %v5749, 16
    %v5751 = vadd.s32 %v5750, %v5748
    %v5752 = vand.u32 %v5723, 65535
    %v5753 = vshra.s32 %v5723, 16
    %v5754 = vcvt.s32.f32 %v5752
    %v5755 = vcvt.s32.f32 %v5753
    %5756 = vmin.xlane.f32.xlu0 %v5755
    %v5757 = vpop.xlane.xlu0 %5756
    %vm5758 = vcmp.eq.f32.partialorder %v5755, %v5757
    %v5759 = vsel %vm5758, %v5754, inf
    %5760 = vmin.xlane.f32.xlu0 %v5759
    %v5761 = vpop.xlane.xlu0 %5760
    %v5762 = vcvt.f32.s32 %v5761
    %v5763 = vcvt.f32.s32 %v5757
    %v5764 = vshll.u32 %v5763, 16
    %v5765 = vadd.s32 %v5764, %v5762
    %v5766 = vand.u32 %v5724, 65535
    %v5767 = vshra.s32 %v5724, 16
    %v5768 = vcvt.s32.f32 %v5766
    %v5769 = vcvt.s32.f32 %v5767
    %5770 = vmin.xlane.f32.xlu0 %v5769
    %v5771 = vpop.xlane.xlu0 %5770
    %vm5772 = vcmp.eq.f32.partialorder %v5769, %v5771
    %v5773 = vsel %vm5772, %v5768, inf
    %5774 = vmin.xlane.f32.xlu0 %v5773
    %v5775 = vpop.xlane.xlu0 %5774
    %v5776 = vcvt.f32.s32 %v5775
    %v5777 = vcvt.f32.s32 %v5771
    %v5778 = vshll.u32 %v5777, 16
    %v5779 = vadd.s32 %v5778, %v5776
    %v5780 = vand.u32 %v5725, 65535
    %v5781 = vshra.s32 %v5725, 16
    %v5782 = vcvt.s32.f32 %v5780
    %v5783 = vcvt.s32.f32 %v5781
    %5784 = vmin.xlane.f32.xlu0 %v5783
    %v5785 = vpop.xlane.xlu0 %5784
    %vm5786 = vcmp.eq.f32.partialorder %v5783, %v5785
    %v5787 = vsel %vm5786, %v5782, inf
    %5788 = vmin.xlane.f32.xlu0 %v5787
    %v5789 = vpop.xlane.xlu0 %5788
    %v5790 = vcvt.f32.s32 %v5789
    %v5791 = vcvt.f32.s32 %v5785
    %v5792 = vshll.u32 %v5791, 16
    %v5793 = vadd.s32 %v5792, %v5790
    %v5794 = vand.u32 %v5726, 65535
    %v5795 = vshra.s32 %v5726, 16
    %v5796 = vcvt.s32.f32 %v5794
    %v5797 = vcvt.s32.f32 %v5795
    %5798 = vmin.xlane.f32.xlu0 %v5797
    %v5799 = vpop.xlane.xlu0 %5798
    %vm5800 = vcmp.eq.f32.partialorder %v5797, %v5799
    %v5801 = vsel %vm5800, %v5796, inf
    %5802 = vmin.xlane.f32.xlu0 %v5801
    %v5803 = vpop.xlane.xlu0 %5802
    %v5804 = vcvt.f32.s32 %v5803
    %v5805 = vcvt.f32.s32 %v5799
    %v5806 = vshll.u32 %v5805, 16
    %v5807 = vadd.s32 %v5806, %v5804
    %v5808 = vand.u32 %v5727, 65535
    %v5809 = vshra.s32 %v5727, 16
    %v5810 = vcvt.s32.f32 %v5808
    %v5811 = vcvt.s32.f32 %v5809
    %5812 = vmin.xlane.f32.xlu0 %v5811
    %v5813 = vpop.xlane.xlu0 %5812
    %vm5814 = vcmp.eq.f32.partialorder %v5811, %v5813
    %v5815 = vsel %vm5814, %v5810, inf
    %5816 = vmin.xlane.f32.xlu0 %v5815
    %v5817 = vpop.xlane.xlu0 %5816
    %v5818 = vcvt.f32.s32 %v5817
    %v5819 = vcvt.f32.s32 %v5813
    %v5820 = vshll.u32 %v5819, 16
    %v5821 = vadd.s32 %v5820, %v5818
    %v5822 = vand.u32 %v5728, 65535
    %v5823 = vshra.s32 %v5728, 16
    %v5824 = vcvt.s32.f32 %v5822
    %v5825 = vcvt.s32.f32 %v5823
    %5826 = vmin.xlane.f32.xlu0 %v5825
    %v5827 = vpop.xlane.xlu0 %5826
    %vm5828 = vcmp.eq.f32.partialorder %v5825, %v5827
    %v5829 = vsel %vm5828, %v5824, inf
    %5830 = vmin.xlane.f32.xlu0 %v5829
    %v5831 = vpop.xlane.xlu0 %5830
    %v5832 = vcvt.f32.s32 %v5831
    %v5833 = vcvt.f32.s32 %v5827
    %v5834 = vshll.u32 %v5833, 16
    %v5835 = vadd.s32 %v5834, %v5832
    %v5836 = vand.u32 %v5729, 65535
    %v5837 = vshra.s32 %v5729, 16
    %v5838 = vcvt.s32.f32 %v5836
    %v5839 = vcvt.s32.f32 %v5837
    %5840 = vmin.xlane.f32.xlu0 %v5839
    %v5841 = vpop.xlane.xlu0 %5840
    %vm5842 = vcmp.eq.f32.partialorder %v5839, %v5841
    %v5843 = vsel %vm5842, %v5838, inf
    %5844 = vmin.xlane.f32.xlu0 %v5843
    %v5845 = vpop.xlane.xlu0 %5844
    %v5846 = vcvt.f32.s32 %v5845
    %v5847 = vcvt.f32.s32 %v5841
    %v5848 = vshll.u32 %v5847, 16
    %v5849 = vadd.s32 %v5848, %v5846
    %v5850 = vand.u32 %v5730, 65535
    %v5851 = vshra.s32 %v5730, 16
    %v5852 = vcvt.s32.f32 %v5850
    %v5853 = vcvt.s32.f32 %v5851
    %5854 = vmin.xlane.f32.xlu0 %v5853
    %v5855 = vpop.xlane.xlu0 %5854
    %vm5856 = vcmp.eq.f32.partialorder %v5853, %v5855
    %v5857 = vsel %vm5856, %v5852, inf
    %5858 = vmin.xlane.f32.xlu0 %v5857
    %v5859 = vpop.xlane.xlu0 %5858
    %v5860 = vcvt.f32.s32 %v5859
    %v5861 = vcvt.f32.s32 %v5855
    %v5862 = vshll.u32 %v5861, 16
    %v5863 = vadd.s32 %v5862, %v5860
    %v5864 = vand.u32 %v5731, 65535
    %v5865 = vshra.s32 %v5731, 16
    %v5866 = vcvt.s32.f32 %v5864
    %v5867 = vcvt.s32.f32 %v5865
    %5868 = vmin.xlane.f32.xlu0 %v5867
    %v5869 = vpop.xlane.xlu0 %5868
    %vm5870 = vcmp.eq.f32.partialorder %v5867, %v5869
    %v5871 = vsel %vm5870, %v5866, inf
    %5872 = vmin.xlane.f32.xlu0 %v5871
    %v5873 = vpop.xlane.xlu0 %5872
    %v5874 = vcvt.f32.s32 %v5873
    %v5875 = vcvt.f32.s32 %v5869
    %v5876 = vshll.u32 %v5875, 16
    %v5877 = vadd.s32 %v5876, %v5874
    %v5878 = vand.u32 %v5732, 65535
    %v5879 = vshra.s32 %v5732, 16
    %v5880 = vcvt.s32.f32 %v5878
    %v5881 = vcvt.s32.f32 %v5879
    %5882 = vmin.xlane.f32.xlu0 %v5881
    %v5883 = vpop.xlane.xlu0 %5882
    %vm5884 = vcmp.eq.f32.partialorder %v5881, %v5883
    %v5885 = vsel %vm5884, %v5880, inf
    %5886 = vmin.xlane.f32.xlu0 %v5885
    %v5887 = vpop.xlane.xlu0 %5886
    %v5888 = vcvt.f32.s32 %v5887
    %v5889 = vcvt.f32.s32 %v5883
    %v5890 = vshll.u32 %v5889, 16
    %v5891 = vadd.s32 %v5890, %v5888
    %v5892 = vand.u32 %v5733, 65535
    %v5893 = vshra.s32 %v5733, 16
    %v5894 = vcvt.s32.f32 %v5892
    %v5895 = vcvt.s32.f32 %v5893
    %5896 = vmin.xlane.f32.xlu0 %v5895
    %v5897 = vpop.xlane.xlu0 %5896
    %vm5898 = vcmp.eq.f32.partialorder %v5895, %v5897
    %v5899 = vsel %vm5898, %v5894, inf
    %5900 = vmin.xlane.f32.xlu0 %v5899
    %v5901 = vpop.xlane.xlu0 %5900
    %v5902 = vcvt.f32.s32 %v5901
    %v5903 = vcvt.f32.s32 %v5897
    %v5904 = vshll.u32 %v5903, 16
    %v5905 = vadd.s32 %v5904, %v5902
    %v5906 = vand.u32 %v5734, 65535
    %v5907 = vshra.s32 %v5734, 16
    %v5908 = vcvt.s32.f32 %v5906
    %v5909 = vcvt.s32.f32 %v5907
    %5910 = vmin.xlane.f32.xlu0 %v5909
    %v5911 = vpop.xlane.xlu0 %5910
    %vm5912 = vcmp.eq.f32.partialorder %v5909, %v5911
    %v5913 = vsel %vm5912, %v5908, inf
    %5914 = vmin.xlane.f32.xlu0 %v5913
    %v5915 = vpop.xlane.xlu0 %5914
    %v5916 = vcvt.f32.s32 %v5915
    %v5917 = vcvt.f32.s32 %v5911
    %v5918 = vshll.u32 %v5917, 16
    %v5919 = vadd.s32 %v5918, %v5916
    %v5920 = vand.u32 %v5735, 65535
    %v5921 = vshra.s32 %v5735, 16
    %v5922 = vcvt.s32.f32 %v5920
    %v5923 = vcvt.s32.f32 %v5921
    %5924 = vmin.xlane.f32.xlu0 %v5923
    %v5925 = vpop.xlane.xlu0 %5924
    %vm5926 = vcmp.eq.f32.partialorder %v5923, %v5925
    %v5927 = vsel %vm5926, %v5922, inf
    %5928 = vmin.xlane.f32.xlu0 %v5927
    %v5929 = vpop.xlane.xlu0 %5928
    %v5930 = vcvt.f32.s32 %v5929
    %v5931 = vcvt.f32.s32 %v5925
    %v5932 = vshll.u32 %v5931, 16
    %v5933 = vadd.s32 %v5932, %v5930
    %v5934 = vand.u32 %v5736, 65535
    %v5935 = vshra.s32 %v5736, 16
    %v5936 = vcvt.s32.f32 %v5934
    %v5937 = vcvt.s32.f32 %v5935
    %5938 = vmin.xlane.f32.xlu0 %v5937
    %v5939 = vpop.xlane.xlu0 %5938
    %vm5940 = vcmp.eq.f32.partialorder %v5937, %v5939
    %v5941 = vsel %vm5940, %v5936, inf
    %5942 = vmin.xlane.f32.xlu0 %v5941
    %v5943 = vpop.xlane.xlu0 %5942
    %v5944 = vcvt.f32.s32 %v5943
    %v5945 = vcvt.f32.s32 %v5939
    %v5946 = vshll.u32 %v5945, 16
    %v5947 = vadd.s32 %v5946, %v5944
    %v5948 = vand.u32 %v5737, 65535
    %v5949 = vshra.s32 %v5737, 16
    %v5950 = vcvt.s32.f32 %v5948
    %v5951 = vcvt.s32.f32 %v5949
    %5952 = vmin.xlane.f32.xlu0 %v5951
    %v5953 = vpop.xlane.xlu0 %5952
    %vm5954 = vcmp.eq.f32.partialorder %v5951, %v5953
    %v5955 = vsel %vm5954, %v5950, inf
    %5956 = vmin.xlane.f32.xlu0 %v5955
    %v5957 = vpop.xlane.xlu0 %5956
    %v5958 = vcvt.f32.s32 %v5957
    %v5959 = vcvt.f32.s32 %v5953
    %v5960 = vshll.u32 %v5959, 16
    %v5961 = vadd.s32 %v5960, %v5958
    %vm5962 = vcmp.eq.s32.totalorder %v351, 10
    %v5963 = vsel %vm5962, %v5751, %v5450
    %v5964 = vsel %vm5962, %v5765, %v5451
    %v5965 = vsel %vm5962, %v5779, %v5452
    %v5966 = vsel %vm5962, %v5793, %v5453
    %v5967 = vsel %vm5962, %v5807, %v5454
    %v5968 = vsel %vm5962, %v5821, %v5455
    %v5969 = vsel %vm5962, %v5835, %v5456
    %v5970 = vsel %vm5962, %v5849, %v5457
    %v5971 = vsel %vm5962, %v5863, %v5458
    %v5972 = vsel %vm5962, %v5877, %v5459
    %v5973 = vsel %vm5962, %v5891, %v5460
    %v5974 = vsel %vm5962, %v5905, %v5461
    %v5975 = vsel %vm5962, %v5919, %v5462
    %v5976 = vsel %vm5962, %v5933, %v5463
    %v5977 = vsel %vm5962, %v5947, %v5464
    %v5978 = vsel %vm5962, %v5961, %v5465
    %5979 = vst [vmem:[#allocation2] sm:$0xff] %v5963
    %5980 = vst [vmem:[#allocation2 + $0x8] sm:$0xff] %v5964
    %5981 = vst [vmem:[#allocation2 + $0x10] sm:$0xff] %v5965
    %5982 = vst [vmem:[#allocation2 + $0x18] sm:$0xff] %v5966
    %5983 = vst [vmem:[#allocation2 + $0x20] sm:$0xff] %v5967
    %5984 = vst [vmem:[#allocation2 + $0x28] sm:$0xff] %v5968
    %5985 = vst [vmem:[#allocation2 + $0x30] sm:$0xff] %v5969
    %5986 = vst [vmem:[#allocation2 + $0x38] sm:$0xff] %v5970
    %5987 = vst [vmem:[#allocation2 + $0x40] sm:$0xff] %v5971
    %5988 = vst [vmem:[#allocation2 + $0x48] sm:$0xff] %v5972
    %5989 = vst [vmem:[#allocation2 + $0x50] sm:$0xff] %v5973
    %5990 = vst [vmem:[#allocation2 + $0x58] sm:$0xff] %v5974
    %5991 = vst [vmem:[#allocation2 + $0x60] sm:$0xff] %v5975
    %5992 = vst [vmem:[#allocation2 + $0x68] sm:$0xff] %v5976
    %5993 = vst [vmem:[#allocation2 + $0x70] sm:$0xff] %v5977
    %5994 = vst [vmem:[#allocation2 + $0x78] sm:$0xff] %v5978
    // Predicated region
    $region10: #{tpu_custom_call.1} parent=1 // pred_check
      _
    $region11: #{tpu_custom_call.1} parent=1 // pred_check_branch
      %5996 = sbr.rel (0) target = $region13
    $region12: #{tpu_custom_call.1} parent=1 // pred_region
      %s5998 = ssub.s32 2048, 2048
      %5999 = vsyncadd [#allocation3], %s5998
      %s6000 = sshll.u32 [#allocation2], 4
      %s6001 = int_to_ptr.vmem [resolvable:$true] %s6000
      %6006 = dma.vmem_to_hbm [thread:$0]  %s6001, 2048, %s2, [#allocation3], 128, 128, 8
    $region13: #{tpu_custom_call.1} parent=1 // pred_fallthru
      _
    // Predicated region
    $region14: #{tpu_custom_call.1} parent=1 // pred_check
      _
    $region15: #{tpu_custom_call.1} parent=1 // pred_check_branch
      %6008 = sbr.rel (0) target = $region17
    $region16: #{tpu_custom_call.1} parent=1 // pred_region
      %6009 = dma.done [#allocation3], 2048
    $region17: #{tpu_custom_call.1} parent=1 // pred_fallthru
      _
    %6010 = vsyncpa [#allocation3], 1

</llo_original>
